<compile_context>
chip_gen: v5e
topology: v5e:2x2
jax: 0.10.0
libtpu: 0.0.40
codegen_flags: <defaults>
</compile_context>

<pallas_src>
import jax
import jax.numpy as jnp
from jax import lax
from jax.experimental import pallas as pl
from jax.experimental.pallas import tpu as pltpu

# ----------------------------- configuration -------------------------------
B, T = 2, 8                 # batch, num_frames
EMBED_DIM = 32              # embed_dim (small synthetic config)
CLUSTER = 8                 # nextvlad_cluster_size
GROUPS = 4                  # groups
EXPANSION = 2               # expansion
D = EMBED_DIM
ED = EXPANSION * EMBED_DIM          # 64
FS = ED // GROUPS                   # feature_size = 16
GC = GROUPS * CLUSTER               # 32
OUT_DIM = CLUSTER * FS              # 128   (final feature count, f*C + c)
BN_EPS = 1e-5
NORM_EPS = 1e-12

# Precision policy (see [R3]/[R8] above).
MM_PREC = lax.Precision.HIGHEST     # dots feeding BatchNorm1 (x@w1, h@wcat, stats)
AGG_PREC = lax.Precision.HIGHEST    # indicator / expansion / reduction dots
                                    # (flip to lax.Precision.DEFAULT on v5e if
                                    #  the MXU tail ever binds — review item R3)

# ---- packed "core" parameter buffer A: [A_ROWS, 128] f32, 8-aligned blocks ----
ROW_W1 = 0                          # rows   0: 32  w1            [D, ED]   lanes 0:64
ROW_WCAT = ROW_W1 + D               # rows  32: 96  [cw | w2]     [ED, GC+G] lanes 0:36
ROW_QT = ROW_WCAT + ED              # rows  96:224  Q^T           [128, C]  lanes 0:8
ROW_IND = ROW_QT + OUT_DIM          # rows 224:256  group ind     [GC, G]   lanes 0:4
ROW_Q = ROW_IND + GC                # rows 256:264  Q             [C, 128]
ROW_INDT = ROW_Q + CLUSTER          # rows 264:268  group ind^T   [G, GC]   lanes 0:32
ROW_S = ROW_INDT + 8                # rows 272:274  batch select  [B, B*T]  lanes 0:16
ROW_VECS = ROW_S + 8                # rows 280:288  per-row vectors (see pack_params)
A_ROWS = ROW_VECS + 8               # 288
A_LANES = 128

# ---- packed "expansion" buffer E: [E_ROWS, 512] f32 (the two 0/1 expanders) ----
E_LANES = GROUPS * OUT_DIM          # 512
ROW_EH = 0                          # rows   0: 64  EH [ED, 512]
ROW_EP = ED                         # rows  64: 96  EP [GC, 512]
E_ROWS = ED + GC                    # 96


# ------------------------------- the kernel --------------------------------
def nextvlad_kernel(x_ref, core_ref, exp_ref, out_ref):
    # ---- static views into the packed parameter buffers (3 input DMAs) ----
    w1 = core_ref[ROW_W1:ROW_W1 + D, 0:ED]                       # [D, ED]
    wcat = core_ref[ROW_WCAT:ROW_WCAT + ED, 0:GC + GROUPS]       # [ED, GC+G] = [cw | w2]
    qt = core_ref[ROW_QT:ROW_QT + OUT_DIM, 0:CLUSTER]            # [128, C]  Q^T
    ind = core_ref[ROW_IND:ROW_IND + GC, 0:GROUPS]               # [GC, G]
    q = core_ref[ROW_Q:ROW_Q + CLUSTER, 0:OUT_DIM]               # [C, 128]  Q
    ind_t = core_ref[ROW_INDT:ROW_INDT + GROUPS, 0:GC]           # [G, GC]
    ssel = core_ref[ROW_S:ROW_S + B, 0:B * T]                    # [B, B*T] batch selector
    vecs = core_ref[ROW_VECS:ROW_VECS + 8, :]                    # [8, 128] single-row params
    b1 = vecs[0:1, 0:ED]                                         # [1, ED]
    bcat = vecs[1:2, 0:GC + GROUPS]                              # [1, GC+G] = [0 | b2]
    g1 = vecs[2:3, 0:GC]                                         # [1, GC]
    be1 = vecs[3:4, 0:GC]                                        # [1, GC]
    c2wf = vecs[4:5, 0:OUT_DIM]                                  # [1, 128] cluster2_weights flat
    g2f = vecs[5:6, 0:OUT_DIM]                                   # [1, 128] BN2 gamma flat
    be2f = vecs[6:7, 0:OUT_DIM]                                  # [1, 128] BN2 beta flat
    eh = exp_ref[ROW_EH:ROW_EH + ED, :]                          # [ED, 512]
    ep = exp_ref[ROW_EP:ROW_EP + GC, :]                          # [GC, 512]

    x = x_ref[...]                                               # [B*T, D]
    # Frame mask on feature channel 0, exactly as in the torch module
    # ((input != 0)[:, :, 0]); brittle if a real frame has x[...,0]==0.
    mask = (x[:, 0:1] != 0.0).astype(jnp.float32)                # [B*T, 1]

    # ---- pass 1 (batch-fused): linear1, fused linear2|cluster_weights ----
    h = jnp.dot(x, w1, precision=MM_PREC,
                preferred_element_type=jnp.float32) + b1         # [B*T, ED]
    z = jnp.dot(h, wcat, precision=MM_PREC,
                preferred_element_type=jnp.float32) + bcat       # [B*T, GC+G]
    act = z[:, 0:GC]                                             # cluster activations
    att = jax.nn.sigmoid(z[:, GC:GC + GROUPS]) * mask            # [B*T, G]

    # ---- BatchNorm1 (training stats) with stats on the MXU [R2] ----
    acts = jnp.concatenate([act, act * act], axis=1)             # [B*T, 2*GC]
    stats_b = jnp.dot(ssel, acts, precision=MM_PREC,
                      preferred_element_type=jnp.float32)        # [B, 2*GC] per-batch sums
    tot = sum(stats_b[i:i + 1, :] for i in range(B))             # [1, 2*GC]
    inv_n = 1.0 / (B * T)
    mean1 = tot[:, 0:GC] * inv_n
    var1 = tot[:, GC:2 * GC] * inv_n - mean1 * mean1             # one-pass biased var
    act_n = (act - mean1) * (lax.rsqrt(var1 + BN_EPS) * g1) + be1  # [B*T, GC]

    # ---- group softmax + attention weighting (vectorized over batch & group) ----
    # Per-row max (instead of per-group) is mathematically identical for each
    # group's softmax and needs a single XLU lane-reduction.
    rowmax = jnp.max(act_n, axis=1, keepdims=True)               # [B*T, 1]
    ex = jnp.exp(act_n - rowmax)                                 # [B*T, GC]
    denom = jnp.dot(ex, ind, precision=AGG_PREC,
                    preferred_element_type=jnp.float32)          # [B*T, G]
    scale = att * pl.reciprocal(denom, approx=False)             # exact reciprocal [R8]
    pw = ex * jnp.dot(scale, ind_t, precision=AGG_PREC,
                      preferred_element_type=jnp.float32)        # [B*T, GC] softmax*att

    # ---- VLAD aggregation, produced directly in the lane-dense f*C+c layout ----
    # h2[t, g*128 + f*C + c] = h[t, g*FS + f];  p2[t, g*128 + f*C + c] = pw[t, g*C + c]
    h2 = jnp.dot(h, eh, precision=AGG_PREC,
                 preferred_element_type=jnp.float32)             # [B*T, 512]
    p2 = jnp.dot(pw, ep, precision=AGG_PREC,
                 preferred_element_type=jnp.float32)             # [B*T, 512]
    cat = jnp.concatenate([h2 * p2, p2], axis=1)                 # [B*T, 1024]
    red = jnp.dot(ssel, cat, precision=AGG_PREC,
                  preferred_element_type=jnp.float32)            # [B, 1024]
    # Sum the G group blocks (static 128-lane slices): gives the VLAD sums and
    # a_sum already broadcast over f in the same f*C+c layout.
    vsum = sum(red[:, g * OUT_DIM:(g + 1) * OUT_DIM] for g in range(GROUPS))
    asum = sum(red[:, (GROUPS + g) * OUT_DIM:(GROUPS + g + 1) * OUT_DIM]
               for g in range(GROUPS))
    vlad = vsum - asum * c2wf                                    # [B, 128]
    # TODO(synk): at production T the [B*T, 512] expansion should switch to a
    # [T*G, FS]/[T*G, C] relayout so the MXU does no redundant group work.

    # ---- per-cluster L2 normalize (F.normalize over the FS axis) ----
    sq = vlad * vlad
    ss = jnp.dot(sq, qt, precision=AGG_PREC,
                 preferred_element_type=jnp.float32)             # [B, C] sum over f
    inv = lax.rsqrt(jnp.maximum(ss, NORM_EPS * NORM_EPS))        # 1/max(||.||, eps)
    inv_b = jnp.dot(inv, q, precision=AGG_PREC,
                    preferred_element_type=jnp.float32)          # [B, 128] broadcast
    vlad_n = vlad * inv_b

    # ---- final BatchNorm1d over the 128 features (batch stats, B samples) ----
    rows = [vlad_n[i:i + 1, :] for i in range(B)]
    mean2 = sum(rows) * (1.0 / B)                                # [1, 128]
    cent = vlad_n - mean2                                        # [B, 128]
    crows = [cent[i:i + 1, :] for i in range(B)]
    var2 = sum(c * c for c in crows) * (1.0 / B)                 # [1, 128]
    out_ref[...] = cent * (lax.rsqrt(var2 + BN_EPS) * g2f) + be2f  # lane-dense [B,128]
    # TODO(synk): BatchNorm running-statistics updates (training-mode side
    # effect on module buffers) are not reproduced; they do not affect outputs.


# ---------------------------- parameter packing ------------------------------
def build_indicators():
    """All 0/1 selector / expansion matrices, built once on the host [R6/R7]."""
    j = jnp.arange(GROUPS * OUT_DIM)                             # expanded lane index
    r_eh = jnp.arange(ED)
    eh = ((j[None, :] // OUT_DIM == (r_eh // FS)[:, None]) &
          ((j[None, :] % OUT_DIM) // CLUSTER == (r_eh % FS)[:, None])
          ).astype(jnp.float32)                                  # [ED, 512]
    r_ep = jnp.arange(GC)
    ep = ((j[None, :] // OUT_DIM == (r_ep // CLUSTER)[:, None]) &
          ((j[None, :] % OUT_DIM) % CLUSTER == (r_ep % CLUSTER)[:, None])
          ).astype(jnp.float32)                                  # [GC, 512]
    jj = jnp.arange(OUT_DIM)
    qt = (jj[:, None] % CLUSTER == jnp.arange(CLUSTER)[None, :]).astype(jnp.float32)  # [128, C]
    q = qt.T                                                     # [C, 128]
    ind = (jnp.arange(GC)[:, None] // CLUSTER ==
           jnp.arange(GROUPS)[None, :]).astype(jnp.float32)      # [GC, G]
    ind_t = ind.T                                                # [G, GC]
    ssel = (jnp.arange(B * T)[None, :] // T ==
            jnp.arange(B)[:, None]).astype(jnp.float32)          # [B, B*T]
    return eh, ep, qt, q, ind, ind_t, ssel


def pack_params(w1, b1, w2, b2, cw, c2w, g1, be1, g2, be2):
    """One-time packing into two VMEM operands: core [288,128], expand [96,512]."""
    eh, ep, qt, q, ind, ind_t, ssel = build_indicators()
    A = jnp.zeros((A_ROWS, A_LANES), jnp.float32)
    A = A.at[ROW_W1:ROW_W1 + D, 0:ED].set(w1)
    A = A.at[ROW_WCAT:ROW_WCAT + ED, 0:GC].set(cw)
    A = A.at[ROW_WCAT:ROW_WCAT + ED, GC:GC + GROUPS].set(w2)
    A = A.at[ROW_QT:ROW_QT + OUT_DIM, 0:CLUSTER].set(qt)
    A = A.at[ROW_IND:ROW_IND + GC, 0:GROUPS].set(ind)
    A = A.at[ROW_Q:ROW_Q + CLUSTER, 0:OUT_DIM].set(q)
    A = A.at[ROW_INDT:ROW_INDT + GROUPS, 0:GC].set(ind_t)
    A = A.at[ROW_S:ROW_S + B, 0:B * T].set(ssel)
    A = A.at[ROW_VECS + 0, 0:ED].set(b1.reshape(ED))
    A = A.at[ROW_VECS + 1, GC:GC + GROUPS].set(b2.reshape(GROUPS))
    A = A.at[ROW_VECS + 2, 0:GC].set(g1.reshape(GC))
    A = A.at[ROW_VECS + 3, 0:GC].set(be1.reshape(GC))
    A = A.at[ROW_VECS + 4, 0:OUT_DIM].set(c2w.reshape(OUT_DIM))
    A = A.at[ROW_VECS + 5, 0:OUT_DIM].set(g2.reshape(OUT_DIM))
    A = A.at[ROW_VECS + 6, 0:OUT_DIM].set(be2.reshape(OUT_DIM))
    E = jnp.zeros((E_ROWS, E_LANES), jnp.float32)
    E = E.at[ROW_EH:ROW_EH + ED, :].set(eh)
    E = E.at[ROW_EP:ROW_EP + GC, :].set(ep)
    return A, E


# ------------------------------- wrapper ------------------------------------
@jax.jit
def nextvlad_pallas(x, params_core, params_expand):
    x2d = x.reshape(B * T, EMBED_DIM)          # free bitcast: batch-fused rows
    return pl.pallas_call(
        nextvlad_kernel,
        out_shape=jax.ShapeDtypeStruct((B, OUT_DIM), jnp.float32),  # lane-dense [R1]
        in_specs=[pl.BlockSpec(memory_space=pltpu.MemorySpace.VMEM)] * 3,
        out_specs=pl.BlockSpec(memory_space=pltpu.MemorySpace.VMEM),
    )(x2d, params_core, params_expand)


# ------------------------- pure-JAX reference -------------------------------
def nextvlad_ref(x, params):
    (w1, b1, w2, b2, cw, c2w, g1, be1, g2, be2) = params
    hp = lax.Precision.HIGHEST
    mask = (x != 0.0)[:, :, 0].astype(jnp.float32)                      # [B, T]
    h = jnp.einsum('btd,de->bte', x, w1, precision=hp) + b1             # [B, T, ED]
    att = jax.nn.sigmoid(jnp.einsum('bte,eg->btg', h, w2, precision=hp) + b2)
    att = att * mask[:, :, None]
    att = att.reshape(B, T * GROUPS, 1)
    act = jnp.dot(h.reshape(B * T, ED), cw, precision=hp)               # [B*T, GC]
    m1 = act.mean(axis=0)
    v1 = ((act - m1) ** 2).mean(axis=0)
    act = (act - m1) / jnp.sqrt(v1 + BN_EPS) * g1 + be1
    act = act.reshape(B, T * GROUPS, CLUSTER)
    act = jax.nn.softmax(act, axis=-1)
    act = act * att
    a_sum = act.sum(axis=-2, keepdims=True)                             # [B, 1, C]
    a = a_sum * c2w[None]                                               # [B, FS, C]
    ri = h.reshape(B, T * GROUPS, FS)
    vlad = jnp.einsum('bkc,bkf->bfc', act, ri, precision=hp)            # [B, FS, C]
    vlad = vlad - a
    norm = jnp.sqrt(jnp.sum(vlad ** 2, axis=1, keepdims=True))
    vlad = vlad / jnp.maximum(norm, NORM_EPS)
    vlad = vlad.reshape(B, FS * CLUSTER)
    m2 = vlad.mean(axis=0)
    v2 = ((vlad - m2) ** 2).mean(axis=0)
    return (vlad - m2) / jnp.sqrt(v2 + BN_EPS) * g2.reshape(-1) + be2.reshape(-1)


# --------------------------------- main --------------------------------------
if __name__ == "__main__":
    key = jax.random.PRNGKey(0)
    ks = jax.random.split(key, 7)

    # deterministic parameter init (shapes follow NextVLAD.__init__)
    lim1 = 1.0 / (EMBED_DIM ** 0.5)
    w1 = jax.random.uniform(ks[0], (EMBED_DIM, ED), jnp.float32, -lim1, lim1)
    b1 = jax.random.uniform(ks[1], (1, ED), jnp.float32, -lim1, lim1)
    lim2 = 1.0 / (ED ** 0.5)
    w2 = jax.random.uniform(ks[2], (ED, GROUPS), jnp.float32, -lim2, lim2)
    b2 = jax.random.uniform(ks[3], (1, GROUPS), jnp.float32, -lim2, lim2)
    # kaiming_normal: std = sqrt(2 / fan_in)
    cw = jax.random.normal(ks[4], (ED, GC), jnp.float32) * (2.0 / GC) ** 0.5
    c2w = jax.random.normal(ks[5], (FS, CLUSTER), jnp.float32) * (2.0 / (FS * CLUSTER)) ** 0.5
    g1 = jnp.ones((1, GC), jnp.float32)
    be1 = jnp.zeros((1, GC), jnp.float32)
    g2 = jnp.ones((FS, CLUSTER), jnp.float32)
    be2 = jnp.zeros((FS, CLUSTER), jnp.float32)
    params = (w1, b1, w2, b2, cw, c2w, g1, be1, g2, be2)
    core, expand = pack_params(*params)      # one-time packing, outside the forward

    # input [B, T, D]; zero out a few frames so the (input != 0) mask matters
    x = jax.random.normal(ks[6], (B, T, EMBED_DIM), jnp.float32)
    x = x.at[0, T - 3:].set(0.0)
    x = x.at[1, T - 1:].set(0.0)

    out = nextvlad_pallas(x, core, expand)
    out = jax.block_until_ready(out)
    assert out.shape == (B, OUT_DIM), out.shape

    ref = nextvlad_ref(x, params)
    assert jnp.all(jnp.isfinite(out))
    assert jnp.allclose(out, ref, atol=5e-3, rtol=5e-3), \
        float(jnp.max(jnp.abs(out - ref)))

    print("KERNEL_OK")
</pallas_src>

<mosaic_0001>
module attributes {stable_mosaic.version = 11 : i64} {
  func.func @nextvlad_kernel(%arg0: memref<16x32xf32, #tpu.memory_space<vmem>>, %arg1: memref<288x128xf32, #tpu.memory_space<vmem>>, %arg2: memref<96x512xf32, #tpu.memory_space<vmem>>, %arg3: memref<2x128xf32, #tpu.memory_space<vmem>>) attributes {dimension_semantics = [], scalar_prefetch = 0 : i64, scratch_operands = 0 : i64, tpu.core_type = #tpu.core_type<tc>} {
    %c0 = arith.constant 0 : index
    %c0_0 = arith.constant 0 : index
    %0 = vector.load %arg1[%c0, %c0_0] : memref<288x128xf32, #tpu.memory_space<vmem>>, vector<32x64xf32>
    %c32 = arith.constant 32 : index
    %c0_1 = arith.constant 0 : index
    %1 = vector.load %arg1[%c32, %c0_1] : memref<288x128xf32, #tpu.memory_space<vmem>>, vector<64x36xf32>
    %c96 = arith.constant 96 : index
    %c0_2 = arith.constant 0 : index
    %2 = vector.load %arg1[%c96, %c0_2] : memref<288x128xf32, #tpu.memory_space<vmem>>, vector<128x8xf32>
    %c224 = arith.constant 224 : index
    %c0_3 = arith.constant 0 : index
    %3 = vector.load %arg1[%c224, %c0_3] : memref<288x128xf32, #tpu.memory_space<vmem>>, vector<32x4xf32>
    %c256 = arith.constant 256 : index
    %c0_4 = arith.constant 0 : index
    %4 = vector.load %arg1[%c256, %c0_4] : memref<288x128xf32, #tpu.memory_space<vmem>>, vector<8x128xf32>
    %c264 = arith.constant 264 : index
    %c0_5 = arith.constant 0 : index
    %5 = vector.load %arg1[%c264, %c0_5] : memref<288x128xf32, #tpu.memory_space<vmem>>, vector<4x32xf32>
    %c272 = arith.constant 272 : index
    %c0_6 = arith.constant 0 : index
    %6 = vector.load %arg1[%c272, %c0_6] : memref<288x128xf32, #tpu.memory_space<vmem>>, vector<2x16xf32>
    %c280 = arith.constant 280 : index
    %c0_7 = arith.constant 0 : index
    %7 = vector.load %arg1[%c280, %c0_7] : memref<288x128xf32, #tpu.memory_space<vmem>>, vector<8x128xf32>
    %8 = vector.extract_strided_slice %7 {offsets = [0, 0], sizes = [1, 64], strides = [1, 1]} : vector<8x128xf32> to vector<1x64xf32>
    %9 = vector.extract_strided_slice %7 {offsets = [1, 0], sizes = [1, 36], strides = [1, 1]} : vector<8x128xf32> to vector<1x36xf32>
    %10 = vector.extract_strided_slice %7 {offsets = [2, 0], sizes = [1, 32], strides = [1, 1]} : vector<8x128xf32> to vector<1x32xf32>
    %11 = vector.extract_strided_slice %7 {offsets = [3, 0], sizes = [1, 32], strides = [1, 1]} : vector<8x128xf32> to vector<1x32xf32>
    %12 = vector.extract_strided_slice %7 {offsets = [4, 0], sizes = [1, 128], strides = [1, 1]} : vector<8x128xf32> to vector<1x128xf32>
    %13 = vector.extract_strided_slice %7 {offsets = [5, 0], sizes = [1, 128], strides = [1, 1]} : vector<8x128xf32> to vector<1x128xf32>
    %14 = vector.extract_strided_slice %7 {offsets = [6, 0], sizes = [1, 128], strides = [1, 1]} : vector<8x128xf32> to vector<1x128xf32>
    %c0_8 = arith.constant 0 : index
    %c0_9 = arith.constant 0 : index
    %15 = vector.load %arg2[%c0_8, %c0_9] : memref<96x512xf32, #tpu.memory_space<vmem>>, vector<64x512xf32>
    %c64 = arith.constant 64 : index
    %c0_10 = arith.constant 0 : index
    %16 = vector.load %arg2[%c64, %c0_10] : memref<96x512xf32, #tpu.memory_space<vmem>>, vector<32x512xf32>
    %c0_11 = arith.constant 0 : index
    %c0_12 = arith.constant 0 : index
    %17 = vector.load %arg0[%c0_11, %c0_12] : memref<16x32xf32, #tpu.memory_space<vmem>>, vector<16x32xf32>
    %18 = vector.extract_strided_slice %17 {offsets = [0, 0], sizes = [16, 1], strides = [1, 1]} : vector<16x32xf32> to vector<16x1xf32>
    %cst = arith.constant 0.000000e+00 : f32
    %19 = vector.broadcast %cst : f32 to vector<16x1xf32>
    %20 = arith.cmpf one, %18, %19 : vector<16x1xf32>
    %21 = arith.extui %20 : vector<16x1xi1> to vector<16x1xi32>
    %22 = arith.sitofp %21 : vector<16x1xi32> to vector<16x1xf32>
    %cst_13 = arith.constant dense<0.000000e+00> : vector<16x64xf32>
    %23 = tpu.matmul %17, %0, %cst_13 {dimension_numbers = #tpu.dot_dimension_numbers<[1], [0], [0], [1], [0, 0, 1, 1], [], []>, precision = #tpu.contract_precision<fp32>} : vector<16x32xf32>, vector<32x64xf32>, vector<16x64xf32> -> vector<16x64xf32>
    %24 = vector.broadcast %8 : vector<1x64xf32> to vector<16x64xf32>
    %25 = arith.addf %23, %24 : vector<16x64xf32>
    %cst_14 = arith.constant dense<0.000000e+00> : vector<16x36xf32>
    %26 = tpu.matmul %25, %1, %cst_14 {dimension_numbers = #tpu.dot_dimension_numbers<[1], [0], [0], [1], [0, 0, 1, 1], [], []>, precision = #tpu.contract_precision<fp32>} : vector<16x64xf32>, vector<64x36xf32>, vector<16x36xf32> -> vector<16x36xf32>
    %27 = vector.broadcast %9 : vector<1x36xf32> to vector<16x36xf32>
    %28 = arith.addf %26, %27 : vector<16x36xf32>
    %29 = vector.extract_strided_slice %28 {offsets = [0, 0], sizes = [16, 32], strides = [1, 1]} : vector<16x36xf32> to vector<16x32xf32>
    %30 = vector.extract_strided_slice %28 {offsets = [0, 32], sizes = [16, 4], strides = [1, 1]} : vector<16x36xf32> to vector<16x4xf32>
    %31 = arith.negf %30 : vector<16x4xf32>
    %32 = math.exp %31 : vector<16x4xf32>
    %cst_15 = arith.constant 1.000000e+00 : f32
    %33 = vector.broadcast %cst_15 : f32 to vector<16x4xf32>
    %34 = arith.addf %33, %32 : vector<16x4xf32>
    %35 = arith.divf %33, %34 : vector<16x4xf32>
    %36 = vector.broadcast %22 : vector<16x1xf32> to vector<16x4xf32>
    %37 = arith.mulf %35, %36 : vector<16x4xf32>
    %38 = arith.mulf %29, %29 : vector<16x32xf32>
    %39 = tpu.concatenate %29, %38 in 1 : vector<16x32xf32>, vector<16x32xf32> -> vector<16x64xf32>
    %cst_16 = arith.constant dense<0.000000e+00> : vector<2x64xf32>
    %40 = tpu.matmul %6, %39, %cst_16 {dimension_numbers = #tpu.dot_dimension_numbers<[1], [0], [0], [1], [0, 0, 1, 1], [], []>, precision = #tpu.contract_precision<fp32>} : vector<2x16xf32>, vector<16x64xf32>, vector<2x64xf32> -> vector<2x64xf32>
    %41 = vector.extract_strided_slice %40 {offsets = [0, 0], sizes = [1, 64], strides = [1, 1]} : vector<2x64xf32> to vector<1x64xf32>
    %cst_17 = arith.constant 0.000000e+00 : f32
    %42 = vector.broadcast %cst_17 : f32 to vector<1x64xf32>
    %43 = arith.addf %42, %41 : vector<1x64xf32>
    %44 = vector.extract_strided_slice %40 {offsets = [1, 0], sizes = [1, 64], strides = [1, 1]} : vector<2x64xf32> to vector<1x64xf32>
    %45 = arith.addf %43, %44 : vector<1x64xf32>
    %46 = vector.extract_strided_slice %45 {offsets = [0, 0], sizes = [1, 32], strides = [1, 1]} : vector<1x64xf32> to vector<1x32xf32>
    %cst_18 = arith.constant 6.250000e-02 : f32
    %47 = vector.broadcast %cst_18 : f32 to vector<1x32xf32>
    %48 = arith.mulf %46, %47 : vector<1x32xf32>
    %49 = vector.extract_strided_slice %45 {offsets = [0, 32], sizes = [1, 32], strides = [1, 1]} : vector<1x64xf32> to vector<1x32xf32>
    %cst_19 = arith.constant 6.250000e-02 : f32
    %50 = vector.broadcast %cst_19 : f32 to vector<1x32xf32>
    %51 = arith.mulf %49, %50 : vector<1x32xf32>
    %52 = arith.mulf %48, %48 : vector<1x32xf32>
    %53 = arith.subf %51, %52 : vector<1x32xf32>
    %54 = vector.broadcast %48 : vector<1x32xf32> to vector<16x32xf32>
    %55 = arith.subf %29, %54 : vector<16x32xf32>
    %cst_20 = arith.constant 9.99999974E-6 : f32
    %56 = vector.broadcast %cst_20 : f32 to vector<1x32xf32>
    %57 = arith.addf %53, %56 : vector<1x32xf32>
    %58 = math.rsqrt %57 : vector<1x32xf32>
    %59 = arith.mulf %58, %10 : vector<1x32xf32>
    %60 = vector.broadcast %59 : vector<1x32xf32> to vector<16x32xf32>
    %61 = arith.mulf %55, %60 : vector<16x32xf32>
    %62 = vector.broadcast %11 : vector<1x32xf32> to vector<16x32xf32>
    %63 = arith.addf %61, %62 : vector<16x32xf32>
    %cst_21 = arith.constant dense<0xFF800000> : vector<16xf32>
    %64 = vector.multi_reduction <maximumf>, %63, %cst_21 [1] : vector<16x32xf32> to vector<16xf32>
    %65 = vector.shape_cast %64 : vector<16xf32> to vector<16x1xf32>
    %66 = vector.broadcast %65 : vector<16x1xf32> to vector<16x32xf32>
    %67 = arith.subf %63, %66 : vector<16x32xf32>
    %68 = math.exp %67 : vector<16x32xf32>
    %cst_22 = arith.constant dense<0.000000e+00> : vector<16x4xf32>
    %69 = tpu.matmul %68, %3, %cst_22 {dimension_numbers = #tpu.dot_dimension_numbers<[1], [0], [0], [1], [0, 0, 1, 1], [], []>, precision = #tpu.contract_precision<fp32>} : vector<16x32xf32>, vector<32x4xf32>, vector<16x4xf32> -> vector<16x4xf32>
    %70 = tpu.reciprocal %69 : vector<16x4xf32> -> vector<16x4xf32>
    %71 = arith.mulf %37, %70 : vector<16x4xf32>
    %cst_23 = arith.constant dense<0.000000e+00> : vector<16x32xf32>
    %72 = tpu.matmul %71, %5, %cst_23 {dimension_numbers = #tpu.dot_dimension_numbers<[1], [0], [0], [1], [0, 0, 1, 1], [], []>, precision = #tpu.contract_precision<fp32>} : vector<16x4xf32>, vector<4x32xf32>, vector<16x32xf32> -> vector<16x32xf32>
    %73 = arith.mulf %68, %72 : vector<16x32xf32>
    %cst_24 = arith.constant dense<0.000000e+00> : vector<16x512xf32>
    %74 = tpu.matmul %25, %15, %cst_24 {dimension_numbers = #tpu.dot_dimension_numbers<[1], [0], [0], [1], [0, 0, 1, 1], [], []>, precision = #tpu.contract_precision<fp32>} : vector<16x64xf32>, vector<64x512xf32>, vector<16x512xf32> -> vector<16x512xf32>
    %cst_25 = arith.constant dense<0.000000e+00> : vector<16x512xf32>
    %75 = tpu.matmul %73, %16, %cst_25 {dimension_numbers = #tpu.dot_dimension_numbers<[1], [0], [0], [1], [0, 0, 1, 1], [], []>, precision = #tpu.contract_precision<fp32>} : vector<16x32xf32>, vector<32x512xf32>, vector<16x512xf32> -> vector<16x512xf32>
    %76 = arith.mulf %74, %75 : vector<16x512xf32>
    %77 = tpu.concatenate %76, %75 in 1 : vector<16x512xf32>, vector<16x512xf32> -> vector<16x1024xf32>
    %cst_26 = arith.constant dense<0.000000e+00> : vector<2x1024xf32>
    %78 = tpu.matmul %6, %77, %cst_26 {dimension_numbers = #tpu.dot_dimension_numbers<[1], [0], [0], [1], [0, 0, 1, 1], [], []>, precision = #tpu.contract_precision<fp32>} : vector<2x16xf32>, vector<16x1024xf32>, vector<2x1024xf32> -> vector<2x1024xf32>
    %79 = vector.extract_strided_slice %78 {offsets = [0, 0], sizes = [2, 128], strides = [1, 1]} : vector<2x1024xf32> to vector<2x128xf32>
    %cst_27 = arith.constant 0.000000e+00 : f32
    %80 = vector.broadcast %cst_27 : f32 to vector<2x128xf32>
    %81 = arith.addf %80, %79 : vector<2x128xf32>
    %82 = vector.extract_strided_slice %78 {offsets = [0, 128], sizes = [2, 128], strides = [1, 1]} : vector<2x1024xf32> to vector<2x128xf32>
    %83 = arith.addf %81, %82 : vector<2x128xf32>
    %84 = vector.extract_strided_slice %78 {offsets = [0, 256], sizes = [2, 128], strides = [1, 1]} : vector<2x1024xf32> to vector<2x128xf32>
    %85 = arith.addf %83, %84 : vector<2x128xf32>
    %86 = vector.extract_strided_slice %78 {offsets = [0, 384], sizes = [2, 128], strides = [1, 1]} : vector<2x1024xf32> to vector<2x128xf32>
    %87 = arith.addf %85, %86 : vector<2x128xf32>
    %88 = vector.extract_strided_slice %78 {offsets = [0, 512], sizes = [2, 128], strides = [1, 1]} : vector<2x1024xf32> to vector<2x128xf32>
    %cst_28 = arith.constant 0.000000e+00 : f32
    %89 = vector.broadcast %cst_28 : f32 to vector<2x128xf32>
    %90 = arith.addf %89, %88 : vector<2x128xf32>
    %91 = vector.extract_strided_slice %78 {offsets = [0, 640], sizes = [2, 128], strides = [1, 1]} : vector<2x1024xf32> to vector<2x128xf32>
    %92 = arith.addf %90, %91 : vector<2x128xf32>
    %93 = vector.extract_strided_slice %78 {offsets = [0, 768], sizes = [2, 128], strides = [1, 1]} : vector<2x1024xf32> to vector<2x128xf32>
    %94 = arith.addf %92, %93 : vector<2x128xf32>
    %95 = vector.extract_strided_slice %78 {offsets = [0, 896], sizes = [2, 128], strides = [1, 1]} : vector<2x1024xf32> to vector<2x128xf32>
    %96 = arith.addf %94, %95 : vector<2x128xf32>
    %97 = vector.broadcast %12 : vector<1x128xf32> to vector<2x128xf32>
    %98 = arith.mulf %96, %97 : vector<2x128xf32>
    %99 = arith.subf %87, %98 : vector<2x128xf32>
    %100 = arith.mulf %99, %99 : vector<2x128xf32>
    %cst_29 = arith.constant dense<0.000000e+00> : vector<2x8xf32>
    %101 = tpu.matmul %100, %2, %cst_29 {dimension_numbers = #tpu.dot_dimension_numbers<[1], [0], [0], [1], [0, 0, 1, 1], [], []>, precision = #tpu.contract_precision<fp32>} : vector<2x128xf32>, vector<128x8xf32>, vector<2x8xf32> -> vector<2x8xf32>
    %cst_30 = arith.constant 1.000000e-24 : f32
    %102 = vector.broadcast %cst_30 : f32 to vector<2x8xf32>
    %103 = arith.maximumf %101, %102 : vector<2x8xf32>
    %104 = math.rsqrt %103 : vector<2x8xf32>
    %cst_31 = arith.constant dense<0.000000e+00> : vector<2x128xf32>
    %105 = tpu.matmul %104, %4, %cst_31 {dimension_numbers = #tpu.dot_dimension_numbers<[1], [0], [0], [1], [0, 0, 1, 1], [], []>, precision = #tpu.contract_precision<fp32>} : vector<2x8xf32>, vector<8x128xf32>, vector<2x128xf32> -> vector<2x128xf32>
    %106 = arith.mulf %99, %105 : vector<2x128xf32>
    %107 = vector.extract_strided_slice %106 {offsets = [0, 0], sizes = [1, 128], strides = [1, 1]} : vector<2x128xf32> to vector<1x128xf32>
    %108 = vector.extract_strided_slice %106 {offsets = [1, 0], sizes = [1, 128], strides = [1, 1]} : vector<2x128xf32> to vector<1x128xf32>
    %cst_32 = arith.constant 0.000000e+00 : f32
    %109 = vector.broadcast %cst_32 : f32 to vector<1x128xf32>
    %110 = arith.addf %109, %107 : vector<1x128xf32>
    %111 = arith.addf %110, %108 : vector<1x128xf32>
    %cst_33 = arith.constant 5.000000e-01 : f32
    %112 = vector.broadcast %cst_33 : f32 to vector<1x128xf32>
    %113 = arith.mulf %111, %112 : vector<1x128xf32>
    %114 = vector.broadcast %113 : vector<1x128xf32> to vector<2x128xf32>
    %115 = arith.subf %106, %114 : vector<2x128xf32>
    %116 = vector.extract_strided_slice %115 {offsets = [0, 0], sizes = [1, 128], strides = [1, 1]} : vector<2x128xf32> to vector<1x128xf32>
    %117 = vector.extract_strided_slice %115 {offsets = [1, 0], sizes = [1, 128], strides = [1, 1]} : vector<2x128xf32> to vector<1x128xf32>
    %118 = arith.mulf %116, %116 : vector<1x128xf32>
    %cst_34 = arith.constant 0.000000e+00 : f32
    %119 = vector.broadcast %cst_34 : f32 to vector<1x128xf32>
    %120 = arith.addf %119, %118 : vector<1x128xf32>
    %121 = arith.mulf %117, %117 : vector<1x128xf32>
    %122 = arith.addf %120, %121 : vector<1x128xf32>
    %cst_35 = arith.constant 5.000000e-01 : f32
    %123 = vector.broadcast %cst_35 : f32 to vector<1x128xf32>
    %124 = arith.mulf %122, %123 : vector<1x128xf32>
    %cst_36 = arith.constant 9.99999974E-6 : f32
    %125 = vector.broadcast %cst_36 : f32 to vector<1x128xf32>
    %126 = arith.addf %124, %125 : vector<1x128xf32>
    %127 = math.rsqrt %126 : vector<1x128xf32>
    %128 = arith.mulf %127, %13 : vector<1x128xf32>
    %129 = vector.broadcast %128 : vector<1x128xf32> to vector<2x128xf32>
    %130 = arith.mulf %115, %129 : vector<2x128xf32>
    %131 = vector.broadcast %14 : vector<1x128xf32> to vector<2x128xf32>
    %132 = arith.addf %130, %131 : vector<2x128xf32>
    %c0_37 = arith.constant 0 : index
    %c0_38 = arith.constant 0 : index
    %133 = vector.load %arg3[%c0_37, %c0_38] : memref<2x128xf32, #tpu.memory_space<vmem>>, vector<2x128xf32>
    tpu.vector_store %arg3[%c0_37, %c0_38], %132 {strides = array<i32>} : memref<2x128xf32, #tpu.memory_space<vmem>>, vector<2x128xf32>,
    return
  }
}

</mosaic_0001>

<llo_original>
// kernel: nextvlad_pallas.1
$region0: #{nextvlad_pallas.1}
  #allocation0 [shape = 'u32[]', space=smem, size = 0x4, offset = 0x4, fixed_abs, tag = 'smem constant byte address 0x4 - core index']
  #allocation1 [shape = 'u32[72,128]{1,0:T(1,128)}', space=vmem, size = 0x9000, scoped, tag = 'internal scratch']
  %s0 = inlined_call_operand.hbm [shape: f32[16,32], index: 0, kind: input, shape index: {}]
  %s1 = inlined_call_operand.hbm [shape: f32[288,128], index: 1, kind: input, shape index: {}]
  %s2 = inlined_call_operand.hbm [shape: f32[96,512], index: 2, kind: input, shape index: {}]
  %s3 = inlined_call_operand.hbm [shape: f32[2,128], index: 3, kind: output, shape index: {}]
  %s4 = sld [smem:[#allocation0]]
  $region34: #{nextvlad_pallas.1} parent=0
    _
  %s6 = ssub.s32 1, %s4
  %s7 = scalar_select 0, %s6, %s4
  $region1: #{nextvlad_pallas.1} parent=0
    #allocation2 [shape = 'u8[8192]{0}', space=vmem, size = 0x2000, scoped, tag = 'input window, operand 0, single buffered']
    #allocation3 [shape = 's32[1]{0}', space=sflag, size = 0x4, scoped, tag = 'scoped memory for nextvlad_pallas.1']
    #allocation4 [shape = 's32[1]{0}', space=sflag, size = 0x4, scoped, tag = 'scoped memory for nextvlad_pallas.1']
    #allocation5 [shape = 'u8[147456]{0}', space=vmem, size = 0x24000, scoped, tag = 'input window, operand 1, single buffered']
    #allocation6 [shape = 's32[1]{0}', space=sflag, size = 0x4, scoped, tag = 'scoped memory for nextvlad_pallas.1']
    #allocation7 [shape = 'u8[196608]{0}', space=vmem, size = 0x30000, scoped, tag = 'input window, operand 2, single buffered']
    #allocation8 [shape = 'u8[1024]{0}', space=vmem, size = 0x400, scoped, tag = 'output window, operand 0, single buffered']
    %8 = vsyncpa [#allocation3], 0
    %9 = vsyncpa [#allocation6], 0
    %10 = vsyncpa [#allocation4], 0
    // Predicated region
    $region2: #{nextvlad_pallas.1} parent=1 // pred_check
      _
    $region3: #{nextvlad_pallas.1} parent=1 // pred_check_branch
      %12 = sbr.rel (0) target = $region5
    $region4: #{nextvlad_pallas.1} parent=1 // pred_region
      %14 = vsyncadd [#allocation3], 0
      %s15 = sshll.u32 %s0, 4
      %s16 = int_to_ptr.hbm [resolvable:$true] %s15
      %s17 = sshll.u32 [#allocation2], 4
      %s18 = int_to_ptr.vmem [resolvable:$true] %s17
      %23 = dma.hbm_to_vmem [thread:$0]  %s16, 256, %s18, [#allocation3], 128, 128, 8
    $region5: #{nextvlad_pallas.1} parent=1 // pred_fallthru
      _
    // Predicated region
    $region6: #{nextvlad_pallas.1} parent=1 // pred_check
      _
    $region7: #{nextvlad_pallas.1} parent=1 // pred_check_branch
      %25 = sbr.rel (0) target = $region9
    $region8: #{nextvlad_pallas.1} parent=1 // pred_region
      %27 = vsyncadd [#allocation6], 0
      %s28 = sshll.u32 %s1, 4
      %s29 = int_to_ptr.hbm [resolvable:$true] %s28
      %s30 = sshll.u32 [#allocation5], 4
      %s31 = int_to_ptr.vmem [resolvable:$true] %s30
      %36 = dma.hbm_to_vmem [thread:$0]  %s29, 4608, %s31, [#allocation6], 128, 128, 8
    $region9: #{nextvlad_pallas.1} parent=1 // pred_fallthru
      _
    // Predicated region
    $region10: #{nextvlad_pallas.1} parent=1 // pred_check
      _
    $region11: #{nextvlad_pallas.1} parent=1 // pred_check_branch
      %38 = sbr.rel (0) target = $region13
    $region12: #{nextvlad_pallas.1} parent=1 // pred_region
      %40 = vsyncadd [#allocation6], 0
      %s41 = sshll.u32 %s2, 4
      %s42 = int_to_ptr.hbm [resolvable:$true] %s41
      %s43 = sshll.u32 [#allocation7], 4
      %s44 = int_to_ptr.vmem [resolvable:$true] %s43
      %49 = dma.hbm_to_vmem [thread:$0]  %s42, 6144, %s44, [#allocation6], 512, 512, 32
    $region13: #{nextvlad_pallas.1} parent=1 // pred_fallthru
      _
    // Predicated region
    $region14: #{nextvlad_pallas.1} parent=1 // pred_check
      _
    $region15: #{nextvlad_pallas.1} parent=1 // pred_check_branch
      %51 = sbr.rel (0) target = $region17
    $region16: #{nextvlad_pallas.1} parent=1 // pred_region
      %53 = dma.done [#allocation3], 256
    $region17: #{nextvlad_pallas.1} parent=1 // pred_fallthru
      _
    // Predicated region
    $region18: #{nextvlad_pallas.1} parent=1 // pred_check
      _
    $region19: #{nextvlad_pallas.1} parent=1 // pred_check_branch
      %55 = sbr.rel (0) target = $region21
    $region20: #{nextvlad_pallas.1} parent=1 // pred_region
      %57 = dma.done [#allocation6], 4608
    $region21: #{nextvlad_pallas.1} parent=1 // pred_fallthru
      _
    // Predicated region
    $region22: #{nextvlad_pallas.1} parent=1 // pred_check
      _
    $region23: #{nextvlad_pallas.1} parent=1 // pred_check_branch
      %59 = sbr.rel (0) target = $region25
    $region24: #{nextvlad_pallas.1} parent=1 // pred_region
      %61 = dma.done [#allocation6], 6144
    $region25: #{nextvlad_pallas.1} parent=1 // pred_fallthru
      _
    %v62 = vld [vmem:[#allocation5] sm:$0xff]
    %v63 = vld [vmem:[#allocation5 + $0x8] sm:$0xff]
    %v64 = vld [vmem:[#allocation5 + $0x10] sm:$0xff]
    %v65 = vld [vmem:[#allocation5 + $0x18] sm:$0xff]
    %v66 = vld [vmem:[#allocation5 + $0x20] sm:$0xff]
    %v67 = vld [vmem:[#allocation5 + $0x28] sm:$0xff]
    %v68 = vld [vmem:[#allocation5 + $0x30] sm:$0xff]
    %v69 = vld [vmem:[#allocation5 + $0x38] sm:$0xff]
    %v70 = vld [vmem:[#allocation5 + $0x40] sm:$0xff]
    %v71 = vld [vmem:[#allocation5 + $0x48] sm:$0xff]
    %v72 = vld [vmem:[#allocation5 + $0x50] sm:$0xff]
    %v73 = vld [vmem:[#allocation5 + $0x58] sm:$0xff]
    %v74 = vld [vmem:[#allocation5 + $0x60] sm:$0xff]
    %v75 = vld [vmem:[#allocation5 + $0x68] sm:$0xff]
    %v76 = vld [vmem:[#allocation5 + $0x70] sm:$0xff]
    %v77 = vld [vmem:[#allocation5 + $0x78] sm:$0xff]
    %v78 = vld [vmem:[#allocation5 + $0x80] sm:$0xff]
    %v79 = vld [vmem:[#allocation5 + $0x88] sm:$0xff]
    %v80 = vld [vmem:[#allocation5 + $0x90] sm:$0xff]
    %v81 = vld [vmem:[#allocation5 + $0x98] sm:$0xff]
    %v82 = vld [vmem:[#allocation5 + $0xa0] sm:$0xff]
    %v83 = vld [vmem:[#allocation5 + $0xa8] sm:$0xff]
    %v84 = vld [vmem:[#allocation5 + $0xb0] sm:$0xff]
    %v85 = vld [vmem:[#allocation5 + $0xb8] sm:$0xff]
    %v86 = vld [vmem:[#allocation5 + $0xc0] sm:$0xff]
    %v87 = vld [vmem:[#allocation5 + $0xc8] sm:$0xff]
    %v88 = vld [vmem:[#allocation5 + $0xd0] sm:$0xff]
    %v89 = vld [vmem:[#allocation5 + $0xd8] sm:$0xff]
    %v90 = vld [vmem:[#allocation5 + $0xe0] sm:$0xff]
    %v91 = vld [vmem:[#allocation5 + $0xe8] sm:$0xff]
    %v92 = vld [vmem:[#allocation5 + $0xf0] sm:$0xff]
    %v93 = vld [vmem:[#allocation5 + $0xf8] sm:$0xff]
    %v94 = vld [vmem:[#allocation5 + $0x100] sm:$0xff]
    %v95 = vld [vmem:[#allocation5 + $0x108] sm:$0xf]
    %v96 = vld [vmem:[#allocation5 + $0x110] sm:$0x3]
    %v97 = vld [vmem:[#allocation5 + $0x118] sm:$0xff]
    %v98 = vld [vmem:[#allocation7] sm:$0xff]
    %v99 = vld [vmem:[#allocation7 + $0x8] sm:$0xff]
    %v100 = vld [vmem:[#allocation7 + $0x10] sm:$0xff]
    %v101 = vld [vmem:[#allocation7 + $0x18] sm:$0xff]
    %v102 = vld [vmem:[#allocation7 + $0x20] sm:$0xff]
    %v103 = vld [vmem:[#allocation7 + $0x28] sm:$0xff]
    %v104 = vld [vmem:[#allocation7 + $0x30] sm:$0xff]
    %v105 = vld [vmem:[#allocation7 + $0x38] sm:$0xff]
    %v106 = vld [vmem:[#allocation7 + $0x40] sm:$0xff]
    %v107 = vld [vmem:[#allocation7 + $0x48] sm:$0xff]
    %v108 = vld [vmem:[#allocation7 + $0x50] sm:$0xff]
    %v109 = vld [vmem:[#allocation7 + $0x58] sm:$0xff]
    %v110 = vld [vmem:[#allocation7 + $0x60] sm:$0xff]
    %v111 = vld [vmem:[#allocation7 + $0x68] sm:$0xff]
    %v112 = vld [vmem:[#allocation7 + $0x70] sm:$0xff]
    %v113 = vld [vmem:[#allocation7 + $0x78] sm:$0xff]
    %v114 = vld [vmem:[#allocation7 + $0x80] sm:$0xff]
    %v115 = vld [vmem:[#allocation7 + $0x88] sm:$0xff]
    %v116 = vld [vmem:[#allocation7 + $0x90] sm:$0xff]
    %v117 = vld [vmem:[#allocation7 + $0x98] sm:$0xff]
    %v118 = vld [vmem:[#allocation7 + $0xa0] sm:$0xff]
    %v119 = vld [vmem:[#allocation7 + $0xa8] sm:$0xff]
    %v120 = vld [vmem:[#allocation7 + $0xb0] sm:$0xff]
    %v121 = vld [vmem:[#allocation7 + $0xb8] sm:$0xff]
    %v122 = vld [vmem:[#allocation7 + $0xc0] sm:$0xff]
    %v123 = vld [vmem:[#allocation7 + $0xc8] sm:$0xff]
    %v124 = vld [vmem:[#allocation7 + $0xd0] sm:$0xff]
    %v125 = vld [vmem:[#allocation7 + $0xd8] sm:$0xff]
    %v126 = vld [vmem:[#allocation7 + $0xe0] sm:$0xff]
    %v127 = vld [vmem:[#allocation7 + $0xe8] sm:$0xff]
    %v128 = vld [vmem:[#allocation7 + $0xf0] sm:$0xff]
    %v129 = vld [vmem:[#allocation7 + $0xf8] sm:$0xff]
    %v130 = vld [vmem:[#allocation7 + $0x100] sm:$0xff]
    %v131 = vld [vmem:[#allocation7 + $0x108] sm:$0xff]
    %v132 = vld [vmem:[#allocation7 + $0x110] sm:$0xff]
    %v133 = vld [vmem:[#allocation7 + $0x118] sm:$0xff]
    %v134 = vld [vmem:[#allocation7 + $0x120] sm:$0xff]
    %v135 = vld [vmem:[#allocation7 + $0x128] sm:$0xff]
    %v136 = vld [vmem:[#allocation7 + $0x130] sm:$0xff]
    %v137 = vld [vmem:[#allocation7 + $0x138] sm:$0xff]
    %v138 = vld [vmem:[#allocation7 + $0x140] sm:$0xff]
    %v139 = vld [vmem:[#allocation7 + $0x148] sm:$0xff]
    %v140 = vld [vmem:[#allocation7 + $0x150] sm:$0xff]
    %v141 = vld [vmem:[#allocation7 + $0x158] sm:$0xff]
    %v142 = vld [vmem:[#allocation7 + $0x160] sm:$0xff]
    %v143 = vld [vmem:[#allocation7 + $0x168] sm:$0xff]
    %v144 = vld [vmem:[#allocation7 + $0x170] sm:$0xff]
    %v145 = vld [vmem:[#allocation7 + $0x178] sm:$0xff]
    %v146 = vld [vmem:[#allocation2] sm:$0xff]
    %v147 = vld [vmem:[#allocation2 + $0x8] sm:$0xff]
    %vm148 = vcmp.ne.f32.partialorder %v146, 0.0
    %vm149 = vcmp.ne.f32.partialorder %v147, 0.0
    %v150 = vsel %vm148, 1, 0
    %v151 = vsel %vm149, 1, 0
    %v152 = vcvt.s32.f32 %v150
    %v153 = vcvt.s32.f32 %v151
    %v154 = vperm.slane %v97, 0
    %vm155 = vcmask 261120
    %v157 = vsel %vm155, %v146, 0
    %v160 = vsel %vm155, %v147, 0
    %162 = vmatpush.msra.mxu0 0.0
    %163 = vmatpush.msra.mxu0 0.0
    %164 = vmatpush.msra.mxu0 0.0
    %165 = vmatpush.msra.mxu0 0.0
    %166 = vmatpush.msra.mxu0 0.0
    %167 = vmatpush.msra.mxu0 0.0
    %168 = vmatpush.msra.mxu0 0.0
    %169 = vmatpush.msra.mxu0 0.0
    %170 = vmatpush.msra.mxu0 0.0
    %171 = vmatpush.msra.mxu0 0.0
    %172 = vmatpush.msra.mxu0 0.0
    %173 = vmatpush.msra.mxu0 0.0
    %v174 = vand.u32 %v65, 4294901760
    %175 = vmatpush.msra.mxu0 %v174
    %v176 = vand.u32 %v64, 4294901760
    %177 = vmatpush.msra.mxu0 %v176
    %v178 = vand.u32 %v63, 4294901760
    %179 = vmatpush.msra.mxu0 %v178
    %v180 = vand.u32 %v62, 4294901760
    %181 = vmatpush.msra.mxu0 %v180
    %v182 = vand.u32 %v157, 4294901760
    %v183 = vsub.f32 %v157, %v182
    %v184 = vand.u32 %v183, 4294901760
    %v185 = vsub.f32 %v183, %v184
    %v186 = vand.u32 %v185, 4294901760
    %187 = vmatmul.f32.gmra.mxu0 %v186
    %v188 = vpop.f32.mrf.mxu0
    %v189 = vadd.f32 %v154, %v188
    %v190 = vand.u32 %v160, 4294901760
    %v191 = vsub.f32 %v160, %v190
    %v192 = vand.u32 %v191, 4294901760
    %v193 = vsub.f32 %v191, %v192
    %v194 = vand.u32 %v193, 4294901760
    %195 = vmatmul.f32.gmra.mxu0 %v194
    %v196 = vpop.f32.mrf.mxu0
    %v197 = vadd.f32 %v154, %v196
    %198 = vdwg.mxu0
    %199 = vmatpush.msra.mxu0 0.0
    %200 = vmatpush.msra.mxu0 0.0
    %201 = vmatpush.msra.mxu0 0.0
    %202 = vmatpush.msra.mxu0 0.0
    %203 = vmatpush.msra.mxu0 0.0
    %204 = vmatpush.msra.mxu0 0.0
    %205 = vmatpush.msra.mxu0 0.0
    %206 = vmatpush.msra.mxu0 0.0
    %207 = vmatpush.msra.mxu0 0.0
    %208 = vmatpush.msra.mxu0 0.0
    %209 = vmatpush.msra.mxu0 0.0
    %210 = vmatpush.msra.mxu0 0.0
    %v211 = vand.u32 %v65, 4294901760
    %v212 = vsub.f32 %v65, %v211
    %v213 = vand.u32 %v212, 4294901760
    %v214 = vsub.f32 %v212, %v213
    %v215 = vand.u32 %v214, 4294901760
    %216 = vmatpush.msra.mxu0 %v215
    %v217 = vand.u32 %v64, 4294901760
    %v218 = vsub.f32 %v64, %v217
    %v219 = vand.u32 %v218, 4294901760
    %v220 = vsub.f32 %v218, %v219
    %v221 = vand.u32 %v220, 4294901760
    %222 = vmatpush.msra.mxu0 %v221
    %v223 = vand.u32 %v63, 4294901760
    %v224 = vsub.f32 %v63, %v223
    %v225 = vand.u32 %v224, 4294901760
    %v226 = vsub.f32 %v224, %v225
    %v227 = vand.u32 %v226, 4294901760
    %228 = vmatpush.msra.mxu0 %v227
    %v229 = vand.u32 %v62, 4294901760
    %v230 = vsub.f32 %v62, %v229
    %v231 = vand.u32 %v230, 4294901760
    %v232 = vsub.f32 %v230, %v231
    %v233 = vand.u32 %v232, 4294901760
    %234 = vmatpush.msra.mxu0 %v233
    %v235 = vand.u32 %v157, 4294901760
    %236 = vmatmul.f32.gmra.mxu0 %v235
    %v237 = vpop.f32.mrf.mxu0
    %v238 = vadd.f32 %v189, %v237
    %v239 = vand.u32 %v160, 4294901760
    %240 = vmatmul.f32.gmra.mxu0 %v239
    %v241 = vpop.f32.mrf.mxu0
    %v242 = vadd.f32 %v197, %v241
    %243 = vdwg.mxu0
    %244 = vmatpush.msra.mxu0 0.0
    %245 = vmatpush.msra.mxu0 0.0
    %246 = vmatpush.msra.mxu0 0.0
    %247 = vmatpush.msra.mxu0 0.0
    %248 = vmatpush.msra.mxu0 0.0
    %249 = vmatpush.msra.mxu0 0.0
    %250 = vmatpush.msra.mxu0 0.0
    %251 = vmatpush.msra.mxu0 0.0
    %252 = vmatpush.msra.mxu0 0.0
    %253 = vmatpush.msra.mxu0 0.0
    %254 = vmatpush.msra.mxu0 0.0
    %255 = vmatpush.msra.mxu0 0.0
    %v256 = vand.u32 %v65, 4294901760
    %v257 = vsub.f32 %v65, %v256
    %258 = vmatpush.msra.mxu0 %v257
    %v259 = vand.u32 %v64, 4294901760
    %v260 = vsub.f32 %v64, %v259
    %261 = vmatpush.msra.mxu0 %v260
    %v262 = vand.u32 %v63, 4294901760
    %v263 = vsub.f32 %v63, %v262
    %264 = vmatpush.msra.mxu0 %v263
    %v265 = vand.u32 %v62, 4294901760
    %v266 = vsub.f32 %v62, %v265
    %267 = vmatpush.msra.mxu0 %v266
    %v268 = vand.u32 %v157, 4294901760
    %v269 = vsub.f32 %v157, %v268
    %270 = vmatmul.f32.gmra.mxu0 %v269
    %v271 = vpop.f32.mrf.mxu0
    %v272 = vadd.f32 %v238, %v271
    %v273 = vand.u32 %v160, 4294901760
    %v274 = vsub.f32 %v160, %v273
    %275 = vmatmul.f32.gmra.mxu0 %v274
    %v276 = vpop.f32.mrf.mxu0
    %v277 = vadd.f32 %v242, %v276
    %278 = vdwg.mxu0
    %279 = vmatpush.msra.mxu0 0.0
    %280 = vmatpush.msra.mxu0 0.0
    %281 = vmatpush.msra.mxu0 0.0
    %282 = vmatpush.msra.mxu0 0.0
    %283 = vmatpush.msra.mxu0 0.0
    %284 = vmatpush.msra.mxu0 0.0
    %285 = vmatpush.msra.mxu0 0.0
    %286 = vmatpush.msra.mxu0 0.0
    %287 = vmatpush.msra.mxu0 0.0
    %288 = vmatpush.msra.mxu0 0.0
    %289 = vmatpush.msra.mxu0 0.0
    %290 = vmatpush.msra.mxu0 0.0
    %v291 = vand.u32 %v65, 4294901760
    %292 = vmatpush.msra.mxu0 %v291
    %v293 = vand.u32 %v64, 4294901760
    %294 = vmatpush.msra.mxu0 %v293
    %v295 = vand.u32 %v63, 4294901760
    %296 = vmatpush.msra.mxu0 %v295
    %v297 = vand.u32 %v62, 4294901760
    %298 = vmatpush.msra.mxu0 %v297
    %v299 = vand.u32 %v157, 4294901760
    %v300 = vsub.f32 %v157, %v299
    %v301 = vand.u32 %v300, 4294901760
    %302 = vmatmul.f32.gmra.mxu0 %v301
    %v303 = vpop.f32.mrf.mxu0
    %v304 = vadd.f32 %v272, %v303
    %v305 = vand.u32 %v160, 4294901760
    %v306 = vsub.f32 %v160, %v305
    %v307 = vand.u32 %v306, 4294901760
    %308 = vmatmul.f32.gmra.mxu0 %v307
    %v309 = vpop.f32.mrf.mxu0
    %v310 = vadd.f32 %v277, %v309
    %311 = vdwg.mxu0
    %312 = vmatpush.msra.mxu0 0.0
    %313 = vmatpush.msra.mxu0 0.0
    %314 = vmatpush.msra.mxu0 0.0
    %315 = vmatpush.msra.mxu0 0.0
    %316 = vmatpush.msra.mxu0 0.0
    %317 = vmatpush.msra.mxu0 0.0
    %318 = vmatpush.msra.mxu0 0.0
    %319 = vmatpush.msra.mxu0 0.0
    %320 = vmatpush.msra.mxu0 0.0
    %321 = vmatpush.msra.mxu0 0.0
    %322 = vmatpush.msra.mxu0 0.0
    %323 = vmatpush.msra.mxu0 0.0
    %v324 = vand.u32 %v65, 4294901760
    %v325 = vsub.f32 %v65, %v324
    %v326 = vand.u32 %v325, 4294901760
    %327 = vmatpush.msra.mxu0 %v326
    %v328 = vand.u32 %v64, 4294901760
    %v329 = vsub.f32 %v64, %v328
    %v330 = vand.u32 %v329, 4294901760
    %331 = vmatpush.msra.mxu0 %v330
    %v332 = vand.u32 %v63, 4294901760
    %v333 = vsub.f32 %v63, %v332
    %v334 = vand.u32 %v333, 4294901760
    %335 = vmatpush.msra.mxu0 %v334
    %v336 = vand.u32 %v62, 4294901760
    %v337 = vsub.f32 %v62, %v336
    %v338 = vand.u32 %v337, 4294901760
    %339 = vmatpush.msra.mxu0 %v338
    %v340 = vand.u32 %v157, 4294901760
    %341 = vmatmul.f32.gmra.mxu0 %v340
    %v342 = vpop.f32.mrf.mxu0
    %v343 = vadd.f32 %v304, %v342
    %v344 = vand.u32 %v160, 4294901760
    %345 = vmatmul.f32.gmra.mxu0 %v344
    %v346 = vpop.f32.mrf.mxu0
    %v347 = vadd.f32 %v310, %v346
    %348 = vdwg.mxu0
    %349 = vmatpush.msra.mxu0 0.0
    %350 = vmatpush.msra.mxu0 0.0
    %351 = vmatpush.msra.mxu0 0.0
    %352 = vmatpush.msra.mxu0 0.0
    %353 = vmatpush.msra.mxu0 0.0
    %354 = vmatpush.msra.mxu0 0.0
    %355 = vmatpush.msra.mxu0 0.0
    %356 = vmatpush.msra.mxu0 0.0
    %357 = vmatpush.msra.mxu0 0.0
    %358 = vmatpush.msra.mxu0 0.0
    %359 = vmatpush.msra.mxu0 0.0
    %360 = vmatpush.msra.mxu0 0.0
    %v361 = vand.u32 %v65, 4294901760
    %362 = vmatpush.msra.mxu0 %v361
    %v363 = vand.u32 %v64, 4294901760
    %364 = vmatpush.msra.mxu0 %v363
    %v365 = vand.u32 %v63, 4294901760
    %366 = vmatpush.msra.mxu0 %v365
    %v367 = vand.u32 %v62, 4294901760
    %368 = vmatpush.msra.mxu0 %v367
    %v369 = vand.u32 %v157, 4294901760
    %370 = vmatmul.f32.gmra.mxu0 %v369
    %v371 = vpop.f32.mrf.mxu0
    %v372 = vadd.f32 %v343, %v371
    %v373 = vand.u32 %v160, 4294901760
    %374 = vmatmul.f32.gmra.mxu0 %v373
    %v375 = vpop.f32.mrf.mxu0
    %v376 = vadd.f32 %v347, %v375
    %377 = vdwg.mxu0
    %v378 = vperm.slane %v97, 1
    %vm379 = vcmask 523264
    %v381 = vsel %vm379, %v372, 0
    %v384 = vsel %vm379, %v376, 0
    %386 = vmatpush.msra.mxu0 0.0
    %387 = vmatpush.msra.mxu0 0.0
    %388 = vmatpush.msra.mxu0 0.0
    %389 = vmatpush.msra.mxu0 0.0
    %390 = vmatpush.msra.mxu0 0.0
    %391 = vmatpush.msra.mxu0 0.0
    %392 = vmatpush.msra.mxu0 0.0
    %393 = vmatpush.msra.mxu0 0.0
    %v394 = vand.u32 %v73, 4294901760
    %395 = vmatpush.msra.mxu0 %v394
    %v396 = vand.u32 %v72, 4294901760
    %397 = vmatpush.msra.mxu0 %v396
    %v398 = vand.u32 %v71, 4294901760
    %399 = vmatpush.msra.mxu0 %v398
    %v400 = vand.u32 %v70, 4294901760
    %401 = vmatpush.msra.mxu0 %v400
    %v402 = vand.u32 %v69, 4294901760
    %403 = vmatpush.msra.mxu0 %v402
    %v404 = vand.u32 %v68, 4294901760
    %405 = vmatpush.msra.mxu0 %v404
    %v406 = vand.u32 %v67, 4294901760
    %407 = vmatpush.msra.mxu0 %v406
    %v408 = vand.u32 %v66, 4294901760
    %409 = vmatpush.msra.mxu0 %v408
    %v410 = vand.u32 %v381, 4294901760
    %v411 = vsub.f32 %v381, %v410
    %v412 = vand.u32 %v411, 4294901760
    %v413 = vsub.f32 %v411, %v412
    %v414 = vand.u32 %v413, 4294901760
    %415 = vmatmul.f32.gmra.mxu0 %v414
    %v416 = vpop.f32.mrf.mxu0
    %v417 = vadd.f32 %v378, %v416
    %v418 = vand.u32 %v384, 4294901760
    %v419 = vsub.f32 %v384, %v418
    %v420 = vand.u32 %v419, 4294901760
    %v421 = vsub.f32 %v419, %v420
    %v422 = vand.u32 %v421, 4294901760
    %423 = vmatmul.f32.gmra.mxu0 %v422
    %v424 = vpop.f32.mrf.mxu0
    %v425 = vadd.f32 %v378, %v424
    %426 = vdwg.mxu0
    %427 = vmatpush.msra.mxu0 0.0
    %428 = vmatpush.msra.mxu0 0.0
    %429 = vmatpush.msra.mxu0 0.0
    %430 = vmatpush.msra.mxu0 0.0
    %431 = vmatpush.msra.mxu0 0.0
    %432 = vmatpush.msra.mxu0 0.0
    %433 = vmatpush.msra.mxu0 0.0
    %434 = vmatpush.msra.mxu0 0.0
    %v435 = vand.u32 %v73, 4294901760
    %v436 = vsub.f32 %v73, %v435
    %v437 = vand.u32 %v436, 4294901760
    %v438 = vsub.f32 %v436, %v437
    %v439 = vand.u32 %v438, 4294901760
    %440 = vmatpush.msra.mxu0 %v439
    %v441 = vand.u32 %v72, 4294901760
    %v442 = vsub.f32 %v72, %v441
    %v443 = vand.u32 %v442, 4294901760
    %v444 = vsub.f32 %v442, %v443
    %v445 = vand.u32 %v444, 4294901760
    %446 = vmatpush.msra.mxu0 %v445
    %v447 = vand.u32 %v71, 4294901760
    %v448 = vsub.f32 %v71, %v447
    %v449 = vand.u32 %v448, 4294901760
    %v450 = vsub.f32 %v448, %v449
    %v451 = vand.u32 %v450, 4294901760
    %452 = vmatpush.msra.mxu0 %v451
    %v453 = vand.u32 %v70, 4294901760
    %v454 = vsub.f32 %v70, %v453
    %v455 = vand.u32 %v454, 4294901760
    %v456 = vsub.f32 %v454, %v455
    %v457 = vand.u32 %v456, 4294901760
    %458 = vmatpush.msra.mxu0 %v457
    %v459 = vand.u32 %v69, 4294901760
    %v460 = vsub.f32 %v69, %v459
    %v461 = vand.u32 %v460, 4294901760
    %v462 = vsub.f32 %v460, %v461
    %v463 = vand.u32 %v462, 4294901760
    %464 = vmatpush.msra.mxu0 %v463
    %v465 = vand.u32 %v68, 4294901760
    %v466 = vsub.f32 %v68, %v465
    %v467 = vand.u32 %v466, 4294901760
    %v468 = vsub.f32 %v466, %v467
    %v469 = vand.u32 %v468, 4294901760
    %470 = vmatpush.msra.mxu0 %v469
    %v471 = vand.u32 %v67, 4294901760
    %v472 = vsub.f32 %v67, %v471
    %v473 = vand.u32 %v472, 4294901760
    %v474 = vsub.f32 %v472, %v473
    %v475 = vand.u32 %v474, 4294901760
    %476 = vmatpush.msra.mxu0 %v475
    %v477 = vand.u32 %v66, 4294901760
    %v478 = vsub.f32 %v66, %v477
    %v479 = vand.u32 %v478, 4294901760
    %v480 = vsub.f32 %v478, %v479
    %v481 = vand.u32 %v480, 4294901760
    %482 = vmatpush.msra.mxu0 %v481
    %v483 = vand.u32 %v381, 4294901760
    %484 = vmatmul.f32.gmra.mxu0 %v483
    %v485 = vpop.f32.mrf.mxu0
    %v486 = vadd.f32 %v417, %v485
    %v487 = vand.u32 %v384, 4294901760
    %488 = vmatmul.f32.gmra.mxu0 %v487
    %v489 = vpop.f32.mrf.mxu0
    %v490 = vadd.f32 %v425, %v489
    %491 = vdwg.mxu0
    %492 = vmatpush.msra.mxu0 0.0
    %493 = vmatpush.msra.mxu0 0.0
    %494 = vmatpush.msra.mxu0 0.0
    %495 = vmatpush.msra.mxu0 0.0
    %496 = vmatpush.msra.mxu0 0.0
    %497 = vmatpush.msra.mxu0 0.0
    %498 = vmatpush.msra.mxu0 0.0
    %499 = vmatpush.msra.mxu0 0.0
    %v500 = vand.u32 %v73, 4294901760
    %v501 = vsub.f32 %v73, %v500
    %502 = vmatpush.msra.mxu0 %v501
    %v503 = vand.u32 %v72, 4294901760
    %v504 = vsub.f32 %v72, %v503
    %505 = vmatpush.msra.mxu0 %v504
    %v506 = vand.u32 %v71, 4294901760
    %v507 = vsub.f32 %v71, %v506
    %508 = vmatpush.msra.mxu0 %v507
    %v509 = vand.u32 %v70, 4294901760
    %v510 = vsub.f32 %v70, %v509
    %511 = vmatpush.msra.mxu0 %v510
    %v512 = vand.u32 %v69, 4294901760
    %v513 = vsub.f32 %v69, %v512
    %514 = vmatpush.msra.mxu0 %v513
    %v515 = vand.u32 %v68, 4294901760
    %v516 = vsub.f32 %v68, %v515
    %517 = vmatpush.msra.mxu0 %v516
    %v518 = vand.u32 %v67, 4294901760
    %v519 = vsub.f32 %v67, %v518
    %520 = vmatpush.msra.mxu0 %v519
    %v521 = vand.u32 %v66, 4294901760
    %v522 = vsub.f32 %v66, %v521
    %523 = vmatpush.msra.mxu0 %v522
    %v524 = vand.u32 %v381, 4294901760
    %v525 = vsub.f32 %v381, %v524
    %526 = vmatmul.f32.gmra.mxu0 %v525
    %v527 = vpop.f32.mrf.mxu0
    %v528 = vadd.f32 %v486, %v527
    %v529 = vand.u32 %v384, 4294901760
    %v530 = vsub.f32 %v384, %v529
    %531 = vmatmul.f32.gmra.mxu0 %v530
    %v532 = vpop.f32.mrf.mxu0
    %v533 = vadd.f32 %v490, %v532
    %534 = vdwg.mxu0
    %535 = vmatpush.msra.mxu0 0.0
    %536 = vmatpush.msra.mxu0 0.0
    %537 = vmatpush.msra.mxu0 0.0
    %538 = vmatpush.msra.mxu0 0.0
    %539 = vmatpush.msra.mxu0 0.0
    %540 = vmatpush.msra.mxu0 0.0
    %541 = vmatpush.msra.mxu0 0.0
    %542 = vmatpush.msra.mxu0 0.0
    %v543 = vand.u32 %v73, 4294901760
    %544 = vmatpush.msra.mxu0 %v543
    %v545 = vand.u32 %v72, 4294901760
    %546 = vmatpush.msra.mxu0 %v545
    %v547 = vand.u32 %v71, 4294901760
    %548 = vmatpush.msra.mxu0 %v547
    %v549 = vand.u32 %v70, 4294901760
    %550 = vmatpush.msra.mxu0 %v549
    %v551 = vand.u32 %v69, 4294901760
    %552 = vmatpush.msra.mxu0 %v551
    %v553 = vand.u32 %v68, 4294901760
    %554 = vmatpush.msra.mxu0 %v553
    %v555 = vand.u32 %v67, 4294901760
    %556 = vmatpush.msra.mxu0 %v555
    %v557 = vand.u32 %v66, 4294901760
    %558 = vmatpush.msra.mxu0 %v557
    %v559 = vand.u32 %v381, 4294901760
    %v560 = vsub.f32 %v381, %v559
    %v561 = vand.u32 %v560, 4294901760
    %562 = vmatmul.f32.gmra.mxu0 %v561
    %v563 = vpop.f32.mrf.mxu0
    %v564 = vadd.f32 %v528, %v563
    %v565 = vand.u32 %v384, 4294901760
    %v566 = vsub.f32 %v384, %v565
    %v567 = vand.u32 %v566, 4294901760
    %568 = vmatmul.f32.gmra.mxu0 %v567
    %v569 = vpop.f32.mrf.mxu0
    %v570 = vadd.f32 %v533, %v569
    %571 = vdwg.mxu0
    %572 = vmatpush.msra.mxu0 0.0
    %573 = vmatpush.msra.mxu0 0.0
    %574 = vmatpush.msra.mxu0 0.0
    %575 = vmatpush.msra.mxu0 0.0
    %576 = vmatpush.msra.mxu0 0.0
    %577 = vmatpush.msra.mxu0 0.0
    %578 = vmatpush.msra.mxu0 0.0
    %579 = vmatpush.msra.mxu0 0.0
    %v580 = vand.u32 %v73, 4294901760
    %v581 = vsub.f32 %v73, %v580
    %v582 = vand.u32 %v581, 4294901760
    %583 = vmatpush.msra.mxu0 %v582
    %v584 = vand.u32 %v72, 4294901760
    %v585 = vsub.f32 %v72, %v584
    %v586 = vand.u32 %v585, 4294901760
    %587 = vmatpush.msra.mxu0 %v586
    %v588 = vand.u32 %v71, 4294901760
    %v589 = vsub.f32 %v71, %v588
    %v590 = vand.u32 %v589, 4294901760
    %591 = vmatpush.msra.mxu0 %v590
    %v592 = vand.u32 %v70, 4294901760
    %v593 = vsub.f32 %v70, %v592
    %v594 = vand.u32 %v593, 4294901760
    %595 = vmatpush.msra.mxu0 %v594
    %v596 = vand.u32 %v69, 4294901760
    %v597 = vsub.f32 %v69, %v596
    %v598 = vand.u32 %v597, 4294901760
    %599 = vmatpush.msra.mxu0 %v598
    %v600 = vand.u32 %v68, 4294901760
    %v601 = vsub.f32 %v68, %v600
    %v602 = vand.u32 %v601, 4294901760
    %603 = vmatpush.msra.mxu0 %v602
    %v604 = vand.u32 %v67, 4294901760
    %v605 = vsub.f32 %v67, %v604
    %v606 = vand.u32 %v605, 4294901760
    %607 = vmatpush.msra.mxu0 %v606
    %v608 = vand.u32 %v66, 4294901760
    %v609 = vsub.f32 %v66, %v608
    %v610 = vand.u32 %v609, 4294901760
    %611 = vmatpush.msra.mxu0 %v610
    %v612 = vand.u32 %v381, 4294901760
    %613 = vmatmul.f32.gmra.mxu0 %v612
    %v614 = vpop.f32.mrf.mxu0
    %v615 = vadd.f32 %v564, %v614
    %v616 = vand.u32 %v384, 4294901760
    %617 = vmatmul.f32.gmra.mxu0 %v616
    %v618 = vpop.f32.mrf.mxu0
    %v619 = vadd.f32 %v570, %v618
    %620 = vdwg.mxu0
    %621 = vmatpush.msra.mxu0 0.0
    %622 = vmatpush.msra.mxu0 0.0
    %623 = vmatpush.msra.mxu0 0.0
    %624 = vmatpush.msra.mxu0 0.0
    %625 = vmatpush.msra.mxu0 0.0
    %626 = vmatpush.msra.mxu0 0.0
    %627 = vmatpush.msra.mxu0 0.0
    %628 = vmatpush.msra.mxu0 0.0
    %v629 = vand.u32 %v73, 4294901760
    %630 = vmatpush.msra.mxu0 %v629
    %v631 = vand.u32 %v72, 4294901760
    %632 = vmatpush.msra.mxu0 %v631
    %v633 = vand.u32 %v71, 4294901760
    %634 = vmatpush.msra.mxu0 %v633
    %v635 = vand.u32 %v70, 4294901760
    %636 = vmatpush.msra.mxu0 %v635
    %v637 = vand.u32 %v69, 4294901760
    %638 = vmatpush.msra.mxu0 %v637
    %v639 = vand.u32 %v68, 4294901760
    %640 = vmatpush.msra.mxu0 %v639
    %v641 = vand.u32 %v67, 4294901760
    %642 = vmatpush.msra.mxu0 %v641
    %v643 = vand.u32 %v66, 4294901760
    %644 = vmatpush.msra.mxu0 %v643
    %v645 = vand.u32 %v381, 4294901760
    %646 = vmatmul.f32.gmra.mxu0 %v645
    %v647 = vpop.f32.mrf.mxu0
    %v648 = vadd.f32 %v615, %v647
    %v649 = vand.u32 %v384, 4294901760
    %650 = vmatmul.f32.gmra.mxu0 %v649
    %v651 = vpop.f32.mrf.mxu0
    %v652 = vadd.f32 %v619, %v651
    %653 = vdwg.mxu0
    %v654 = vxor.u32 %v648, 2147483648
    %v655 = vxor.u32 %v652, 2147483648
    %v656 = vmul.f32 %v654, 1.442695
    %v657 = vpow.pop %v656
    %v658 = vmul.f32 %v655, 1.442695
    %v659 = vpow.pop %v658
    %v660 = vadd.f32 %v657, 1.0
    %v661 = vadd.f32 %v659, 1.0
    %v662 = vrcp.pop %v660
    %v663 = vmul.f32 %v660, %v662
    %v664 = vsub.f32 1.0, %v663
    %v665 = vmul.f32 %v662, %v664
    %v666 = vadd.f32 %v662, %v665
    %vm667 = vweird.f32 %v660
    %vm668 = vweird.f32 %v662
    %vm669 = vmor %vm667, %vm668
    %v670 = vsel %vm669, %v662, %v666
    %v671 = vand.u32 2147483647, %v660
    %vm672 = vcmp.eq.f32.partialorder %v671, 8.507059e+37
    %v673 = vand.u32 %v660, 2147483648
    %v674 = vor.u32 1.1754944e-38, %v673
    %v675 = vsel %vm672, %v674, %v670
    %v676 = vmul.f32 1.0, %v675
    %v677 = vrcp.pop %v661
    %v678 = vmul.f32 %v661, %v677
    %v679 = vsub.f32 1.0, %v678
    %v680 = vmul.f32 %v677, %v679
    %v681 = vadd.f32 %v677, %v680
    %vm682 = vweird.f32 %v661
    %vm683 = vweird.f32 %v677
    %vm684 = vmor %vm682, %vm683
    %v685 = vsel %vm684, %v677, %v681
    %v686 = vand.u32 2147483647, %v661
    %vm687 = vcmp.eq.f32.partialorder %v686, 8.507059e+37
    %v688 = vand.u32 %v661, 2147483648
    %v689 = vor.u32 1.1754944e-38, %v688
    %v690 = vsel %vm687, %v689, %v685
    %v691 = vmul.f32 1.0, %v690
    %693 = vset.pattern.permute.xlu0 0
    %694 = vperm.xlu0 %693, %v152
    %v695 = vpop.permute.xlu0 %694
    %698 = vset.pattern.permute.xlu0 0
    %699 = vperm.xlu0 %698, %v153
    %v700 = vpop.permute.xlu0 %699
    %v702 = vmul.f32 %v676, %v695
    %v703 = vmul.f32 %v691, %v700
    %v704 = vmul.f32 %v648, %v648
    %v705 = vmul.f32 %v652, %v652
    %708 = vrot.lane.b32.xlu0 %v704, 32
    %v709 = vpop.permute.xlu0 %708
    %710 = vrot.lane.b32.xlu0 %v705, 32
    %v711 = vpop.permute.xlu0 %710
    %v714 = vsel %vm155, %v648, %v709
    %v715 = vsel %vm155, %v652, %v711
    %vm716 = vcmask 130048
    %v718 = vsel %vm716, %v96, 0
    %720 = vmatpush.msra.mxu0 0.0
    %721 = vmatpush.msra.mxu0 0.0
    %722 = vmatpush.msra.mxu0 0.0
    %723 = vmatpush.msra.mxu0 0.0
    %724 = vmatpush.msra.mxu0 0.0
    %725 = vmatpush.msra.mxu0 0.0
    %726 = vmatpush.msra.mxu0 0.0
    %727 = vmatpush.msra.mxu0 0.0
    %728 = vmatpush.msra.mxu0 0.0
    %729 = vmatpush.msra.mxu0 0.0
    %730 = vmatpush.msra.mxu0 0.0
    %731 = vmatpush.msra.mxu0 0.0
    %732 = vmatpush.msra.mxu0 0.0
    %733 = vmatpush.msra.mxu0 0.0
    %v734 = vand.u32 %v715, 4294901760
    %735 = vmatpush.msra.mxu0 %v734
    %v736 = vand.u32 %v714, 4294901760
    %737 = vmatpush.msra.mxu0 %v736
    %v738 = vand.u32 %v718, 4294901760
    %v739 = vsub.f32 %v718, %v738
    %v740 = vand.u32 %v739, 4294901760
    %v741 = vsub.f32 %v739, %v740
    %v742 = vand.u32 %v741, 4294901760
    %743 = vmatmul.f32.gmra.mxu0 %v742
    %v744 = vpop.f32.mrf.mxu0
    %v745 = vadd.f32 0.0, %v744
    %746 = vdwg.mxu0
    %747 = vmatpush.msra.mxu0 0.0
    %748 = vmatpush.msra.mxu0 0.0
    %749 = vmatpush.msra.mxu0 0.0
    %750 = vmatpush.msra.mxu0 0.0
    %751 = vmatpush.msra.mxu0 0.0
    %752 = vmatpush.msra.mxu0 0.0
    %753 = vmatpush.msra.mxu0 0.0
    %754 = vmatpush.msra.mxu0 0.0
    %755 = vmatpush.msra.mxu0 0.0
    %756 = vmatpush.msra.mxu0 0.0
    %757 = vmatpush.msra.mxu0 0.0
    %758 = vmatpush.msra.mxu0 0.0
    %759 = vmatpush.msra.mxu0 0.0
    %760 = vmatpush.msra.mxu0 0.0
    %v761 = vand.u32 %v715, 4294901760
    %v762 = vsub.f32 %v715, %v761
    %v763 = vand.u32 %v762, 4294901760
    %v764 = vsub.f32 %v762, %v763
    %v765 = vand.u32 %v764, 4294901760
    %766 = vmatpush.msra.mxu0 %v765
    %v767 = vand.u32 %v714, 4294901760
    %v768 = vsub.f32 %v714, %v767
    %v769 = vand.u32 %v768, 4294901760
    %v770 = vsub.f32 %v768, %v769
    %v771 = vand.u32 %v770, 4294901760
    %772 = vmatpush.msra.mxu0 %v771
    %v773 = vand.u32 %v718, 4294901760
    %774 = vmatmul.f32.gmra.mxu0 %v773
    %v775 = vpop.f32.mrf.mxu0
    %v776 = vadd.f32 %v745, %v775
    %777 = vdwg.mxu0
    %778 = vmatpush.msra.mxu0 0.0
    %779 = vmatpush.msra.mxu0 0.0
    %780 = vmatpush.msra.mxu0 0.0
    %781 = vmatpush.msra.mxu0 0.0
    %782 = vmatpush.msra.mxu0 0.0
    %783 = vmatpush.msra.mxu0 0.0
    %784 = vmatpush.msra.mxu0 0.0
    %785 = vmatpush.msra.mxu0 0.0
    %786 = vmatpush.msra.mxu0 0.0
    %787 = vmatpush.msra.mxu0 0.0
    %788 = vmatpush.msra.mxu0 0.0
    %789 = vmatpush.msra.mxu0 0.0
    %790 = vmatpush.msra.mxu0 0.0
    %791 = vmatpush.msra.mxu0 0.0
    %v792 = vand.u32 %v715, 4294901760
    %v793 = vsub.f32 %v715, %v792
    %794 = vmatpush.msra.mxu0 %v793
    %v795 = vand.u32 %v714, 4294901760
    %v796 = vsub.f32 %v714, %v795
    %797 = vmatpush.msra.mxu0 %v796
    %v798 = vand.u32 %v718, 4294901760
    %v799 = vsub.f32 %v718, %v798
    %800 = vmatmul.f32.gmra.mxu0 %v799
    %v801 = vpop.f32.mrf.mxu0
    %v802 = vadd.f32 %v776, %v801
    %803 = vdwg.mxu0
    %804 = vmatpush.msra.mxu0 0.0
    %805 = vmatpush.msra.mxu0 0.0
    %806 = vmatpush.msra.mxu0 0.0
    %807 = vmatpush.msra.mxu0 0.0
    %808 = vmatpush.msra.mxu0 0.0
    %809 = vmatpush.msra.mxu0 0.0
    %810 = vmatpush.msra.mxu0 0.0
    %811 = vmatpush.msra.mxu0 0.0
    %812 = vmatpush.msra.mxu0 0.0
    %813 = vmatpush.msra.mxu0 0.0
    %814 = vmatpush.msra.mxu0 0.0
    %815 = vmatpush.msra.mxu0 0.0
    %816 = vmatpush.msra.mxu0 0.0
    %817 = vmatpush.msra.mxu0 0.0
    %v818 = vand.u32 %v715, 4294901760
    %819 = vmatpush.msra.mxu0 %v818
    %v820 = vand.u32 %v714, 4294901760
    %821 = vmatpush.msra.mxu0 %v820
    %v822 = vand.u32 %v718, 4294901760
    %v823 = vsub.f32 %v718, %v822
    %v824 = vand.u32 %v823, 4294901760
    %825 = vmatmul.f32.gmra.mxu0 %v824
    %v826 = vpop.f32.mrf.mxu0
    %v827 = vadd.f32 %v802, %v826
    %828 = vdwg.mxu0
    %829 = vmatpush.msra.mxu0 0.0
    %830 = vmatpush.msra.mxu0 0.0
    %831 = vmatpush.msra.mxu0 0.0
    %832 = vmatpush.msra.mxu0 0.0
    %833 = vmatpush.msra.mxu0 0.0
    %834 = vmatpush.msra.mxu0 0.0
    %835 = vmatpush.msra.mxu0 0.0
    %836 = vmatpush.msra.mxu0 0.0
    %837 = vmatpush.msra.mxu0 0.0
    %838 = vmatpush.msra.mxu0 0.0
    %839 = vmatpush.msra.mxu0 0.0
    %840 = vmatpush.msra.mxu0 0.0
    %841 = vmatpush.msra.mxu0 0.0
    %842 = vmatpush.msra.mxu0 0.0
    %v843 = vand.u32 %v715, 4294901760
    %v844 = vsub.f32 %v715, %v843
    %v845 = vand.u32 %v844, 4294901760
    %846 = vmatpush.msra.mxu0 %v845
    %v847 = vand.u32 %v714, 4294901760
    %v848 = vsub.f32 %v714, %v847
    %v849 = vand.u32 %v848, 4294901760
    %850 = vmatpush.msra.mxu0 %v849
    %v851 = vand.u32 %v718, 4294901760
    %852 = vmatmul.f32.gmra.mxu0 %v851
    %v853 = vpop.f32.mrf.mxu0
    %v854 = vadd.f32 %v827, %v853
    %855 = vdwg.mxu0
    %856 = vmatpush.msra.mxu0 0.0
    %857 = vmatpush.msra.mxu0 0.0
    %858 = vmatpush.msra.mxu0 0.0
    %859 = vmatpush.msra.mxu0 0.0
    %860 = vmatpush.msra.mxu0 0.0
    %861 = vmatpush.msra.mxu0 0.0
    %862 = vmatpush.msra.mxu0 0.0
    %863 = vmatpush.msra.mxu0 0.0
    %864 = vmatpush.msra.mxu0 0.0
    %865 = vmatpush.msra.mxu0 0.0
    %866 = vmatpush.msra.mxu0 0.0
    %867 = vmatpush.msra.mxu0 0.0
    %868 = vmatpush.msra.mxu0 0.0
    %869 = vmatpush.msra.mxu0 0.0
    %v870 = vand.u32 %v715, 4294901760
    %871 = vmatpush.msra.mxu0 %v870
    %v872 = vand.u32 %v714, 4294901760
    %873 = vmatpush.msra.mxu0 %v872
    %v874 = vand.u32 %v718, 4294901760
    %875 = vmatmul.f32.gmra.mxu0 %v874
    %v876 = vpop.f32.mrf.mxu0
    %v877 = vadd.f32 %v854, %v876
    %878 = vdwg.mxu0
    %v879 = vadd.f32 %v877, 0.0
    %v881 = vrot.slane %v877, 1
    %v883 = vadd.f32 %v879, %v881
    %v884 = vmul.f32 %v883, 0.0625
    %v885 = vmul.f32 %v884, %v884
    %887 = vrot.lane.b32.xlu0 %v885, 32
    %v888 = vpop.permute.xlu0 %887
    %v890 = vsub.f32 %v884, %v888
    %v891 = vperm.slane %v884, 0
    %v892 = vsub.f32 %v648, %v891
    %v893 = vsub.f32 %v652, %v891
    %v894 = vadd.f32 %v890, 1e-05
    %v895 = vrsqrt.pop %v894
    %v896 = vmul.f32 %v895, %v894
    %v897 = vmul.f32 %v896, %v895
    %v898 = vmul.f32 0.5, %v897
    %v899 = vsub.f32 1.5, %v898
    %v900 = vmul.f32 %v895, %v899
    %vm901 = vweird.f32 %v894
    %vm902 = vweird.f32 %v895
    %vm903 = vmor %vm901, %vm902
    %v904 = vsel %vm903, %v895, %v900
    %v906 = vrot.slane %v97, 2
    %907 = vrot.lane.b32.xlu0 %v906, 32
    %v908 = vpop.permute.xlu0 %907
    %v910 = vmul.f32 %v904, %v908
    %v911 = vperm.slane %v910, 0
    %913 = vrot.lane.b32.xlu0 %v911, 96
    %v914 = vpop.permute.xlu0 %913
    %v916 = vmul.f32 %v892, %v914
    %v917 = vmul.f32 %v893, %v914
    %v918 = vperm.slane %v97, 3
    %v919 = vadd.f32 %v916, %v918
    %v920 = vadd.f32 %v917, %v918
    %v921 = vsel %vm155, %v919, -inf
    %922 = vmax.xlane.f32.xlu0 %v921
    %v923 = vpop.xlane.xlu0 %922
    %v924 = vsel %vm155, %v920, -inf
    %925 = vmax.xlane.f32.xlu0 %v924
    %v926 = vpop.xlane.xlu0 %925
    %v927 = vsub.f32 %v919, %v923
    %v928 = vsub.f32 %v920, %v926
    %v929 = vmul.f32 %v927, 1.442695
    %v930 = vpow.pop %v929
    %v931 = vmul.f32 %v928, 1.442695
    %v932 = vpow.pop %v931
    %v934 = vsel %vm155, %v930, 0
    %v937 = vsel %vm155, %v932, 0
    %939 = vmatpush.msra.mxu0 0.0
    %940 = vmatpush.msra.mxu0 0.0
    %941 = vmatpush.msra.mxu0 0.0
    %942 = vmatpush.msra.mxu0 0.0
    %943 = vmatpush.msra.mxu0 0.0
    %944 = vmatpush.msra.mxu0 0.0
    %945 = vmatpush.msra.mxu0 0.0
    %946 = vmatpush.msra.mxu0 0.0
    %947 = vmatpush.msra.mxu0 0.0
    %948 = vmatpush.msra.mxu0 0.0
    %949 = vmatpush.msra.mxu0 0.0
    %950 = vmatpush.msra.mxu0 0.0
    %v951 = vand.u32 %v93, 4294901760
    %952 = vmatpush.msra.mxu0 %v951
    %v953 = vand.u32 %v92, 4294901760
    %954 = vmatpush.msra.mxu0 %v953
    %v955 = vand.u32 %v91, 4294901760
    %956 = vmatpush.msra.mxu0 %v955
    %v957 = vand.u32 %v90, 4294901760
    %958 = vmatpush.msra.mxu0 %v957
    %v959 = vand.u32 %v934, 4294901760
    %v960 = vsub.f32 %v934, %v959
    %v961 = vand.u32 %v960, 4294901760
    %v962 = vsub.f32 %v960, %v961
    %v963 = vand.u32 %v962, 4294901760
    %964 = vmatmul.f32.gmra.mxu0 %v963
    %v965 = vpop.f32.mrf.mxu0
    %v966 = vadd.f32 0.0, %v965
    %v967 = vand.u32 %v937, 4294901760
    %v968 = vsub.f32 %v937, %v967
    %v969 = vand.u32 %v968, 4294901760
    %v970 = vsub.f32 %v968, %v969
    %v971 = vand.u32 %v970, 4294901760
    %972 = vmatmul.f32.gmra.mxu0 %v971
    %v973 = vpop.f32.mrf.mxu0
    %v974 = vadd.f32 0.0, %v973
    %975 = vdwg.mxu0
    %976 = vmatpush.msra.mxu0 0.0
    %977 = vmatpush.msra.mxu0 0.0
    %978 = vmatpush.msra.mxu0 0.0
    %979 = vmatpush.msra.mxu0 0.0
    %980 = vmatpush.msra.mxu0 0.0
    %981 = vmatpush.msra.mxu0 0.0
    %982 = vmatpush.msra.mxu0 0.0
    %983 = vmatpush.msra.mxu0 0.0
    %984 = vmatpush.msra.mxu0 0.0
    %985 = vmatpush.msra.mxu0 0.0
    %986 = vmatpush.msra.mxu0 0.0
    %987 = vmatpush.msra.mxu0 0.0
    %v988 = vand.u32 %v93, 4294901760
    %v989 = vsub.f32 %v93, %v988
    %v990 = vand.u32 %v989, 4294901760
    %v991 = vsub.f32 %v989, %v990
    %v992 = vand.u32 %v991, 4294901760
    %993 = vmatpush.msra.mxu0 %v992
    %v994 = vand.u32 %v92, 4294901760
    %v995 = vsub.f32 %v92, %v994
    %v996 = vand.u32 %v995, 4294901760
    %v997 = vsub.f32 %v995, %v996
    %v998 = vand.u32 %v997, 4294901760
    %999 = vmatpush.msra.mxu0 %v998
    %v1000 = vand.u32 %v91, 4294901760
    %v1001 = vsub.f32 %v91, %v1000
    %v1002 = vand.u32 %v1001, 4294901760
    %v1003 = vsub.f32 %v1001, %v1002
    %v1004 = vand.u32 %v1003, 4294901760
    %1005 = vmatpush.msra.mxu0 %v1004
    %v1006 = vand.u32 %v90, 4294901760
    %v1007 = vsub.f32 %v90, %v1006
    %v1008 = vand.u32 %v1007, 4294901760
    %v1009 = vsub.f32 %v1007, %v1008
    %v1010 = vand.u32 %v1009, 4294901760
    %1011 = vmatpush.msra.mxu0 %v1010
    %v1012 = vand.u32 %v934, 4294901760
    %1013 = vmatmul.f32.gmra.mxu0 %v1012
    %v1014 = vpop.f32.mrf.mxu0
    %v1015 = vadd.f32 %v966, %v1014
    %v1016 = vand.u32 %v937, 4294901760
    %1017 = vmatmul.f32.gmra.mxu0 %v1016
    %v1018 = vpop.f32.mrf.mxu0
    %v1019 = vadd.f32 %v974, %v1018
    %1020 = vdwg.mxu0
    %1021 = vmatpush.msra.mxu0 0.0
    %1022 = vmatpush.msra.mxu0 0.0
    %1023 = vmatpush.msra.mxu0 0.0
    %1024 = vmatpush.msra.mxu0 0.0
    %1025 = vmatpush.msra.mxu0 0.0
    %1026 = vmatpush.msra.mxu0 0.0
    %1027 = vmatpush.msra.mxu0 0.0
    %1028 = vmatpush.msra.mxu0 0.0
    %1029 = vmatpush.msra.mxu0 0.0
    %1030 = vmatpush.msra.mxu0 0.0
    %1031 = vmatpush.msra.mxu0 0.0
    %1032 = vmatpush.msra.mxu0 0.0
    %v1033 = vand.u32 %v93, 4294901760
    %v1034 = vsub.f32 %v93, %v1033
    %1035 = vmatpush.msra.mxu0 %v1034
    %v1036 = vand.u32 %v92, 4294901760
    %v1037 = vsub.f32 %v92, %v1036
    %1038 = vmatpush.msra.mxu0 %v1037
    %v1039 = vand.u32 %v91, 4294901760
    %v1040 = vsub.f32 %v91, %v1039
    %1041 = vmatpush.msra.mxu0 %v1040
    %v1042 = vand.u32 %v90, 4294901760
    %v1043 = vsub.f32 %v90, %v1042
    %1044 = vmatpush.msra.mxu0 %v1043
    %v1045 = vand.u32 %v934, 4294901760
    %v1046 = vsub.f32 %v934, %v1045
    %1047 = vmatmul.f32.gmra.mxu0 %v1046
    %v1048 = vpop.f32.mrf.mxu0
    %v1049 = vadd.f32 %v1015, %v1048
    %v1050 = vand.u32 %v937, 4294901760
    %v1051 = vsub.f32 %v937, %v1050
    %1052 = vmatmul.f32.gmra.mxu0 %v1051
    %v1053 = vpop.f32.mrf.mxu0
    %v1054 = vadd.f32 %v1019, %v1053
    %1055 = vdwg.mxu0
    %1056 = vmatpush.msra.mxu0 0.0
    %1057 = vmatpush.msra.mxu0 0.0
    %1058 = vmatpush.msra.mxu0 0.0
    %1059 = vmatpush.msra.mxu0 0.0
    %1060 = vmatpush.msra.mxu0 0.0
    %1061 = vmatpush.msra.mxu0 0.0
    %1062 = vmatpush.msra.mxu0 0.0
    %1063 = vmatpush.msra.mxu0 0.0
    %1064 = vmatpush.msra.mxu0 0.0
    %1065 = vmatpush.msra.mxu0 0.0
    %1066 = vmatpush.msra.mxu0 0.0
    %1067 = vmatpush.msra.mxu0 0.0
    %v1068 = vand.u32 %v93, 4294901760
    %1069 = vmatpush.msra.mxu0 %v1068
    %v1070 = vand.u32 %v92, 4294901760
    %1071 = vmatpush.msra.mxu0 %v1070
    %v1072 = vand.u32 %v91, 4294901760
    %1073 = vmatpush.msra.mxu0 %v1072
    %v1074 = vand.u32 %v90, 4294901760
    %1075 = vmatpush.msra.mxu0 %v1074
    %v1076 = vand.u32 %v934, 4294901760
    %v1077 = vsub.f32 %v934, %v1076
    %v1078 = vand.u32 %v1077, 4294901760
    %1079 = vmatmul.f32.gmra.mxu0 %v1078
    %v1080 = vpop.f32.mrf.mxu0
    %v1081 = vadd.f32 %v1049, %v1080
    %v1082 = vand.u32 %v937, 4294901760
    %v1083 = vsub.f32 %v937, %v1082
    %v1084 = vand.u32 %v1083, 4294901760
    %1085 = vmatmul.f32.gmra.mxu0 %v1084
    %v1086 = vpop.f32.mrf.mxu0
    %v1087 = vadd.f32 %v1054, %v1086
    %1088 = vdwg.mxu0
    %1089 = vmatpush.msra.mxu0 0.0
    %1090 = vmatpush.msra.mxu0 0.0
    %1091 = vmatpush.msra.mxu0 0.0
    %1092 = vmatpush.msra.mxu0 0.0
    %1093 = vmatpush.msra.mxu0 0.0
    %1094 = vmatpush.msra.mxu0 0.0
    %1095 = vmatpush.msra.mxu0 0.0
    %1096 = vmatpush.msra.mxu0 0.0
    %1097 = vmatpush.msra.mxu0 0.0
    %1098 = vmatpush.msra.mxu0 0.0
    %1099 = vmatpush.msra.mxu0 0.0
    %1100 = vmatpush.msra.mxu0 0.0
    %v1101 = vand.u32 %v93, 4294901760
    %v1102 = vsub.f32 %v93, %v1101
    %v1103 = vand.u32 %v1102, 4294901760
    %1104 = vmatpush.msra.mxu0 %v1103
    %v1105 = vand.u32 %v92, 4294901760
    %v1106 = vsub.f32 %v92, %v1105
    %v1107 = vand.u32 %v1106, 4294901760
    %1108 = vmatpush.msra.mxu0 %v1107
    %v1109 = vand.u32 %v91, 4294901760
    %v1110 = vsub.f32 %v91, %v1109
    %v1111 = vand.u32 %v1110, 4294901760
    %1112 = vmatpush.msra.mxu0 %v1111
    %v1113 = vand.u32 %v90, 4294901760
    %v1114 = vsub.f32 %v90, %v1113
    %v1115 = vand.u32 %v1114, 4294901760
    %1116 = vmatpush.msra.mxu0 %v1115
    %v1117 = vand.u32 %v934, 4294901760
    %1118 = vmatmul.f32.gmra.mxu0 %v1117
    %v1119 = vpop.f32.mrf.mxu0
    %v1120 = vadd.f32 %v1081, %v1119
    %v1121 = vand.u32 %v937, 4294901760
    %1122 = vmatmul.f32.gmra.mxu0 %v1121
    %v1123 = vpop.f32.mrf.mxu0
    %v1124 = vadd.f32 %v1087, %v1123
    %1125 = vdwg.mxu0
    %1126 = vmatpush.msra.mxu0 0.0
    %1127 = vmatpush.msra.mxu0 0.0
    %1128 = vmatpush.msra.mxu0 0.0
    %1129 = vmatpush.msra.mxu0 0.0
    %1130 = vmatpush.msra.mxu0 0.0
    %1131 = vmatpush.msra.mxu0 0.0
    %1132 = vmatpush.msra.mxu0 0.0
    %1133 = vmatpush.msra.mxu0 0.0
    %1134 = vmatpush.msra.mxu0 0.0
    %1135 = vmatpush.msra.mxu0 0.0
    %1136 = vmatpush.msra.mxu0 0.0
    %1137 = vmatpush.msra.mxu0 0.0
    %v1138 = vand.u32 %v93, 4294901760
    %1139 = vmatpush.msra.mxu0 %v1138
    %v1140 = vand.u32 %v92, 4294901760
    %1141 = vmatpush.msra.mxu0 %v1140
    %v1142 = vand.u32 %v91, 4294901760
    %1143 = vmatpush.msra.mxu0 %v1142
    %v1144 = vand.u32 %v90, 4294901760
    %1145 = vmatpush.msra.mxu0 %v1144
    %v1146 = vand.u32 %v934, 4294901760
    %1147 = vmatmul.f32.gmra.mxu0 %v1146
    %v1148 = vpop.f32.mrf.mxu0
    %v1149 = vadd.f32 %v1120, %v1148
    %v1150 = vand.u32 %v937, 4294901760
    %1151 = vmatmul.f32.gmra.mxu0 %v1150
    %v1152 = vpop.f32.mrf.mxu0
    %v1153 = vadd.f32 %v1124, %v1152
    %1154 = vdwg.mxu0
    %v1155 = vrcp.pop %v1149
    %v1156 = vmul.f32 %v1149, %v1155
    %v1157 = vsub.f32 1.0, %v1156
    %v1158 = vmul.f32 %v1155, %v1157
    %v1159 = vadd.f32 %v1155, %v1158
    %vm1160 = vweird.f32 %v1149
    %vm1161 = vweird.f32 %v1155
    %vm1162 = vmor %vm1160, %vm1161
    %v1163 = vsel %vm1162, %v1155, %v1159
    %v1164 = vand.u32 2147483647, %v1149
    %vm1165 = vcmp.eq.f32.partialorder %v1164, 8.507059e+37
    %v1166 = vand.u32 %v1149, 2147483648
    %v1167 = vor.u32 1.1754944e-38, %v1166
    %v1168 = vsel %vm1165, %v1167, %v1163
    %v1169 = vrcp.pop %v1153
    %v1170 = vmul.f32 %v1153, %v1169
    %v1171 = vsub.f32 1.0, %v1170
    %v1172 = vmul.f32 %v1169, %v1171
    %v1173 = vadd.f32 %v1169, %v1172
    %vm1174 = vweird.f32 %v1153
    %vm1175 = vweird.f32 %v1169
    %vm1176 = vmor %vm1174, %vm1175
    %v1177 = vsel %vm1176, %v1169, %v1173
    %v1178 = vand.u32 2147483647, %v1153
    %vm1179 = vcmp.eq.f32.partialorder %v1178, 8.507059e+37
    %v1180 = vand.u32 %v1153, 2147483648
    %v1181 = vor.u32 1.1754944e-38, %v1180
    %v1182 = vsel %vm1179, %v1181, %v1177
    %1185 = vrot.lane.b32.xlu0 %v1168, 32
    %v1186 = vpop.permute.xlu0 %1185
    %1187 = vrot.lane.b32.xlu0 %v1182, 32
    %v1188 = vpop.permute.xlu0 %1187
    %v1191 = vmul.f32 %v702, %v1186
    %v1192 = vmul.f32 %v703, %v1188
    %1195 = vrot.lane.b32.xlu0 %v1191, 96
    %v1196 = vpop.permute.xlu0 %1195
    %1197 = vrot.lane.b32.xlu0 %v1192, 96
    %v1198 = vpop.permute.xlu0 %1197
    %vm1199 = vcmask 31744
    %v1200 = vsel %vm1199, %v1196, 0
    %v1202 = vsel %vm1199, %v1198, 0
    %vm1204 = vcmask 1043456
    %v1206 = vsel %vm1204, %v95, 0
    %1208 = vmatpush.msra.mxu0 0.0
    %1209 = vmatpush.msra.mxu0 0.0
    %1210 = vmatpush.msra.mxu0 0.0
    %1211 = vmatpush.msra.mxu0 0.0
    %1212 = vmatpush.msra.mxu0 0.0
    %1213 = vmatpush.msra.mxu0 0.0
    %1214 = vmatpush.msra.mxu0 0.0
    %1215 = vmatpush.msra.mxu0 0.0
    %1216 = vmatpush.msra.mxu0 0.0
    %1217 = vmatpush.msra.mxu0 0.0
    %1218 = vmatpush.msra.mxu0 0.0
    %1219 = vmatpush.msra.mxu0 0.0
    %1220 = vmatpush.msra.mxu0 0.0
    %1221 = vmatpush.msra.mxu0 0.0
    %1222 = vmatpush.msra.mxu0 0.0
    %v1223 = vand.u32 %v1206, 4294901760
    %1224 = vmatpush.msra.mxu0 %v1223
    %v1225 = vand.u32 %v1200, 4294901760
    %v1226 = vsub.f32 %v1200, %v1225
    %v1227 = vand.u32 %v1226, 4294901760
    %v1228 = vsub.f32 %v1226, %v1227
    %v1229 = vand.u32 %v1228, 4294901760
    %1230 = vmatmul.f32.gmra.mxu0 %v1229
    %v1231 = vpop.f32.mrf.mxu0
    %v1232 = vadd.f32 0.0, %v1231
    %v1233 = vand.u32 %v1202, 4294901760
    %v1234 = vsub.f32 %v1202, %v1233
    %v1235 = vand.u32 %v1234, 4294901760
    %v1236 = vsub.f32 %v1234, %v1235
    %v1237 = vand.u32 %v1236, 4294901760
    %1238 = vmatmul.f32.gmra.mxu0 %v1237
    %v1239 = vpop.f32.mrf.mxu0
    %v1240 = vadd.f32 0.0, %v1239
    %1241 = vdwg.mxu0
    %1242 = vmatpush.msra.mxu0 0.0
    %1243 = vmatpush.msra.mxu0 0.0
    %1244 = vmatpush.msra.mxu0 0.0
    %1245 = vmatpush.msra.mxu0 0.0
    %1246 = vmatpush.msra.mxu0 0.0
    %1247 = vmatpush.msra.mxu0 0.0
    %1248 = vmatpush.msra.mxu0 0.0
    %1249 = vmatpush.msra.mxu0 0.0
    %1250 = vmatpush.msra.mxu0 0.0
    %1251 = vmatpush.msra.mxu0 0.0
    %1252 = vmatpush.msra.mxu0 0.0
    %1253 = vmatpush.msra.mxu0 0.0
    %1254 = vmatpush.msra.mxu0 0.0
    %1255 = vmatpush.msra.mxu0 0.0
    %1256 = vmatpush.msra.mxu0 0.0
    %v1257 = vand.u32 %v1206, 4294901760
    %v1258 = vsub.f32 %v1206, %v1257
    %v1259 = vand.u32 %v1258, 4294901760
    %v1260 = vsub.f32 %v1258, %v1259
    %v1261 = vand.u32 %v1260, 4294901760
    %1262 = vmatpush.msra.mxu0 %v1261
    %v1263 = vand.u32 %v1200, 4294901760
    %1264 = vmatmul.f32.gmra.mxu0 %v1263
    %v1265 = vpop.f32.mrf.mxu0
    %v1266 = vadd.f32 %v1232, %v1265
    %v1267 = vand.u32 %v1202, 4294901760
    %1268 = vmatmul.f32.gmra.mxu0 %v1267
    %v1269 = vpop.f32.mrf.mxu0
    %v1270 = vadd.f32 %v1240, %v1269
    %1271 = vdwg.mxu0
    %1272 = vmatpush.msra.mxu0 0.0
    %1273 = vmatpush.msra.mxu0 0.0
    %1274 = vmatpush.msra.mxu0 0.0
    %1275 = vmatpush.msra.mxu0 0.0
    %1276 = vmatpush.msra.mxu0 0.0
    %1277 = vmatpush.msra.mxu0 0.0
    %1278 = vmatpush.msra.mxu0 0.0
    %1279 = vmatpush.msra.mxu0 0.0
    %1280 = vmatpush.msra.mxu0 0.0
    %1281 = vmatpush.msra.mxu0 0.0
    %1282 = vmatpush.msra.mxu0 0.0
    %1283 = vmatpush.msra.mxu0 0.0
    %1284 = vmatpush.msra.mxu0 0.0
    %1285 = vmatpush.msra.mxu0 0.0
    %1286 = vmatpush.msra.mxu0 0.0
    %v1287 = vand.u32 %v1206, 4294901760
    %v1288 = vsub.f32 %v1206, %v1287
    %1289 = vmatpush.msra.mxu0 %v1288
    %v1290 = vand.u32 %v1200, 4294901760
    %v1291 = vsub.f32 %v1200, %v1290
    %1292 = vmatmul.f32.gmra.mxu0 %v1291
    %v1293 = vpop.f32.mrf.mxu0
    %v1294 = vadd.f32 %v1266, %v1293
    %v1295 = vand.u32 %v1202, 4294901760
    %v1296 = vsub.f32 %v1202, %v1295
    %1297 = vmatmul.f32.gmra.mxu0 %v1296
    %v1298 = vpop.f32.mrf.mxu0
    %v1299 = vadd.f32 %v1270, %v1298
    %1300 = vdwg.mxu0
    %1301 = vmatpush.msra.mxu0 0.0
    %1302 = vmatpush.msra.mxu0 0.0
    %1303 = vmatpush.msra.mxu0 0.0
    %1304 = vmatpush.msra.mxu0 0.0
    %1305 = vmatpush.msra.mxu0 0.0
    %1306 = vmatpush.msra.mxu0 0.0
    %1307 = vmatpush.msra.mxu0 0.0
    %1308 = vmatpush.msra.mxu0 0.0
    %1309 = vmatpush.msra.mxu0 0.0
    %1310 = vmatpush.msra.mxu0 0.0
    %1311 = vmatpush.msra.mxu0 0.0
    %1312 = vmatpush.msra.mxu0 0.0
    %1313 = vmatpush.msra.mxu0 0.0
    %1314 = vmatpush.msra.mxu0 0.0
    %1315 = vmatpush.msra.mxu0 0.0
    %v1316 = vand.u32 %v1206, 4294901760
    %1317 = vmatpush.msra.mxu0 %v1316
    %v1318 = vand.u32 %v1200, 4294901760
    %v1319 = vsub.f32 %v1200, %v1318
    %v1320 = vand.u32 %v1319, 4294901760
    %1321 = vmatmul.f32.gmra.mxu0 %v1320
    %v1322 = vpop.f32.mrf.mxu0
    %v1323 = vadd.f32 %v1294, %v1322
    %v1324 = vand.u32 %v1202, 4294901760
    %v1325 = vsub.f32 %v1202, %v1324
    %v1326 = vand.u32 %v1325, 4294901760
    %1327 = vmatmul.f32.gmra.mxu0 %v1326
    %v1328 = vpop.f32.mrf.mxu0
    %v1329 = vadd.f32 %v1299, %v1328
    %1330 = vdwg.mxu0
    %1331 = vmatpush.msra.mxu0 0.0
    %1332 = vmatpush.msra.mxu0 0.0
    %1333 = vmatpush.msra.mxu0 0.0
    %1334 = vmatpush.msra.mxu0 0.0
    %1335 = vmatpush.msra.mxu0 0.0
    %1336 = vmatpush.msra.mxu0 0.0
    %1337 = vmatpush.msra.mxu0 0.0
    %1338 = vmatpush.msra.mxu0 0.0
    %1339 = vmatpush.msra.mxu0 0.0
    %1340 = vmatpush.msra.mxu0 0.0
    %1341 = vmatpush.msra.mxu0 0.0
    %1342 = vmatpush.msra.mxu0 0.0
    %1343 = vmatpush.msra.mxu0 0.0
    %1344 = vmatpush.msra.mxu0 0.0
    %1345 = vmatpush.msra.mxu0 0.0
    %v1346 = vand.u32 %v1206, 4294901760
    %v1347 = vsub.f32 %v1206, %v1346
    %v1348 = vand.u32 %v1347, 4294901760
    %1349 = vmatpush.msra.mxu0 %v1348
    %v1350 = vand.u32 %v1200, 4294901760
    %1351 = vmatmul.f32.gmra.mxu0 %v1350
    %v1352 = vpop.f32.mrf.mxu0
    %v1353 = vadd.f32 %v1323, %v1352
    %v1354 = vand.u32 %v1202, 4294901760
    %1355 = vmatmul.f32.gmra.mxu0 %v1354
    %v1356 = vpop.f32.mrf.mxu0
    %v1357 = vadd.f32 %v1329, %v1356
    %1358 = vdwg.mxu0
    %1359 = vmatpush.msra.mxu0 0.0
    %1360 = vmatpush.msra.mxu0 0.0
    %1361 = vmatpush.msra.mxu0 0.0
    %1362 = vmatpush.msra.mxu0 0.0
    %1363 = vmatpush.msra.mxu0 0.0
    %1364 = vmatpush.msra.mxu0 0.0
    %1365 = vmatpush.msra.mxu0 0.0
    %1366 = vmatpush.msra.mxu0 0.0
    %1367 = vmatpush.msra.mxu0 0.0
    %1368 = vmatpush.msra.mxu0 0.0
    %1369 = vmatpush.msra.mxu0 0.0
    %1370 = vmatpush.msra.mxu0 0.0
    %1371 = vmatpush.msra.mxu0 0.0
    %1372 = vmatpush.msra.mxu0 0.0
    %1373 = vmatpush.msra.mxu0 0.0
    %v1374 = vand.u32 %v1206, 4294901760
    %1375 = vmatpush.msra.mxu0 %v1374
    %v1376 = vand.u32 %v1200, 4294901760
    %1377 = vmatmul.f32.gmra.mxu0 %v1376
    %v1378 = vpop.f32.mrf.mxu0
    %v1379 = vadd.f32 %v1353, %v1378
    %v1380 = vand.u32 %v1202, 4294901760
    %1381 = vmatmul.f32.gmra.mxu0 %v1380
    %v1382 = vpop.f32.mrf.mxu0
    %v1383 = vadd.f32 %v1357, %v1382
    %1384 = vdwg.mxu0
    %v1385 = vmul.f32 %v930, %v1379
    %v1386 = vmul.f32 %v932, %v1383
    %1387 = vmatpush.msra.mxu0 0.0
    %1388 = vmatpush.msra.mxu0 0.0
    %1389 = vmatpush.msra.mxu0 0.0
    %1390 = vmatpush.msra.mxu0 0.0
    %1391 = vmatpush.msra.mxu0 0.0
    %1392 = vmatpush.msra.mxu0 0.0
    %1393 = vmatpush.msra.mxu0 0.0
    %1394 = vmatpush.msra.mxu0 0.0
    %v1395 = vand.u32 %v126, 4294901760
    %1396 = vmatpush.msra.mxu0 %v1395
    %v1397 = vand.u32 %v122, 4294901760
    %1398 = vmatpush.msra.mxu0 %v1397
    %v1399 = vand.u32 %v118, 4294901760
    %1400 = vmatpush.msra.mxu0 %v1399
    %v1401 = vand.u32 %v114, 4294901760
    %1402 = vmatpush.msra.mxu0 %v1401
    %v1403 = vand.u32 %v110, 4294901760
    %1404 = vmatpush.msra.mxu0 %v1403
    %v1405 = vand.u32 %v106, 4294901760
    %1406 = vmatpush.msra.mxu0 %v1405
    %v1407 = vand.u32 %v102, 4294901760
    %1408 = vmatpush.msra.mxu0 %v1407
    %v1409 = vand.u32 %v98, 4294901760
    %1410 = vmatpush.msra.mxu0 %v1409
    %v1411 = vand.u32 %v381, 4294901760
    %v1412 = vsub.f32 %v381, %v1411
    %v1413 = vand.u32 %v1412, 4294901760
    %v1414 = vsub.f32 %v1412, %v1413
    %v1415 = vand.u32 %v1414, 4294901760
    %1416 = vmatmul.f32.gmra.mxu0 %v1415
    %v1417 = vpop.f32.mrf.mxu0
    %v1418 = vadd.f32 0.0, %v1417
    %v1419 = vand.u32 %v384, 4294901760
    %v1420 = vsub.f32 %v384, %v1419
    %v1421 = vand.u32 %v1420, 4294901760
    %v1422 = vsub.f32 %v1420, %v1421
    %v1423 = vand.u32 %v1422, 4294901760
    %1424 = vmatmul.f32.gmra.mxu0 %v1423
    %v1425 = vpop.f32.mrf.mxu0
    %v1426 = vadd.f32 0.0, %v1425
    %1427 = vdwg.mxu0
    %1428 = vmatpush.msra.mxu0 0.0
    %1429 = vmatpush.msra.mxu0 0.0
    %1430 = vmatpush.msra.mxu0 0.0
    %1431 = vmatpush.msra.mxu0 0.0
    %1432 = vmatpush.msra.mxu0 0.0
    %1433 = vmatpush.msra.mxu0 0.0
    %1434 = vmatpush.msra.mxu0 0.0
    %1435 = vmatpush.msra.mxu0 0.0
    %v1436 = vand.u32 %v126, 4294901760
    %v1437 = vsub.f32 %v126, %v1436
    %v1438 = vand.u32 %v1437, 4294901760
    %v1439 = vsub.f32 %v1437, %v1438
    %v1440 = vand.u32 %v1439, 4294901760
    %1441 = vmatpush.msra.mxu0 %v1440
    %v1442 = vand.u32 %v122, 4294901760
    %v1443 = vsub.f32 %v122, %v1442
    %v1444 = vand.u32 %v1443, 4294901760
    %v1445 = vsub.f32 %v1443, %v1444
    %v1446 = vand.u32 %v1445, 4294901760
    %1447 = vmatpush.msra.mxu0 %v1446
    %v1448 = vand.u32 %v118, 4294901760
    %v1449 = vsub.f32 %v118, %v1448
    %v1450 = vand.u32 %v1449, 4294901760
    %v1451 = vsub.f32 %v1449, %v1450
    %v1452 = vand.u32 %v1451, 4294901760
    %1453 = vmatpush.msra.mxu0 %v1452
    %v1454 = vand.u32 %v114, 4294901760
    %v1455 = vsub.f32 %v114, %v1454
    %v1456 = vand.u32 %v1455, 4294901760
    %v1457 = vsub.f32 %v1455, %v1456
    %v1458 = vand.u32 %v1457, 4294901760
    %1459 = vmatpush.msra.mxu0 %v1458
    %v1460 = vand.u32 %v110, 4294901760
    %v1461 = vsub.f32 %v110, %v1460
    %v1462 = vand.u32 %v1461, 4294901760
    %v1463 = vsub.f32 %v1461, %v1462
    %v1464 = vand.u32 %v1463, 4294901760
    %1465 = vmatpush.msra.mxu0 %v1464
    %v1466 = vand.u32 %v106, 4294901760
    %v1467 = vsub.f32 %v106, %v1466
    %v1468 = vand.u32 %v1467, 4294901760
    %v1469 = vsub.f32 %v1467, %v1468
    %v1470 = vand.u32 %v1469, 4294901760
    %1471 = vmatpush.msra.mxu0 %v1470
    %v1472 = vand.u32 %v102, 4294901760
    %v1473 = vsub.f32 %v102, %v1472
    %v1474 = vand.u32 %v1473, 4294901760
    %v1475 = vsub.f32 %v1473, %v1474
    %v1476 = vand.u32 %v1475, 4294901760
    %1477 = vmatpush.msra.mxu0 %v1476
    %v1478 = vand.u32 %v98, 4294901760
    %v1479 = vsub.f32 %v98, %v1478
    %v1480 = vand.u32 %v1479, 4294901760
    %v1481 = vsub.f32 %v1479, %v1480
    %v1482 = vand.u32 %v1481, 4294901760
    %1483 = vmatpush.msra.mxu0 %v1482
    %v1484 = vand.u32 %v381, 4294901760
    %1485 = vmatmul.f32.gmra.mxu0 %v1484
    %v1486 = vpop.f32.mrf.mxu0
    %v1487 = vadd.f32 %v1418, %v1486
    %v1488 = vand.u32 %v384, 4294901760
    %1489 = vmatmul.f32.gmra.mxu0 %v1488
    %v1490 = vpop.f32.mrf.mxu0
    %v1491 = vadd.f32 %v1426, %v1490
    %1492 = vdwg.mxu0
    %1493 = vmatpush.msra.mxu0 0.0
    %1494 = vmatpush.msra.mxu0 0.0
    %1495 = vmatpush.msra.mxu0 0.0
    %1496 = vmatpush.msra.mxu0 0.0
    %1497 = vmatpush.msra.mxu0 0.0
    %1498 = vmatpush.msra.mxu0 0.0
    %1499 = vmatpush.msra.mxu0 0.0
    %1500 = vmatpush.msra.mxu0 0.0
    %v1501 = vand.u32 %v126, 4294901760
    %v1502 = vsub.f32 %v126, %v1501
    %1503 = vmatpush.msra.mxu0 %v1502
    %v1504 = vand.u32 %v122, 4294901760
    %v1505 = vsub.f32 %v122, %v1504
    %1506 = vmatpush.msra.mxu0 %v1505
    %v1507 = vand.u32 %v118, 4294901760
    %v1508 = vsub.f32 %v118, %v1507
    %1509 = vmatpush.msra.mxu0 %v1508
    %v1510 = vand.u32 %v114, 4294901760
    %v1511 = vsub.f32 %v114, %v1510
    %1512 = vmatpush.msra.mxu0 %v1511
    %v1513 = vand.u32 %v110, 4294901760
    %v1514 = vsub.f32 %v110, %v1513
    %1515 = vmatpush.msra.mxu0 %v1514
    %v1516 = vand.u32 %v106, 4294901760
    %v1517 = vsub.f32 %v106, %v1516
    %1518 = vmatpush.msra.mxu0 %v1517
    %v1519 = vand.u32 %v102, 4294901760
    %v1520 = vsub.f32 %v102, %v1519
    %1521 = vmatpush.msra.mxu0 %v1520
    %v1522 = vand.u32 %v98, 4294901760
    %v1523 = vsub.f32 %v98, %v1522
    %1524 = vmatpush.msra.mxu0 %v1523
    %v1525 = vand.u32 %v381, 4294901760
    %v1526 = vsub.f32 %v381, %v1525
    %1527 = vmatmul.f32.gmra.mxu0 %v1526
    %v1528 = vpop.f32.mrf.mxu0
    %v1529 = vadd.f32 %v1487, %v1528
    %v1530 = vand.u32 %v384, 4294901760
    %v1531 = vsub.f32 %v384, %v1530
    %1532 = vmatmul.f32.gmra.mxu0 %v1531
    %v1533 = vpop.f32.mrf.mxu0
    %v1534 = vadd.f32 %v1491, %v1533
    %1535 = vdwg.mxu0
    %1536 = vmatpush.msra.mxu0 0.0
    %1537 = vmatpush.msra.mxu0 0.0
    %1538 = vmatpush.msra.mxu0 0.0
    %1539 = vmatpush.msra.mxu0 0.0
    %1540 = vmatpush.msra.mxu0 0.0
    %1541 = vmatpush.msra.mxu0 0.0
    %1542 = vmatpush.msra.mxu0 0.0
    %1543 = vmatpush.msra.mxu0 0.0
    %v1544 = vand.u32 %v126, 4294901760
    %1545 = vmatpush.msra.mxu0 %v1544
    %v1546 = vand.u32 %v122, 4294901760
    %1547 = vmatpush.msra.mxu0 %v1546
    %v1548 = vand.u32 %v118, 4294901760
    %1549 = vmatpush.msra.mxu0 %v1548
    %v1550 = vand.u32 %v114, 4294901760
    %1551 = vmatpush.msra.mxu0 %v1550
    %v1552 = vand.u32 %v110, 4294901760
    %1553 = vmatpush.msra.mxu0 %v1552
    %v1554 = vand.u32 %v106, 4294901760
    %1555 = vmatpush.msra.mxu0 %v1554
    %v1556 = vand.u32 %v102, 4294901760
    %1557 = vmatpush.msra.mxu0 %v1556
    %v1558 = vand.u32 %v98, 4294901760
    %1559 = vmatpush.msra.mxu0 %v1558
    %v1560 = vand.u32 %v381, 4294901760
    %v1561 = vsub.f32 %v381, %v1560
    %v1562 = vand.u32 %v1561, 4294901760
    %1563 = vmatmul.f32.gmra.mxu0 %v1562
    %v1564 = vpop.f32.mrf.mxu0
    %v1565 = vadd.f32 %v1529, %v1564
    %v1566 = vand.u32 %v384, 4294901760
    %v1567 = vsub.f32 %v384, %v1566
    %v1568 = vand.u32 %v1567, 4294901760
    %1569 = vmatmul.f32.gmra.mxu0 %v1568
    %v1570 = vpop.f32.mrf.mxu0
    %v1571 = vadd.f32 %v1534, %v1570
    %1572 = vdwg.mxu0
    %1573 = vmatpush.msra.mxu0 0.0
    %1574 = vmatpush.msra.mxu0 0.0
    %1575 = vmatpush.msra.mxu0 0.0
    %1576 = vmatpush.msra.mxu0 0.0
    %1577 = vmatpush.msra.mxu0 0.0
    %1578 = vmatpush.msra.mxu0 0.0
    %1579 = vmatpush.msra.mxu0 0.0
    %1580 = vmatpush.msra.mxu0 0.0
    %v1581 = vand.u32 %v126, 4294901760
    %v1582 = vsub.f32 %v126, %v1581
    %v1583 = vand.u32 %v1582, 4294901760
    %1584 = vmatpush.msra.mxu0 %v1583
    %v1585 = vand.u32 %v122, 4294901760
    %v1586 = vsub.f32 %v122, %v1585
    %v1587 = vand.u32 %v1586, 4294901760
    %1588 = vmatpush.msra.mxu0 %v1587
    %v1589 = vand.u32 %v118, 4294901760
    %v1590 = vsub.f32 %v118, %v1589
    %v1591 = vand.u32 %v1590, 4294901760
    %1592 = vmatpush.msra.mxu0 %v1591
    %v1593 = vand.u32 %v114, 4294901760
    %v1594 = vsub.f32 %v114, %v1593
    %v1595 = vand.u32 %v1594, 4294901760
    %1596 = vmatpush.msra.mxu0 %v1595
    %v1597 = vand.u32 %v110, 4294901760
    %v1598 = vsub.f32 %v110, %v1597
    %v1599 = vand.u32 %v1598, 4294901760
    %1600 = vmatpush.msra.mxu0 %v1599
    %v1601 = vand.u32 %v106, 4294901760
    %v1602 = vsub.f32 %v106, %v1601
    %v1603 = vand.u32 %v1602, 4294901760
    %1604 = vmatpush.msra.mxu0 %v1603
    %v1605 = vand.u32 %v102, 4294901760
    %v1606 = vsub.f32 %v102, %v1605
    %v1607 = vand.u32 %v1606, 4294901760
    %1608 = vmatpush.msra.mxu0 %v1607
    %v1609 = vand.u32 %v98, 4294901760
    %v1610 = vsub.f32 %v98, %v1609
    %v1611 = vand.u32 %v1610, 4294901760
    %1612 = vmatpush.msra.mxu0 %v1611
    %v1613 = vand.u32 %v381, 4294901760
    %1614 = vmatmul.f32.gmra.mxu0 %v1613
    %v1615 = vpop.f32.mrf.mxu0
    %v1616 = vadd.f32 %v1565, %v1615
    %v1617 = vand.u32 %v384, 4294901760
    %1618 = vmatmul.f32.gmra.mxu0 %v1617
    %v1619 = vpop.f32.mrf.mxu0
    %v1620 = vadd.f32 %v1571, %v1619
    %1621 = vdwg.mxu0
    %1622 = vmatpush.msra.mxu0 0.0
    %1623 = vmatpush.msra.mxu0 0.0
    %1624 = vmatpush.msra.mxu0 0.0
    %1625 = vmatpush.msra.mxu0 0.0
    %1626 = vmatpush.msra.mxu0 0.0
    %1627 = vmatpush.msra.mxu0 0.0
    %1628 = vmatpush.msra.mxu0 0.0
    %1629 = vmatpush.msra.mxu0 0.0
    %v1630 = vand.u32 %v126, 4294901760
    %1631 = vmatpush.msra.mxu0 %v1630
    %v1632 = vand.u32 %v122, 4294901760
    %1633 = vmatpush.msra.mxu0 %v1632
    %v1634 = vand.u32 %v118, 4294901760
    %1635 = vmatpush.msra.mxu0 %v1634
    %v1636 = vand.u32 %v114, 4294901760
    %1637 = vmatpush.msra.mxu0 %v1636
    %v1638 = vand.u32 %v110, 4294901760
    %1639 = vmatpush.msra.mxu0 %v1638
    %v1640 = vand.u32 %v106, 4294901760
    %1641 = vmatpush.msra.mxu0 %v1640
    %v1642 = vand.u32 %v102, 4294901760
    %1643 = vmatpush.msra.mxu0 %v1642
    %v1644 = vand.u32 %v98, 4294901760
    %1645 = vmatpush.msra.mxu0 %v1644
    %v1646 = vand.u32 %v381, 4294901760
    %1647 = vmatmul.f32.gmra.mxu0 %v1646
    %v1648 = vpop.f32.mrf.mxu0
    %v1649 = vadd.f32 %v1616, %v1648
    %v1650 = vand.u32 %v384, 4294901760
    %1651 = vmatmul.f32.gmra.mxu0 %v1650
    %v1652 = vpop.f32.mrf.mxu0
    %v1653 = vadd.f32 %v1620, %v1652
    %1654 = vdwg.mxu0
    %1655 = vmatpush.msra.mxu0 0.0
    %1656 = vmatpush.msra.mxu0 0.0
    %1657 = vmatpush.msra.mxu0 0.0
    %1658 = vmatpush.msra.mxu0 0.0
    %1659 = vmatpush.msra.mxu0 0.0
    %1660 = vmatpush.msra.mxu0 0.0
    %1661 = vmatpush.msra.mxu0 0.0
    %1662 = vmatpush.msra.mxu0 0.0
    %v1663 = vand.u32 %v127, 4294901760
    %1664 = vmatpush.msra.mxu0 %v1663
    %v1665 = vand.u32 %v123, 4294901760
    %1666 = vmatpush.msra.mxu0 %v1665
    %v1667 = vand.u32 %v119, 4294901760
    %1668 = vmatpush.msra.mxu0 %v1667
    %v1669 = vand.u32 %v115, 4294901760
    %1670 = vmatpush.msra.mxu0 %v1669
    %v1671 = vand.u32 %v111, 4294901760
    %1672 = vmatpush.msra.mxu0 %v1671
    %v1673 = vand.u32 %v107, 4294901760
    %1674 = vmatpush.msra.mxu0 %v1673
    %v1675 = vand.u32 %v103, 4294901760
    %1676 = vmatpush.msra.mxu0 %v1675
    %v1677 = vand.u32 %v99, 4294901760
    %1678 = vmatpush.msra.mxu0 %v1677
    %v1679 = vand.u32 %v381, 4294901760
    %v1680 = vsub.f32 %v381, %v1679
    %v1681 = vand.u32 %v1680, 4294901760
    %v1682 = vsub.f32 %v1680, %v1681
    %v1683 = vand.u32 %v1682, 4294901760
    %1684 = vmatmul.f32.gmra.mxu0 %v1683
    %v1685 = vpop.f32.mrf.mxu0
    %v1686 = vadd.f32 0.0, %v1685
    %v1687 = vand.u32 %v384, 4294901760
    %v1688 = vsub.f32 %v384, %v1687
    %v1689 = vand.u32 %v1688, 4294901760
    %v1690 = vsub.f32 %v1688, %v1689
    %v1691 = vand.u32 %v1690, 4294901760
    %1692 = vmatmul.f32.gmra.mxu0 %v1691
    %v1693 = vpop.f32.mrf.mxu0
    %v1694 = vadd.f32 0.0, %v1693
    %1695 = vdwg.mxu0
    %1696 = vmatpush.msra.mxu0 0.0
    %1697 = vmatpush.msra.mxu0 0.0
    %1698 = vmatpush.msra.mxu0 0.0
    %1699 = vmatpush.msra.mxu0 0.0
    %1700 = vmatpush.msra.mxu0 0.0
    %1701 = vmatpush.msra.mxu0 0.0
    %1702 = vmatpush.msra.mxu0 0.0
    %1703 = vmatpush.msra.mxu0 0.0
    %v1704 = vand.u32 %v127, 4294901760
    %v1705 = vsub.f32 %v127, %v1704
    %v1706 = vand.u32 %v1705, 4294901760
    %v1707 = vsub.f32 %v1705, %v1706
    %v1708 = vand.u32 %v1707, 4294901760
    %1709 = vmatpush.msra.mxu0 %v1708
    %v1710 = vand.u32 %v123, 4294901760
    %v1711 = vsub.f32 %v123, %v1710
    %v1712 = vand.u32 %v1711, 4294901760
    %v1713 = vsub.f32 %v1711, %v1712
    %v1714 = vand.u32 %v1713, 4294901760
    %1715 = vmatpush.msra.mxu0 %v1714
    %v1716 = vand.u32 %v119, 4294901760
    %v1717 = vsub.f32 %v119, %v1716
    %v1718 = vand.u32 %v1717, 4294901760
    %v1719 = vsub.f32 %v1717, %v1718
    %v1720 = vand.u32 %v1719, 4294901760
    %1721 = vmatpush.msra.mxu0 %v1720
    %v1722 = vand.u32 %v115, 4294901760
    %v1723 = vsub.f32 %v115, %v1722
    %v1724 = vand.u32 %v1723, 4294901760
    %v1725 = vsub.f32 %v1723, %v1724
    %v1726 = vand.u32 %v1725, 4294901760
    %1727 = vmatpush.msra.mxu0 %v1726
    %v1728 = vand.u32 %v111, 4294901760
    %v1729 = vsub.f32 %v111, %v1728
    %v1730 = vand.u32 %v1729, 4294901760
    %v1731 = vsub.f32 %v1729, %v1730
    %v1732 = vand.u32 %v1731, 4294901760
    %1733 = vmatpush.msra.mxu0 %v1732
    %v1734 = vand.u32 %v107, 4294901760
    %v1735 = vsub.f32 %v107, %v1734
    %v1736 = vand.u32 %v1735, 4294901760
    %v1737 = vsub.f32 %v1735, %v1736
    %v1738 = vand.u32 %v1737, 4294901760
    %1739 = vmatpush.msra.mxu0 %v1738
    %v1740 = vand.u32 %v103, 4294901760
    %v1741 = vsub.f32 %v103, %v1740
    %v1742 = vand.u32 %v1741, 4294901760
    %v1743 = vsub.f32 %v1741, %v1742
    %v1744 = vand.u32 %v1743, 4294901760
    %1745 = vmatpush.msra.mxu0 %v1744
    %v1746 = vand.u32 %v99, 4294901760
    %v1747 = vsub.f32 %v99, %v1746
    %v1748 = vand.u32 %v1747, 4294901760
    %v1749 = vsub.f32 %v1747, %v1748
    %v1750 = vand.u32 %v1749, 4294901760
    %1751 = vmatpush.msra.mxu0 %v1750
    %v1752 = vand.u32 %v381, 4294901760
    %1753 = vmatmul.f32.gmra.mxu0 %v1752
    %v1754 = vpop.f32.mrf.mxu0
    %v1755 = vadd.f32 %v1686, %v1754
    %v1756 = vand.u32 %v384, 4294901760
    %1757 = vmatmul.f32.gmra.mxu0 %v1756
    %v1758 = vpop.f32.mrf.mxu0
    %v1759 = vadd.f32 %v1694, %v1758
    %1760 = vdwg.mxu0
    %1761 = vmatpush.msra.mxu0 0.0
    %1762 = vmatpush.msra.mxu0 0.0
    %1763 = vmatpush.msra.mxu0 0.0
    %1764 = vmatpush.msra.mxu0 0.0
    %1765 = vmatpush.msra.mxu0 0.0
    %1766 = vmatpush.msra.mxu0 0.0
    %1767 = vmatpush.msra.mxu0 0.0
    %1768 = vmatpush.msra.mxu0 0.0
    %v1769 = vand.u32 %v127, 4294901760
    %v1770 = vsub.f32 %v127, %v1769
    %1771 = vmatpush.msra.mxu0 %v1770
    %v1772 = vand.u32 %v123, 4294901760
    %v1773 = vsub.f32 %v123, %v1772
    %1774 = vmatpush.msra.mxu0 %v1773
    %v1775 = vand.u32 %v119, 4294901760
    %v1776 = vsub.f32 %v119, %v1775
    %1777 = vmatpush.msra.mxu0 %v1776
    %v1778 = vand.u32 %v115, 4294901760
    %v1779 = vsub.f32 %v115, %v1778
    %1780 = vmatpush.msra.mxu0 %v1779
    %v1781 = vand.u32 %v111, 4294901760
    %v1782 = vsub.f32 %v111, %v1781
    %1783 = vmatpush.msra.mxu0 %v1782
    %v1784 = vand.u32 %v107, 4294901760
    %v1785 = vsub.f32 %v107, %v1784
    %1786 = vmatpush.msra.mxu0 %v1785
    %v1787 = vand.u32 %v103, 4294901760
    %v1788 = vsub.f32 %v103, %v1787
    %1789 = vmatpush.msra.mxu0 %v1788
    %v1790 = vand.u32 %v99, 4294901760
    %v1791 = vsub.f32 %v99, %v1790
    %1792 = vmatpush.msra.mxu0 %v1791
    %v1793 = vand.u32 %v381, 4294901760
    %v1794 = vsub.f32 %v381, %v1793
    %1795 = vmatmul.f32.gmra.mxu0 %v1794
    %v1796 = vpop.f32.mrf.mxu0
    %v1797 = vadd.f32 %v1755, %v1796
    %v1798 = vand.u32 %v384, 4294901760
    %v1799 = vsub.f32 %v384, %v1798
    %1800 = vmatmul.f32.gmra.mxu0 %v1799
    %v1801 = vpop.f32.mrf.mxu0
    %v1802 = vadd.f32 %v1759, %v1801
    %1803 = vdwg.mxu0
    %1804 = vmatpush.msra.mxu0 0.0
    %1805 = vmatpush.msra.mxu0 0.0
    %1806 = vmatpush.msra.mxu0 0.0
    %1807 = vmatpush.msra.mxu0 0.0
    %1808 = vmatpush.msra.mxu0 0.0
    %1809 = vmatpush.msra.mxu0 0.0
    %1810 = vmatpush.msra.mxu0 0.0
    %1811 = vmatpush.msra.mxu0 0.0
    %v1812 = vand.u32 %v127, 4294901760
    %1813 = vmatpush.msra.mxu0 %v1812
    %v1814 = vand.u32 %v123, 4294901760
    %1815 = vmatpush.msra.mxu0 %v1814
    %v1816 = vand.u32 %v119, 4294901760
    %1817 = vmatpush.msra.mxu0 %v1816
    %v1818 = vand.u32 %v115, 4294901760
    %1819 = vmatpush.msra.mxu0 %v1818
    %v1820 = vand.u32 %v111, 4294901760
    %1821 = vmatpush.msra.mxu0 %v1820
    %v1822 = vand.u32 %v107, 4294901760
    %1823 = vmatpush.msra.mxu0 %v1822
    %v1824 = vand.u32 %v103, 4294901760
    %1825 = vmatpush.msra.mxu0 %v1824
    %v1826 = vand.u32 %v99, 4294901760
    %1827 = vmatpush.msra.mxu0 %v1826
    %v1828 = vand.u32 %v381, 4294901760
    %v1829 = vsub.f32 %v381, %v1828
    %v1830 = vand.u32 %v1829, 4294901760
    %1831 = vmatmul.f32.gmra.mxu0 %v1830
    %v1832 = vpop.f32.mrf.mxu0
    %v1833 = vadd.f32 %v1797, %v1832
    %v1834 = vand.u32 %v384, 4294901760
    %v1835 = vsub.f32 %v384, %v1834
    %v1836 = vand.u32 %v1835, 4294901760
    %1837 = vmatmul.f32.gmra.mxu0 %v1836
    %v1838 = vpop.f32.mrf.mxu0
    %v1839 = vadd.f32 %v1802, %v1838
    %1840 = vdwg.mxu0
    %1841 = vmatpush.msra.mxu0 0.0
    %1842 = vmatpush.msra.mxu0 0.0
    %1843 = vmatpush.msra.mxu0 0.0
    %1844 = vmatpush.msra.mxu0 0.0
    %1845 = vmatpush.msra.mxu0 0.0
    %1846 = vmatpush.msra.mxu0 0.0
    %1847 = vmatpush.msra.mxu0 0.0
    %1848 = vmatpush.msra.mxu0 0.0
    %v1849 = vand.u32 %v127, 4294901760
    %v1850 = vsub.f32 %v127, %v1849
    %v1851 = vand.u32 %v1850, 4294901760
    %1852 = vmatpush.msra.mxu0 %v1851
    %v1853 = vand.u32 %v123, 4294901760
    %v1854 = vsub.f32 %v123, %v1853
    %v1855 = vand.u32 %v1854, 4294901760
    %1856 = vmatpush.msra.mxu0 %v1855
    %v1857 = vand.u32 %v119, 4294901760
    %v1858 = vsub.f32 %v119, %v1857
    %v1859 = vand.u32 %v1858, 4294901760
    %1860 = vmatpush.msra.mxu0 %v1859
    %v1861 = vand.u32 %v115, 4294901760
    %v1862 = vsub.f32 %v115, %v1861
    %v1863 = vand.u32 %v1862, 4294901760
    %1864 = vmatpush.msra.mxu0 %v1863
    %v1865 = vand.u32 %v111, 4294901760
    %v1866 = vsub.f32 %v111, %v1865
    %v1867 = vand.u32 %v1866, 4294901760
    %1868 = vmatpush.msra.mxu0 %v1867
    %v1869 = vand.u32 %v107, 4294901760
    %v1870 = vsub.f32 %v107, %v1869
    %v1871 = vand.u32 %v1870, 4294901760
    %1872 = vmatpush.msra.mxu0 %v1871
    %v1873 = vand.u32 %v103, 4294901760
    %v1874 = vsub.f32 %v103, %v1873
    %v1875 = vand.u32 %v1874, 4294901760
    %1876 = vmatpush.msra.mxu0 %v1875
    %v1877 = vand.u32 %v99, 4294901760
    %v1878 = vsub.f32 %v99, %v1877
    %v1879 = vand.u32 %v1878, 4294901760
    %1880 = vmatpush.msra.mxu0 %v1879
    %v1881 = vand.u32 %v381, 4294901760
    %1882 = vmatmul.f32.gmra.mxu0 %v1881
    %v1883 = vpop.f32.mrf.mxu0
    %v1884 = vadd.f32 %v1833, %v1883
    %v1885 = vand.u32 %v384, 4294901760
    %1886 = vmatmul.f32.gmra.mxu0 %v1885
    %v1887 = vpop.f32.mrf.mxu0
    %v1888 = vadd.f32 %v1839, %v1887
    %1889 = vdwg.mxu0
    %1890 = vmatpush.msra.mxu0 0.0
    %1891 = vmatpush.msra.mxu0 0.0
    %1892 = vmatpush.msra.mxu0 0.0
    %1893 = vmatpush.msra.mxu0 0.0
    %1894 = vmatpush.msra.mxu0 0.0
    %1895 = vmatpush.msra.mxu0 0.0
    %1896 = vmatpush.msra.mxu0 0.0
    %1897 = vmatpush.msra.mxu0 0.0
    %v1898 = vand.u32 %v127, 4294901760
    %1899 = vmatpush.msra.mxu0 %v1898
    %v1900 = vand.u32 %v123, 4294901760
    %1901 = vmatpush.msra.mxu0 %v1900
    %v1902 = vand.u32 %v119, 4294901760
    %1903 = vmatpush.msra.mxu0 %v1902
    %v1904 = vand.u32 %v115, 4294901760
    %1905 = vmatpush.msra.mxu0 %v1904
    %v1906 = vand.u32 %v111, 4294901760
    %1907 = vmatpush.msra.mxu0 %v1906
    %v1908 = vand.u32 %v107, 4294901760
    %1909 = vmatpush.msra.mxu0 %v1908
    %v1910 = vand.u32 %v103, 4294901760
    %1911 = vmatpush.msra.mxu0 %v1910
    %v1912 = vand.u32 %v99, 4294901760
    %1913 = vmatpush.msra.mxu0 %v1912
    %v1914 = vand.u32 %v381, 4294901760
    %1915 = vmatmul.f32.gmra.mxu0 %v1914
    %v1916 = vpop.f32.mrf.mxu0
    %v1917 = vadd.f32 %v1884, %v1916
    %v1918 = vand.u32 %v384, 4294901760
    %1919 = vmatmul.f32.gmra.mxu0 %v1918
    %v1920 = vpop.f32.mrf.mxu0
    %v1921 = vadd.f32 %v1888, %v1920
    %1922 = vdwg.mxu0
    %1923 = vmatpush.msra.mxu0 0.0
    %1924 = vmatpush.msra.mxu0 0.0
    %1925 = vmatpush.msra.mxu0 0.0
    %1926 = vmatpush.msra.mxu0 0.0
    %1927 = vmatpush.msra.mxu0 0.0
    %1928 = vmatpush.msra.mxu0 0.0
    %1929 = vmatpush.msra.mxu0 0.0
    %1930 = vmatpush.msra.mxu0 0.0
    %v1931 = vand.u32 %v128, 4294901760
    %1932 = vmatpush.msra.mxu0 %v1931
    %v1933 = vand.u32 %v124, 4294901760
    %1934 = vmatpush.msra.mxu0 %v1933
    %v1935 = vand.u32 %v120, 4294901760
    %1936 = vmatpush.msra.mxu0 %v1935
    %v1937 = vand.u32 %v116, 4294901760
    %1938 = vmatpush.msra.mxu0 %v1937
    %v1939 = vand.u32 %v112, 4294901760
    %1940 = vmatpush.msra.mxu0 %v1939
    %v1941 = vand.u32 %v108, 4294901760
    %1942 = vmatpush.msra.mxu0 %v1941
    %v1943 = vand.u32 %v104, 4294901760
    %1944 = vmatpush.msra.mxu0 %v1943
    %v1945 = vand.u32 %v100, 4294901760
    %1946 = vmatpush.msra.mxu0 %v1945
    %v1947 = vand.u32 %v381, 4294901760
    %v1948 = vsub.f32 %v381, %v1947
    %v1949 = vand.u32 %v1948, 4294901760
    %v1950 = vsub.f32 %v1948, %v1949
    %v1951 = vand.u32 %v1950, 4294901760
    %1952 = vmatmul.f32.gmra.mxu0 %v1951
    %v1953 = vpop.f32.mrf.mxu0
    %v1954 = vadd.f32 0.0, %v1953
    %v1955 = vand.u32 %v384, 4294901760
    %v1956 = vsub.f32 %v384, %v1955
    %v1957 = vand.u32 %v1956, 4294901760
    %v1958 = vsub.f32 %v1956, %v1957
    %v1959 = vand.u32 %v1958, 4294901760
    %1960 = vmatmul.f32.gmra.mxu0 %v1959
    %v1961 = vpop.f32.mrf.mxu0
    %v1962 = vadd.f32 0.0, %v1961
    %1963 = vdwg.mxu0
    %1964 = vmatpush.msra.mxu0 0.0
    %1965 = vmatpush.msra.mxu0 0.0
    %1966 = vmatpush.msra.mxu0 0.0
    %1967 = vmatpush.msra.mxu0 0.0
    %1968 = vmatpush.msra.mxu0 0.0
    %1969 = vmatpush.msra.mxu0 0.0
    %1970 = vmatpush.msra.mxu0 0.0
    %1971 = vmatpush.msra.mxu0 0.0
    %v1972 = vand.u32 %v128, 4294901760
    %v1973 = vsub.f32 %v128, %v1972
    %v1974 = vand.u32 %v1973, 4294901760
    %v1975 = vsub.f32 %v1973, %v1974
    %v1976 = vand.u32 %v1975, 4294901760
    %1977 = vmatpush.msra.mxu0 %v1976
    %v1978 = vand.u32 %v124, 4294901760
    %v1979 = vsub.f32 %v124, %v1978
    %v1980 = vand.u32 %v1979, 4294901760
    %v1981 = vsub.f32 %v1979, %v1980
    %v1982 = vand.u32 %v1981, 4294901760
    %1983 = vmatpush.msra.mxu0 %v1982
    %v1984 = vand.u32 %v120, 4294901760
    %v1985 = vsub.f32 %v120, %v1984
    %v1986 = vand.u32 %v1985, 4294901760
    %v1987 = vsub.f32 %v1985, %v1986
    %v1988 = vand.u32 %v1987, 4294901760
    %1989 = vmatpush.msra.mxu0 %v1988
    %v1990 = vand.u32 %v116, 4294901760
    %v1991 = vsub.f32 %v116, %v1990
    %v1992 = vand.u32 %v1991, 4294901760
    %v1993 = vsub.f32 %v1991, %v1992
    %v1994 = vand.u32 %v1993, 4294901760
    %1995 = vmatpush.msra.mxu0 %v1994
    %v1996 = vand.u32 %v112, 4294901760
    %v1997 = vsub.f32 %v112, %v1996
    %v1998 = vand.u32 %v1997, 4294901760
    %v1999 = vsub.f32 %v1997, %v1998
    %v2000 = vand.u32 %v1999, 4294901760
    %2001 = vmatpush.msra.mxu0 %v2000
    %v2002 = vand.u32 %v108, 4294901760
    %v2003 = vsub.f32 %v108, %v2002
    %v2004 = vand.u32 %v2003, 4294901760
    %v2005 = vsub.f32 %v2003, %v2004
    %v2006 = vand.u32 %v2005, 4294901760
    %2007 = vmatpush.msra.mxu0 %v2006
    %v2008 = vand.u32 %v104, 4294901760
    %v2009 = vsub.f32 %v104, %v2008
    %v2010 = vand.u32 %v2009, 4294901760
    %v2011 = vsub.f32 %v2009, %v2010
    %v2012 = vand.u32 %v2011, 4294901760
    %2013 = vmatpush.msra.mxu0 %v2012
    %v2014 = vand.u32 %v100, 4294901760
    %v2015 = vsub.f32 %v100, %v2014
    %v2016 = vand.u32 %v2015, 4294901760
    %v2017 = vsub.f32 %v2015, %v2016
    %v2018 = vand.u32 %v2017, 4294901760
    %2019 = vmatpush.msra.mxu0 %v2018
    %v2020 = vand.u32 %v381, 4294901760
    %2021 = vmatmul.f32.gmra.mxu0 %v2020
    %v2022 = vpop.f32.mrf.mxu0
    %v2023 = vadd.f32 %v1954, %v2022
    %v2024 = vand.u32 %v384, 4294901760
    %2025 = vmatmul.f32.gmra.mxu0 %v2024
    %v2026 = vpop.f32.mrf.mxu0
    %v2027 = vadd.f32 %v1962, %v2026
    %2028 = vdwg.mxu0
    %2029 = vmatpush.msra.mxu0 0.0
    %2030 = vmatpush.msra.mxu0 0.0
    %2031 = vmatpush.msra.mxu0 0.0
    %2032 = vmatpush.msra.mxu0 0.0
    %2033 = vmatpush.msra.mxu0 0.0
    %2034 = vmatpush.msra.mxu0 0.0
    %2035 = vmatpush.msra.mxu0 0.0
    %2036 = vmatpush.msra.mxu0 0.0
    %v2037 = vand.u32 %v128, 4294901760
    %v2038 = vsub.f32 %v128, %v2037
    %2039 = vmatpush.msra.mxu0 %v2038
    %v2040 = vand.u32 %v124, 4294901760
    %v2041 = vsub.f32 %v124, %v2040
    %2042 = vmatpush.msra.mxu0 %v2041
    %v2043 = vand.u32 %v120, 4294901760
    %v2044 = vsub.f32 %v120, %v2043
    %2045 = vmatpush.msra.mxu0 %v2044
    %v2046 = vand.u32 %v116, 4294901760
    %v2047 = vsub.f32 %v116, %v2046
    %2048 = vmatpush.msra.mxu0 %v2047
    %v2049 = vand.u32 %v112, 4294901760
    %v2050 = vsub.f32 %v112, %v2049
    %2051 = vmatpush.msra.mxu0 %v2050
    %v2052 = vand.u32 %v108, 4294901760
    %v2053 = vsub.f32 %v108, %v2052
    %2054 = vmatpush.msra.mxu0 %v2053
    %v2055 = vand.u32 %v104, 4294901760
    %v2056 = vsub.f32 %v104, %v2055
    %2057 = vmatpush.msra.mxu0 %v2056
    %v2058 = vand.u32 %v100, 4294901760
    %v2059 = vsub.f32 %v100, %v2058
    %2060 = vmatpush.msra.mxu0 %v2059
    %v2061 = vand.u32 %v381, 4294901760
    %v2062 = vsub.f32 %v381, %v2061
    %2063 = vmatmul.f32.gmra.mxu0 %v2062
    %v2064 = vpop.f32.mrf.mxu0
    %v2065 = vadd.f32 %v2023, %v2064
    %v2066 = vand.u32 %v384, 4294901760
    %v2067 = vsub.f32 %v384, %v2066
    %2068 = vmatmul.f32.gmra.mxu0 %v2067
    %v2069 = vpop.f32.mrf.mxu0
    %v2070 = vadd.f32 %v2027, %v2069
    %2071 = vdwg.mxu0
    %2072 = vmatpush.msra.mxu0 0.0
    %2073 = vmatpush.msra.mxu0 0.0
    %2074 = vmatpush.msra.mxu0 0.0
    %2075 = vmatpush.msra.mxu0 0.0
    %2076 = vmatpush.msra.mxu0 0.0
    %2077 = vmatpush.msra.mxu0 0.0
    %2078 = vmatpush.msra.mxu0 0.0
    %2079 = vmatpush.msra.mxu0 0.0
    %v2080 = vand.u32 %v128, 4294901760
    %2081 = vmatpush.msra.mxu0 %v2080
    %v2082 = vand.u32 %v124, 4294901760
    %2083 = vmatpush.msra.mxu0 %v2082
    %v2084 = vand.u32 %v120, 4294901760
    %2085 = vmatpush.msra.mxu0 %v2084
    %v2086 = vand.u32 %v116, 4294901760
    %2087 = vmatpush.msra.mxu0 %v2086
    %v2088 = vand.u32 %v112, 4294901760
    %2089 = vmatpush.msra.mxu0 %v2088
    %v2090 = vand.u32 %v108, 4294901760
    %2091 = vmatpush.msra.mxu0 %v2090
    %v2092 = vand.u32 %v104, 4294901760
    %2093 = vmatpush.msra.mxu0 %v2092
    %v2094 = vand.u32 %v100, 4294901760
    %2095 = vmatpush.msra.mxu0 %v2094
    %v2096 = vand.u32 %v381, 4294901760
    %v2097 = vsub.f32 %v381, %v2096
    %v2098 = vand.u32 %v2097, 4294901760
    %2099 = vmatmul.f32.gmra.mxu0 %v2098
    %v2100 = vpop.f32.mrf.mxu0
    %v2101 = vadd.f32 %v2065, %v2100
    %v2102 = vand.u32 %v384, 4294901760
    %v2103 = vsub.f32 %v384, %v2102
    %v2104 = vand.u32 %v2103, 4294901760
    %2105 = vmatmul.f32.gmra.mxu0 %v2104
    %v2106 = vpop.f32.mrf.mxu0
    %v2107 = vadd.f32 %v2070, %v2106
    %2108 = vdwg.mxu0
    %2109 = vmatpush.msra.mxu0 0.0
    %2110 = vmatpush.msra.mxu0 0.0
    %2111 = vmatpush.msra.mxu0 0.0
    %2112 = vmatpush.msra.mxu0 0.0
    %2113 = vmatpush.msra.mxu0 0.0
    %2114 = vmatpush.msra.mxu0 0.0
    %2115 = vmatpush.msra.mxu0 0.0
    %2116 = vmatpush.msra.mxu0 0.0
    %v2117 = vand.u32 %v128, 4294901760
    %v2118 = vsub.f32 %v128, %v2117
    %v2119 = vand.u32 %v2118, 4294901760
    %2120 = vmatpush.msra.mxu0 %v2119
    %v2121 = vand.u32 %v124, 4294901760
    %v2122 = vsub.f32 %v124, %v2121
    %v2123 = vand.u32 %v2122, 4294901760
    %2124 = vmatpush.msra.mxu0 %v2123
    %v2125 = vand.u32 %v120, 4294901760
    %v2126 = vsub.f32 %v120, %v2125
    %v2127 = vand.u32 %v2126, 4294901760
    %2128 = vmatpush.msra.mxu0 %v2127
    %v2129 = vand.u32 %v116, 4294901760
    %v2130 = vsub.f32 %v116, %v2129
    %v2131 = vand.u32 %v2130, 4294901760
    %2132 = vmatpush.msra.mxu0 %v2131
    %v2133 = vand.u32 %v112, 4294901760
    %v2134 = vsub.f32 %v112, %v2133
    %v2135 = vand.u32 %v2134, 4294901760
    %2136 = vmatpush.msra.mxu0 %v2135
    %v2137 = vand.u32 %v108, 4294901760
    %v2138 = vsub.f32 %v108, %v2137
    %v2139 = vand.u32 %v2138, 4294901760
    %2140 = vmatpush.msra.mxu0 %v2139
    %v2141 = vand.u32 %v104, 4294901760
    %v2142 = vsub.f32 %v104, %v2141
    %v2143 = vand.u32 %v2142, 4294901760
    %2144 = vmatpush.msra.mxu0 %v2143
    %v2145 = vand.u32 %v100, 4294901760
    %v2146 = vsub.f32 %v100, %v2145
    %v2147 = vand.u32 %v2146, 4294901760
    %2148 = vmatpush.msra.mxu0 %v2147
    %v2149 = vand.u32 %v381, 4294901760
    %2150 = vmatmul.f32.gmra.mxu0 %v2149
    %v2151 = vpop.f32.mrf.mxu0
    %v2152 = vadd.f32 %v2101, %v2151
    %v2153 = vand.u32 %v384, 4294901760
    %2154 = vmatmul.f32.gmra.mxu0 %v2153
    %v2155 = vpop.f32.mrf.mxu0
    %v2156 = vadd.f32 %v2107, %v2155
    %2157 = vdwg.mxu0
    %2158 = vmatpush.msra.mxu0 0.0
    %2159 = vmatpush.msra.mxu0 0.0
    %2160 = vmatpush.msra.mxu0 0.0
    %2161 = vmatpush.msra.mxu0 0.0
    %2162 = vmatpush.msra.mxu0 0.0
    %2163 = vmatpush.msra.mxu0 0.0
    %2164 = vmatpush.msra.mxu0 0.0
    %2165 = vmatpush.msra.mxu0 0.0
    %v2166 = vand.u32 %v128, 4294901760
    %2167 = vmatpush.msra.mxu0 %v2166
    %v2168 = vand.u32 %v124, 4294901760
    %2169 = vmatpush.msra.mxu0 %v2168
    %v2170 = vand.u32 %v120, 4294901760
    %2171 = vmatpush.msra.mxu0 %v2170
    %v2172 = vand.u32 %v116, 4294901760
    %2173 = vmatpush.msra.mxu0 %v2172
    %v2174 = vand.u32 %v112, 4294901760
    %2175 = vmatpush.msra.mxu0 %v2174
    %v2176 = vand.u32 %v108, 4294901760
    %2177 = vmatpush.msra.mxu0 %v2176
    %v2178 = vand.u32 %v104, 4294901760
    %2179 = vmatpush.msra.mxu0 %v2178
    %v2180 = vand.u32 %v100, 4294901760
    %2181 = vmatpush.msra.mxu0 %v2180
    %v2182 = vand.u32 %v381, 4294901760
    %2183 = vmatmul.f32.gmra.mxu0 %v2182
    %v2184 = vpop.f32.mrf.mxu0
    %v2185 = vadd.f32 %v2152, %v2184
    %v2186 = vand.u32 %v384, 4294901760
    %2187 = vmatmul.f32.gmra.mxu0 %v2186
    %v2188 = vpop.f32.mrf.mxu0
    %v2189 = vadd.f32 %v2156, %v2188
    %2190 = vdwg.mxu0
    %2191 = vmatpush.msra.mxu0 0.0
    %2192 = vmatpush.msra.mxu0 0.0
    %2193 = vmatpush.msra.mxu0 0.0
    %2194 = vmatpush.msra.mxu0 0.0
    %2195 = vmatpush.msra.mxu0 0.0
    %2196 = vmatpush.msra.mxu0 0.0
    %2197 = vmatpush.msra.mxu0 0.0
    %2198 = vmatpush.msra.mxu0 0.0
    %v2199 = vand.u32 %v129, 4294901760
    %2200 = vmatpush.msra.mxu0 %v2199
    %v2201 = vand.u32 %v125, 4294901760
    %2202 = vmatpush.msra.mxu0 %v2201
    %v2203 = vand.u32 %v121, 4294901760
    %2204 = vmatpush.msra.mxu0 %v2203
    %v2205 = vand.u32 %v117, 4294901760
    %2206 = vmatpush.msra.mxu0 %v2205
    %v2207 = vand.u32 %v113, 4294901760
    %2208 = vmatpush.msra.mxu0 %v2207
    %v2209 = vand.u32 %v109, 4294901760
    %2210 = vmatpush.msra.mxu0 %v2209
    %v2211 = vand.u32 %v105, 4294901760
    %2212 = vmatpush.msra.mxu0 %v2211
    %v2213 = vand.u32 %v101, 4294901760
    %2214 = vmatpush.msra.mxu0 %v2213
    %v2215 = vand.u32 %v381, 4294901760
    %v2216 = vsub.f32 %v381, %v2215
    %v2217 = vand.u32 %v2216, 4294901760
    %v2218 = vsub.f32 %v2216, %v2217
    %v2219 = vand.u32 %v2218, 4294901760
    %2220 = vmatmul.f32.gmra.mxu0 %v2219
    %v2221 = vpop.f32.mrf.mxu0
    %v2222 = vadd.f32 0.0, %v2221
    %v2223 = vand.u32 %v384, 4294901760
    %v2224 = vsub.f32 %v384, %v2223
    %v2225 = vand.u32 %v2224, 4294901760
    %v2226 = vsub.f32 %v2224, %v2225
    %v2227 = vand.u32 %v2226, 4294901760
    %2228 = vmatmul.f32.gmra.mxu0 %v2227
    %v2229 = vpop.f32.mrf.mxu0
    %v2230 = vadd.f32 0.0, %v2229
    %2231 = vdwg.mxu0
    %2232 = vmatpush.msra.mxu0 0.0
    %2233 = vmatpush.msra.mxu0 0.0
    %2234 = vmatpush.msra.mxu0 0.0
    %2235 = vmatpush.msra.mxu0 0.0
    %2236 = vmatpush.msra.mxu0 0.0
    %2237 = vmatpush.msra.mxu0 0.0
    %2238 = vmatpush.msra.mxu0 0.0
    %2239 = vmatpush.msra.mxu0 0.0
    %v2240 = vand.u32 %v129, 4294901760
    %v2241 = vsub.f32 %v129, %v2240
    %v2242 = vand.u32 %v2241, 4294901760
    %v2243 = vsub.f32 %v2241, %v2242
    %v2244 = vand.u32 %v2243, 4294901760
    %2245 = vmatpush.msra.mxu0 %v2244
    %v2246 = vand.u32 %v125, 4294901760
    %v2247 = vsub.f32 %v125, %v2246
    %v2248 = vand.u32 %v2247, 4294901760
    %v2249 = vsub.f32 %v2247, %v2248
    %v2250 = vand.u32 %v2249, 4294901760
    %2251 = vmatpush.msra.mxu0 %v2250
    %v2252 = vand.u32 %v121, 4294901760
    %v2253 = vsub.f32 %v121, %v2252
    %v2254 = vand.u32 %v2253, 4294901760
    %v2255 = vsub.f32 %v2253, %v2254
    %v2256 = vand.u32 %v2255, 4294901760
    %2257 = vmatpush.msra.mxu0 %v2256
    %v2258 = vand.u32 %v117, 4294901760
    %v2259 = vsub.f32 %v117, %v2258
    %v2260 = vand.u32 %v2259, 4294901760
    %v2261 = vsub.f32 %v2259, %v2260
    %v2262 = vand.u32 %v2261, 4294901760
    %2263 = vmatpush.msra.mxu0 %v2262
    %v2264 = vand.u32 %v113, 4294901760
    %v2265 = vsub.f32 %v113, %v2264
    %v2266 = vand.u32 %v2265, 4294901760
    %v2267 = vsub.f32 %v2265, %v2266
    %v2268 = vand.u32 %v2267, 4294901760
    %2269 = vmatpush.msra.mxu0 %v2268
    %v2270 = vand.u32 %v109, 4294901760
    %v2271 = vsub.f32 %v109, %v2270
    %v2272 = vand.u32 %v2271, 4294901760
    %v2273 = vsub.f32 %v2271, %v2272
    %v2274 = vand.u32 %v2273, 4294901760
    %2275 = vmatpush.msra.mxu0 %v2274
    %v2276 = vand.u32 %v105, 4294901760
    %v2277 = vsub.f32 %v105, %v2276
    %v2278 = vand.u32 %v2277, 4294901760
    %v2279 = vsub.f32 %v2277, %v2278
    %v2280 = vand.u32 %v2279, 4294901760
    %2281 = vmatpush.msra.mxu0 %v2280
    %v2282 = vand.u32 %v101, 4294901760
    %v2283 = vsub.f32 %v101, %v2282
    %v2284 = vand.u32 %v2283, 4294901760
    %v2285 = vsub.f32 %v2283, %v2284
    %v2286 = vand.u32 %v2285, 4294901760
    %2287 = vmatpush.msra.mxu0 %v2286
    %v2288 = vand.u32 %v381, 4294901760
    %2289 = vmatmul.f32.gmra.mxu0 %v2288
    %v2290 = vpop.f32.mrf.mxu0
    %v2291 = vadd.f32 %v2222, %v2290
    %v2292 = vand.u32 %v384, 4294901760
    %2293 = vmatmul.f32.gmra.mxu0 %v2292
    %v2294 = vpop.f32.mrf.mxu0
    %v2295 = vadd.f32 %v2230, %v2294
    %2296 = vdwg.mxu0
    %2297 = vmatpush.msra.mxu0 0.0
    %2298 = vmatpush.msra.mxu0 0.0
    %2299 = vmatpush.msra.mxu0 0.0
    %2300 = vmatpush.msra.mxu0 0.0
    %2301 = vmatpush.msra.mxu0 0.0
    %2302 = vmatpush.msra.mxu0 0.0
    %2303 = vmatpush.msra.mxu0 0.0
    %2304 = vmatpush.msra.mxu0 0.0
    %v2305 = vand.u32 %v129, 4294901760
    %v2306 = vsub.f32 %v129, %v2305
    %2307 = vmatpush.msra.mxu0 %v2306
    %v2308 = vand.u32 %v125, 4294901760
    %v2309 = vsub.f32 %v125, %v2308
    %2310 = vmatpush.msra.mxu0 %v2309
    %v2311 = vand.u32 %v121, 4294901760
    %v2312 = vsub.f32 %v121, %v2311
    %2313 = vmatpush.msra.mxu0 %v2312
    %v2314 = vand.u32 %v117, 4294901760
    %v2315 = vsub.f32 %v117, %v2314
    %2316 = vmatpush.msra.mxu0 %v2315
    %v2317 = vand.u32 %v113, 4294901760
    %v2318 = vsub.f32 %v113, %v2317
    %2319 = vmatpush.msra.mxu0 %v2318
    %v2320 = vand.u32 %v109, 4294901760
    %v2321 = vsub.f32 %v109, %v2320
    %2322 = vmatpush.msra.mxu0 %v2321
    %v2323 = vand.u32 %v105, 4294901760
    %v2324 = vsub.f32 %v105, %v2323
    %2325 = vmatpush.msra.mxu0 %v2324
    %v2326 = vand.u32 %v101, 4294901760
    %v2327 = vsub.f32 %v101, %v2326
    %2328 = vmatpush.msra.mxu0 %v2327
    %v2329 = vand.u32 %v381, 4294901760
    %v2330 = vsub.f32 %v381, %v2329
    %2331 = vmatmul.f32.gmra.mxu0 %v2330
    %v2332 = vpop.f32.mrf.mxu0
    %v2333 = vadd.f32 %v2291, %v2332
    %v2334 = vand.u32 %v384, 4294901760
    %v2335 = vsub.f32 %v384, %v2334
    %2336 = vmatmul.f32.gmra.mxu0 %v2335
    %v2337 = vpop.f32.mrf.mxu0
    %v2338 = vadd.f32 %v2295, %v2337
    %2339 = vdwg.mxu0
    %2340 = vmatpush.msra.mxu0 0.0
    %2341 = vmatpush.msra.mxu0 0.0
    %2342 = vmatpush.msra.mxu0 0.0
    %2343 = vmatpush.msra.mxu0 0.0
    %2344 = vmatpush.msra.mxu0 0.0
    %2345 = vmatpush.msra.mxu0 0.0
    %2346 = vmatpush.msra.mxu0 0.0
    %2347 = vmatpush.msra.mxu0 0.0
    %v2348 = vand.u32 %v129, 4294901760
    %2349 = vmatpush.msra.mxu0 %v2348
    %v2350 = vand.u32 %v125, 4294901760
    %2351 = vmatpush.msra.mxu0 %v2350
    %v2352 = vand.u32 %v121, 4294901760
    %2353 = vmatpush.msra.mxu0 %v2352
    %v2354 = vand.u32 %v117, 4294901760
    %2355 = vmatpush.msra.mxu0 %v2354
    %v2356 = vand.u32 %v113, 4294901760
    %2357 = vmatpush.msra.mxu0 %v2356
    %v2358 = vand.u32 %v109, 4294901760
    %2359 = vmatpush.msra.mxu0 %v2358
    %v2360 = vand.u32 %v105, 4294901760
    %2361 = vmatpush.msra.mxu0 %v2360
    %v2362 = vand.u32 %v101, 4294901760
    %2363 = vmatpush.msra.mxu0 %v2362
    %v2364 = vand.u32 %v381, 4294901760
    %v2365 = vsub.f32 %v381, %v2364
    %v2366 = vand.u32 %v2365, 4294901760
    %2367 = vmatmul.f32.gmra.mxu0 %v2366
    %v2368 = vpop.f32.mrf.mxu0
    %v2369 = vadd.f32 %v2333, %v2368
    %v2370 = vand.u32 %v384, 4294901760
    %v2371 = vsub.f32 %v384, %v2370
    %v2372 = vand.u32 %v2371, 4294901760
    %2373 = vmatmul.f32.gmra.mxu0 %v2372
    %v2374 = vpop.f32.mrf.mxu0
    %v2375 = vadd.f32 %v2338, %v2374
    %2376 = vdwg.mxu0
    %2377 = vmatpush.msra.mxu0 0.0
    %2378 = vmatpush.msra.mxu0 0.0
    %2379 = vmatpush.msra.mxu0 0.0
    %2380 = vmatpush.msra.mxu0 0.0
    %2381 = vmatpush.msra.mxu0 0.0
    %2382 = vmatpush.msra.mxu0 0.0
    %2383 = vmatpush.msra.mxu0 0.0
    %2384 = vmatpush.msra.mxu0 0.0
    %v2385 = vand.u32 %v129, 4294901760
    %v2386 = vsub.f32 %v129, %v2385
    %v2387 = vand.u32 %v2386, 4294901760
    %2388 = vmatpush.msra.mxu0 %v2387
    %v2389 = vand.u32 %v125, 4294901760
    %v2390 = vsub.f32 %v125, %v2389
    %v2391 = vand.u32 %v2390, 4294901760
    %2392 = vmatpush.msra.mxu0 %v2391
    %v2393 = vand.u32 %v121, 4294901760
    %v2394 = vsub.f32 %v121, %v2393
    %v2395 = vand.u32 %v2394, 4294901760
    %2396 = vmatpush.msra.mxu0 %v2395
    %v2397 = vand.u32 %v117, 4294901760
    %v2398 = vsub.f32 %v117, %v2397
    %v2399 = vand.u32 %v2398, 4294901760
    %2400 = vmatpush.msra.mxu0 %v2399
    %v2401 = vand.u32 %v113, 4294901760
    %v2402 = vsub.f32 %v113, %v2401
    %v2403 = vand.u32 %v2402, 4294901760
    %2404 = vmatpush.msra.mxu0 %v2403
    %v2405 = vand.u32 %v109, 4294901760
    %v2406 = vsub.f32 %v109, %v2405
    %v2407 = vand.u32 %v2406, 4294901760
    %2408 = vmatpush.msra.mxu0 %v2407
    %v2409 = vand.u32 %v105, 4294901760
    %v2410 = vsub.f32 %v105, %v2409
    %v2411 = vand.u32 %v2410, 4294901760
    %2412 = vmatpush.msra.mxu0 %v2411
    %v2413 = vand.u32 %v101, 4294901760
    %v2414 = vsub.f32 %v101, %v2413
    %v2415 = vand.u32 %v2414, 4294901760
    %2416 = vmatpush.msra.mxu0 %v2415
    %v2417 = vand.u32 %v381, 4294901760
    %2418 = vmatmul.f32.gmra.mxu0 %v2417
    %v2419 = vpop.f32.mrf.mxu0
    %v2420 = vadd.f32 %v2369, %v2419
    %v2421 = vand.u32 %v384, 4294901760
    %2422 = vmatmul.f32.gmra.mxu0 %v2421
    %v2423 = vpop.f32.mrf.mxu0
    %v2424 = vadd.f32 %v2375, %v2423
    %2425 = vdwg.mxu0
    %2426 = vmatpush.msra.mxu0 0.0
    %2427 = vmatpush.msra.mxu0 0.0
    %2428 = vmatpush.msra.mxu0 0.0
    %2429 = vmatpush.msra.mxu0 0.0
    %2430 = vmatpush.msra.mxu0 0.0
    %2431 = vmatpush.msra.mxu0 0.0
    %2432 = vmatpush.msra.mxu0 0.0
    %2433 = vmatpush.msra.mxu0 0.0
    %v2434 = vand.u32 %v129, 4294901760
    %2435 = vmatpush.msra.mxu0 %v2434
    %v2436 = vand.u32 %v125, 4294901760
    %2437 = vmatpush.msra.mxu0 %v2436
    %v2438 = vand.u32 %v121, 4294901760
    %2439 = vmatpush.msra.mxu0 %v2438
    %v2440 = vand.u32 %v117, 4294901760
    %2441 = vmatpush.msra.mxu0 %v2440
    %v2442 = vand.u32 %v113, 4294901760
    %2443 = vmatpush.msra.mxu0 %v2442
    %v2444 = vand.u32 %v109, 4294901760
    %2445 = vmatpush.msra.mxu0 %v2444
    %v2446 = vand.u32 %v105, 4294901760
    %2447 = vmatpush.msra.mxu0 %v2446
    %v2448 = vand.u32 %v101, 4294901760
    %2449 = vmatpush.msra.mxu0 %v2448
    %v2450 = vand.u32 %v381, 4294901760
    %2451 = vmatmul.f32.gmra.mxu0 %v2450
    %v2452 = vpop.f32.mrf.mxu0
    %v2453 = vadd.f32 %v2420, %v2452
    %v2454 = vand.u32 %v384, 4294901760
    %2455 = vmatmul.f32.gmra.mxu0 %v2454
    %v2456 = vpop.f32.mrf.mxu0
    %v2457 = vadd.f32 %v2424, %v2456
    %2458 = vdwg.mxu0
    %v2460 = vsel %vm155, %v1385, 0
    %v2463 = vsel %vm155, %v1386, 0
    %2465 = vmatpush.msra.mxu0 0.0
    %2466 = vmatpush.msra.mxu0 0.0
    %2467 = vmatpush.msra.mxu0 0.0
    %2468 = vmatpush.msra.mxu0 0.0
    %2469 = vmatpush.msra.mxu0 0.0
    %2470 = vmatpush.msra.mxu0 0.0
    %2471 = vmatpush.msra.mxu0 0.0
    %2472 = vmatpush.msra.mxu0 0.0
    %2473 = vmatpush.msra.mxu0 0.0
    %2474 = vmatpush.msra.mxu0 0.0
    %2475 = vmatpush.msra.mxu0 0.0
    %2476 = vmatpush.msra.mxu0 0.0
    %v2477 = vand.u32 %v142, 4294901760
    %2478 = vmatpush.msra.mxu0 %v2477
    %v2479 = vand.u32 %v138, 4294901760
    %2480 = vmatpush.msra.mxu0 %v2479
    %v2481 = vand.u32 %v134, 4294901760
    %2482 = vmatpush.msra.mxu0 %v2481
    %v2483 = vand.u32 %v130, 4294901760
    %2484 = vmatpush.msra.mxu0 %v2483
    %v2485 = vand.u32 %v2460, 4294901760
    %v2486 = vsub.f32 %v2460, %v2485
    %v2487 = vand.u32 %v2486, 4294901760
    %v2488 = vsub.f32 %v2486, %v2487
    %v2489 = vand.u32 %v2488, 4294901760
    %2490 = vmatmul.f32.gmra.mxu0 %v2489
    %v2491 = vpop.f32.mrf.mxu0
    %v2492 = vadd.f32 0.0, %v2491
    %v2493 = vand.u32 %v2463, 4294901760
    %v2494 = vsub.f32 %v2463, %v2493
    %v2495 = vand.u32 %v2494, 4294901760
    %v2496 = vsub.f32 %v2494, %v2495
    %v2497 = vand.u32 %v2496, 4294901760
    %2498 = vmatmul.f32.gmra.mxu0 %v2497
    %v2499 = vpop.f32.mrf.mxu0
    %v2500 = vadd.f32 0.0, %v2499
    %2501 = vdwg.mxu0
    %2502 = vmatpush.msra.mxu0 0.0
    %2503 = vmatpush.msra.mxu0 0.0
    %2504 = vmatpush.msra.mxu0 0.0
    %2505 = vmatpush.msra.mxu0 0.0
    %2506 = vmatpush.msra.mxu0 0.0
    %2507 = vmatpush.msra.mxu0 0.0
    %2508 = vmatpush.msra.mxu0 0.0
    %2509 = vmatpush.msra.mxu0 0.0
    %2510 = vmatpush.msra.mxu0 0.0
    %2511 = vmatpush.msra.mxu0 0.0
    %2512 = vmatpush.msra.mxu0 0.0
    %2513 = vmatpush.msra.mxu0 0.0
    %v2514 = vand.u32 %v142, 4294901760
    %v2515 = vsub.f32 %v142, %v2514
    %v2516 = vand.u32 %v2515, 4294901760
    %v2517 = vsub.f32 %v2515, %v2516
    %v2518 = vand.u32 %v2517, 4294901760
    %2519 = vmatpush.msra.mxu0 %v2518
    %v2520 = vand.u32 %v138, 4294901760
    %v2521 = vsub.f32 %v138, %v2520
    %v2522 = vand.u32 %v2521, 4294901760
    %v2523 = vsub.f32 %v2521, %v2522
    %v2524 = vand.u32 %v2523, 4294901760
    %2525 = vmatpush.msra.mxu0 %v2524
    %v2526 = vand.u32 %v134, 4294901760
    %v2527 = vsub.f32 %v134, %v2526
    %v2528 = vand.u32 %v2527, 4294901760
    %v2529 = vsub.f32 %v2527, %v2528
    %v2530 = vand.u32 %v2529, 4294901760
    %2531 = vmatpush.msra.mxu0 %v2530
    %v2532 = vand.u32 %v130, 4294901760
    %v2533 = vsub.f32 %v130, %v2532
    %v2534 = vand.u32 %v2533, 4294901760
    %v2535 = vsub.f32 %v2533, %v2534
    %v2536 = vand.u32 %v2535, 4294901760
    %2537 = vmatpush.msra.mxu0 %v2536
    %v2538 = vand.u32 %v2460, 4294901760
    %2539 = vmatmul.f32.gmra.mxu0 %v2538
    %v2540 = vpop.f32.mrf.mxu0
    %v2541 = vadd.f32 %v2492, %v2540
    %v2542 = vand.u32 %v2463, 4294901760
    %2543 = vmatmul.f32.gmra.mxu0 %v2542
    %v2544 = vpop.f32.mrf.mxu0
    %v2545 = vadd.f32 %v2500, %v2544
    %2546 = vdwg.mxu0
    %2547 = vmatpush.msra.mxu0 0.0
    %2548 = vmatpush.msra.mxu0 0.0
    %2549 = vmatpush.msra.mxu0 0.0
    %2550 = vmatpush.msra.mxu0 0.0
    %2551 = vmatpush.msra.mxu0 0.0
    %2552 = vmatpush.msra.mxu0 0.0
    %2553 = vmatpush.msra.mxu0 0.0
    %2554 = vmatpush.msra.mxu0 0.0
    %2555 = vmatpush.msra.mxu0 0.0
    %2556 = vmatpush.msra.mxu0 0.0
    %2557 = vmatpush.msra.mxu0 0.0
    %2558 = vmatpush.msra.mxu0 0.0
    %v2559 = vand.u32 %v142, 4294901760
    %v2560 = vsub.f32 %v142, %v2559
    %2561 = vmatpush.msra.mxu0 %v2560
    %v2562 = vand.u32 %v138, 4294901760
    %v2563 = vsub.f32 %v138, %v2562
    %2564 = vmatpush.msra.mxu0 %v2563
    %v2565 = vand.u32 %v134, 4294901760
    %v2566 = vsub.f32 %v134, %v2565
    %2567 = vmatpush.msra.mxu0 %v2566
    %v2568 = vand.u32 %v130, 4294901760
    %v2569 = vsub.f32 %v130, %v2568
    %2570 = vmatpush.msra.mxu0 %v2569
    %v2571 = vand.u32 %v2460, 4294901760
    %v2572 = vsub.f32 %v2460, %v2571
    %2573 = vmatmul.f32.gmra.mxu0 %v2572
    %v2574 = vpop.f32.mrf.mxu0
    %v2575 = vadd.f32 %v2541, %v2574
    %v2576 = vand.u32 %v2463, 4294901760
    %v2577 = vsub.f32 %v2463, %v2576
    %2578 = vmatmul.f32.gmra.mxu0 %v2577
    %v2579 = vpop.f32.mrf.mxu0
    %v2580 = vadd.f32 %v2545, %v2579
    %2581 = vdwg.mxu0
    %2582 = vmatpush.msra.mxu0 0.0
    %2583 = vmatpush.msra.mxu0 0.0
    %2584 = vmatpush.msra.mxu0 0.0
    %2585 = vmatpush.msra.mxu0 0.0
    %2586 = vmatpush.msra.mxu0 0.0
    %2587 = vmatpush.msra.mxu0 0.0
    %2588 = vmatpush.msra.mxu0 0.0
    %2589 = vmatpush.msra.mxu0 0.0
    %2590 = vmatpush.msra.mxu0 0.0
    %2591 = vmatpush.msra.mxu0 0.0
    %2592 = vmatpush.msra.mxu0 0.0
    %2593 = vmatpush.msra.mxu0 0.0
    %v2594 = vand.u32 %v142, 4294901760
    %2595 = vmatpush.msra.mxu0 %v2594
    %v2596 = vand.u32 %v138, 4294901760
    %2597 = vmatpush.msra.mxu0 %v2596
    %v2598 = vand.u32 %v134, 4294901760
    %2599 = vmatpush.msra.mxu0 %v2598
    %v2600 = vand.u32 %v130, 4294901760
    %2601 = vmatpush.msra.mxu0 %v2600
    %v2602 = vand.u32 %v2460, 4294901760
    %v2603 = vsub.f32 %v2460, %v2602
    %v2604 = vand.u32 %v2603, 4294901760
    %2605 = vmatmul.f32.gmra.mxu0 %v2604
    %v2606 = vpop.f32.mrf.mxu0
    %v2607 = vadd.f32 %v2575, %v2606
    %v2608 = vand.u32 %v2463, 4294901760
    %v2609 = vsub.f32 %v2463, %v2608
    %v2610 = vand.u32 %v2609, 4294901760
    %2611 = vmatmul.f32.gmra.mxu0 %v2610
    %v2612 = vpop.f32.mrf.mxu0
    %v2613 = vadd.f32 %v2580, %v2612
    %2614 = vdwg.mxu0
    %2615 = vmatpush.msra.mxu0 0.0
    %2616 = vmatpush.msra.mxu0 0.0
    %2617 = vmatpush.msra.mxu0 0.0
    %2618 = vmatpush.msra.mxu0 0.0
    %2619 = vmatpush.msra.mxu0 0.0
    %2620 = vmatpush.msra.mxu0 0.0
    %2621 = vmatpush.msra.mxu0 0.0
    %2622 = vmatpush.msra.mxu0 0.0
    %2623 = vmatpush.msra.mxu0 0.0
    %2624 = vmatpush.msra.mxu0 0.0
    %2625 = vmatpush.msra.mxu0 0.0
    %2626 = vmatpush.msra.mxu0 0.0
    %v2627 = vand.u32 %v142, 4294901760
    %v2628 = vsub.f32 %v142, %v2627
    %v2629 = vand.u32 %v2628, 4294901760
    %2630 = vmatpush.msra.mxu0 %v2629
    %v2631 = vand.u32 %v138, 4294901760
    %v2632 = vsub.f32 %v138, %v2631
    %v2633 = vand.u32 %v2632, 4294901760
    %2634 = vmatpush.msra.mxu0 %v2633
    %v2635 = vand.u32 %v134, 4294901760
    %v2636 = vsub.f32 %v134, %v2635
    %v2637 = vand.u32 %v2636, 4294901760
    %2638 = vmatpush.msra.mxu0 %v2637
    %v2639 = vand.u32 %v130, 4294901760
    %v2640 = vsub.f32 %v130, %v2639
    %v2641 = vand.u32 %v2640, 4294901760
    %2642 = vmatpush.msra.mxu0 %v2641
    %v2643 = vand.u32 %v2460, 4294901760
    %2644 = vmatmul.f32.gmra.mxu0 %v2643
    %v2645 = vpop.f32.mrf.mxu0
    %v2646 = vadd.f32 %v2607, %v2645
    %v2647 = vand.u32 %v2463, 4294901760
    %2648 = vmatmul.f32.gmra.mxu0 %v2647
    %v2649 = vpop.f32.mrf.mxu0
    %v2650 = vadd.f32 %v2613, %v2649
    %2651 = vdwg.mxu0
    %2652 = vmatpush.msra.mxu0 0.0
    %2653 = vmatpush.msra.mxu0 0.0
    %2654 = vmatpush.msra.mxu0 0.0
    %2655 = vmatpush.msra.mxu0 0.0
    %2656 = vmatpush.msra.mxu0 0.0
    %2657 = vmatpush.msra.mxu0 0.0
    %2658 = vmatpush.msra.mxu0 0.0
    %2659 = vmatpush.msra.mxu0 0.0
    %2660 = vmatpush.msra.mxu0 0.0
    %2661 = vmatpush.msra.mxu0 0.0
    %2662 = vmatpush.msra.mxu0 0.0
    %2663 = vmatpush.msra.mxu0 0.0
    %v2664 = vand.u32 %v142, 4294901760
    %2665 = vmatpush.msra.mxu0 %v2664
    %v2666 = vand.u32 %v138, 4294901760
    %2667 = vmatpush.msra.mxu0 %v2666
    %v2668 = vand.u32 %v134, 4294901760
    %2669 = vmatpush.msra.mxu0 %v2668
    %v2670 = vand.u32 %v130, 4294901760
    %2671 = vmatpush.msra.mxu0 %v2670
    %v2672 = vand.u32 %v2460, 4294901760
    %2673 = vmatmul.f32.gmra.mxu0 %v2672
    %v2674 = vpop.f32.mrf.mxu0
    %v2675 = vadd.f32 %v2646, %v2674
    %v2676 = vand.u32 %v2463, 4294901760
    %2677 = vmatmul.f32.gmra.mxu0 %v2676
    %v2678 = vpop.f32.mrf.mxu0
    %v2679 = vadd.f32 %v2650, %v2678
    %2680 = vdwg.mxu0
    %2681 = vmatpush.msra.mxu0 0.0
    %2682 = vmatpush.msra.mxu0 0.0
    %2683 = vmatpush.msra.mxu0 0.0
    %2684 = vmatpush.msra.mxu0 0.0
    %2685 = vmatpush.msra.mxu0 0.0
    %2686 = vmatpush.msra.mxu0 0.0
    %2687 = vmatpush.msra.mxu0 0.0
    %2688 = vmatpush.msra.mxu0 0.0
    %2689 = vmatpush.msra.mxu0 0.0
    %2690 = vmatpush.msra.mxu0 0.0
    %2691 = vmatpush.msra.mxu0 0.0
    %2692 = vmatpush.msra.mxu0 0.0
    %v2693 = vand.u32 %v143, 4294901760
    %2694 = vmatpush.msra.mxu0 %v2693
    %v2695 = vand.u32 %v139, 4294901760
    %2696 = vmatpush.msra.mxu0 %v2695
    %v2697 = vand.u32 %v135, 4294901760
    %2698 = vmatpush.msra.mxu0 %v2697
    %v2699 = vand.u32 %v131, 4294901760
    %2700 = vmatpush.msra.mxu0 %v2699
    %v2701 = vand.u32 %v2460, 4294901760
    %v2702 = vsub.f32 %v2460, %v2701
    %v2703 = vand.u32 %v2702, 4294901760
    %v2704 = vsub.f32 %v2702, %v2703
    %v2705 = vand.u32 %v2704, 4294901760
    %2706 = vmatmul.f32.gmra.mxu0 %v2705
    %v2707 = vpop.f32.mrf.mxu0
    %v2708 = vadd.f32 0.0, %v2707
    %v2709 = vand.u32 %v2463, 4294901760
    %v2710 = vsub.f32 %v2463, %v2709
    %v2711 = vand.u32 %v2710, 4294901760
    %v2712 = vsub.f32 %v2710, %v2711
    %v2713 = vand.u32 %v2712, 4294901760
    %2714 = vmatmul.f32.gmra.mxu0 %v2713
    %v2715 = vpop.f32.mrf.mxu0
    %v2716 = vadd.f32 0.0, %v2715
    %2717 = vdwg.mxu0
    %2718 = vmatpush.msra.mxu0 0.0
    %2719 = vmatpush.msra.mxu0 0.0
    %2720 = vmatpush.msra.mxu0 0.0
    %2721 = vmatpush.msra.mxu0 0.0
    %2722 = vmatpush.msra.mxu0 0.0
    %2723 = vmatpush.msra.mxu0 0.0
    %2724 = vmatpush.msra.mxu0 0.0
    %2725 = vmatpush.msra.mxu0 0.0
    %2726 = vmatpush.msra.mxu0 0.0
    %2727 = vmatpush.msra.mxu0 0.0
    %2728 = vmatpush.msra.mxu0 0.0
    %2729 = vmatpush.msra.mxu0 0.0
    %v2730 = vand.u32 %v143, 4294901760
    %v2731 = vsub.f32 %v143, %v2730
    %v2732 = vand.u32 %v2731, 4294901760
    %v2733 = vsub.f32 %v2731, %v2732
    %v2734 = vand.u32 %v2733, 4294901760
    %2735 = vmatpush.msra.mxu0 %v2734
    %v2736 = vand.u32 %v139, 4294901760
    %v2737 = vsub.f32 %v139, %v2736
    %v2738 = vand.u32 %v2737, 4294901760
    %v2739 = vsub.f32 %v2737, %v2738
    %v2740 = vand.u32 %v2739, 4294901760
    %2741 = vmatpush.msra.mxu0 %v2740
    %v2742 = vand.u32 %v135, 4294901760
    %v2743 = vsub.f32 %v135, %v2742
    %v2744 = vand.u32 %v2743, 4294901760
    %v2745 = vsub.f32 %v2743, %v2744
    %v2746 = vand.u32 %v2745, 4294901760
    %2747 = vmatpush.msra.mxu0 %v2746
    %v2748 = vand.u32 %v131, 4294901760
    %v2749 = vsub.f32 %v131, %v2748
    %v2750 = vand.u32 %v2749, 4294901760
    %v2751 = vsub.f32 %v2749, %v2750
    %v2752 = vand.u32 %v2751, 4294901760
    %2753 = vmatpush.msra.mxu0 %v2752
    %v2754 = vand.u32 %v2460, 4294901760
    %2755 = vmatmul.f32.gmra.mxu0 %v2754
    %v2756 = vpop.f32.mrf.mxu0
    %v2757 = vadd.f32 %v2708, %v2756
    %v2758 = vand.u32 %v2463, 4294901760
    %2759 = vmatmul.f32.gmra.mxu0 %v2758
    %v2760 = vpop.f32.mrf.mxu0
    %v2761 = vadd.f32 %v2716, %v2760
    %2762 = vdwg.mxu0
    %2763 = vmatpush.msra.mxu0 0.0
    %2764 = vmatpush.msra.mxu0 0.0
    %2765 = vmatpush.msra.mxu0 0.0
    %2766 = vmatpush.msra.mxu0 0.0
    %2767 = vmatpush.msra.mxu0 0.0
    %2768 = vmatpush.msra.mxu0 0.0
    %2769 = vmatpush.msra.mxu0 0.0
    %2770 = vmatpush.msra.mxu0 0.0
    %2771 = vmatpush.msra.mxu0 0.0
    %2772 = vmatpush.msra.mxu0 0.0
    %2773 = vmatpush.msra.mxu0 0.0
    %2774 = vmatpush.msra.mxu0 0.0
    %v2775 = vand.u32 %v143, 4294901760
    %v2776 = vsub.f32 %v143, %v2775
    %2777 = vmatpush.msra.mxu0 %v2776
    %v2778 = vand.u32 %v139, 4294901760
    %v2779 = vsub.f32 %v139, %v2778
    %2780 = vmatpush.msra.mxu0 %v2779
    %v2781 = vand.u32 %v135, 4294901760
    %v2782 = vsub.f32 %v135, %v2781
    %2783 = vmatpush.msra.mxu0 %v2782
    %v2784 = vand.u32 %v131, 4294901760
    %v2785 = vsub.f32 %v131, %v2784
    %2786 = vmatpush.msra.mxu0 %v2785
    %v2787 = vand.u32 %v2460, 4294901760
    %v2788 = vsub.f32 %v2460, %v2787
    %2789 = vmatmul.f32.gmra.mxu0 %v2788
    %v2790 = vpop.f32.mrf.mxu0
    %v2791 = vadd.f32 %v2757, %v2790
    %v2792 = vand.u32 %v2463, 4294901760
    %v2793 = vsub.f32 %v2463, %v2792
    %2794 = vmatmul.f32.gmra.mxu0 %v2793
    %v2795 = vpop.f32.mrf.mxu0
    %v2796 = vadd.f32 %v2761, %v2795
    %2797 = vdwg.mxu0
    %2798 = vmatpush.msra.mxu0 0.0
    %2799 = vmatpush.msra.mxu0 0.0
    %2800 = vmatpush.msra.mxu0 0.0
    %2801 = vmatpush.msra.mxu0 0.0
    %2802 = vmatpush.msra.mxu0 0.0
    %2803 = vmatpush.msra.mxu0 0.0
    %2804 = vmatpush.msra.mxu0 0.0
    %2805 = vmatpush.msra.mxu0 0.0
    %2806 = vmatpush.msra.mxu0 0.0
    %2807 = vmatpush.msra.mxu0 0.0
    %2808 = vmatpush.msra.mxu0 0.0
    %2809 = vmatpush.msra.mxu0 0.0
    %v2810 = vand.u32 %v143, 4294901760
    %2811 = vmatpush.msra.mxu0 %v2810
    %v2812 = vand.u32 %v139, 4294901760
    %2813 = vmatpush.msra.mxu0 %v2812
    %v2814 = vand.u32 %v135, 4294901760
    %2815 = vmatpush.msra.mxu0 %v2814
    %v2816 = vand.u32 %v131, 4294901760
    %2817 = vmatpush.msra.mxu0 %v2816
    %v2818 = vand.u32 %v2460, 4294901760
    %v2819 = vsub.f32 %v2460, %v2818
    %v2820 = vand.u32 %v2819, 4294901760
    %2821 = vmatmul.f32.gmra.mxu0 %v2820
    %v2822 = vpop.f32.mrf.mxu0
    %v2823 = vadd.f32 %v2791, %v2822
    %v2824 = vand.u32 %v2463, 4294901760
    %v2825 = vsub.f32 %v2463, %v2824
    %v2826 = vand.u32 %v2825, 4294901760
    %2827 = vmatmul.f32.gmra.mxu0 %v2826
    %v2828 = vpop.f32.mrf.mxu0
    %v2829 = vadd.f32 %v2796, %v2828
    %2830 = vdwg.mxu0
    %2831 = vmatpush.msra.mxu0 0.0
    %2832 = vmatpush.msra.mxu0 0.0
    %2833 = vmatpush.msra.mxu0 0.0
    %2834 = vmatpush.msra.mxu0 0.0
    %2835 = vmatpush.msra.mxu0 0.0
    %2836 = vmatpush.msra.mxu0 0.0
    %2837 = vmatpush.msra.mxu0 0.0
    %2838 = vmatpush.msra.mxu0 0.0
    %2839 = vmatpush.msra.mxu0 0.0
    %2840 = vmatpush.msra.mxu0 0.0
    %2841 = vmatpush.msra.mxu0 0.0
    %2842 = vmatpush.msra.mxu0 0.0
    %v2843 = vand.u32 %v143, 4294901760
    %v2844 = vsub.f32 %v143, %v2843
    %v2845 = vand.u32 %v2844, 4294901760
    %2846 = vmatpush.msra.mxu0 %v2845
    %v2847 = vand.u32 %v139, 4294901760
    %v2848 = vsub.f32 %v139, %v2847
    %v2849 = vand.u32 %v2848, 4294901760
    %2850 = vmatpush.msra.mxu0 %v2849
    %v2851 = vand.u32 %v135, 4294901760
    %v2852 = vsub.f32 %v135, %v2851
    %v2853 = vand.u32 %v2852, 4294901760
    %2854 = vmatpush.msra.mxu0 %v2853
    %v2855 = vand.u32 %v131, 4294901760
    %v2856 = vsub.f32 %v131, %v2855
    %v2857 = vand.u32 %v2856, 4294901760
    %2858 = vmatpush.msra.mxu0 %v2857
    %v2859 = vand.u32 %v2460, 4294901760
    %2860 = vmatmul.f32.gmra.mxu0 %v2859
    %v2861 = vpop.f32.mrf.mxu0
    %v2862 = vadd.f32 %v2823, %v2861
    %v2863 = vand.u32 %v2463, 4294901760
    %2864 = vmatmul.f32.gmra.mxu0 %v2863
    %v2865 = vpop.f32.mrf.mxu0
    %v2866 = vadd.f32 %v2829, %v2865
    %2867 = vdwg.mxu0
    %2868 = vmatpush.msra.mxu0 0.0
    %2869 = vmatpush.msra.mxu0 0.0
    %2870 = vmatpush.msra.mxu0 0.0
    %2871 = vmatpush.msra.mxu0 0.0
    %2872 = vmatpush.msra.mxu0 0.0
    %2873 = vmatpush.msra.mxu0 0.0
    %2874 = vmatpush.msra.mxu0 0.0
    %2875 = vmatpush.msra.mxu0 0.0
    %2876 = vmatpush.msra.mxu0 0.0
    %2877 = vmatpush.msra.mxu0 0.0
    %2878 = vmatpush.msra.mxu0 0.0
    %2879 = vmatpush.msra.mxu0 0.0
    %v2880 = vand.u32 %v143, 4294901760
    %2881 = vmatpush.msra.mxu0 %v2880
    %v2882 = vand.u32 %v139, 4294901760
    %2883 = vmatpush.msra.mxu0 %v2882
    %v2884 = vand.u32 %v135, 4294901760
    %2885 = vmatpush.msra.mxu0 %v2884
    %v2886 = vand.u32 %v131, 4294901760
    %2887 = vmatpush.msra.mxu0 %v2886
    %v2888 = vand.u32 %v2460, 4294901760
    %2889 = vmatmul.f32.gmra.mxu0 %v2888
    %v2890 = vpop.f32.mrf.mxu0
    %v2891 = vadd.f32 %v2862, %v2890
    %v2892 = vand.u32 %v2463, 4294901760
    %2893 = vmatmul.f32.gmra.mxu0 %v2892
    %v2894 = vpop.f32.mrf.mxu0
    %v2895 = vadd.f32 %v2866, %v2894
    %2896 = vdwg.mxu0
    %2897 = vmatpush.msra.mxu0 0.0
    %2898 = vmatpush.msra.mxu0 0.0
    %2899 = vmatpush.msra.mxu0 0.0
    %2900 = vmatpush.msra.mxu0 0.0
    %2901 = vmatpush.msra.mxu0 0.0
    %2902 = vmatpush.msra.mxu0 0.0
    %2903 = vmatpush.msra.mxu0 0.0
    %2904 = vmatpush.msra.mxu0 0.0
    %2905 = vmatpush.msra.mxu0 0.0
    %2906 = vmatpush.msra.mxu0 0.0
    %2907 = vmatpush.msra.mxu0 0.0
    %2908 = vmatpush.msra.mxu0 0.0
    %v2909 = vand.u32 %v144, 4294901760
    %2910 = vmatpush.msra.mxu0 %v2909
    %v2911 = vand.u32 %v140, 4294901760
    %2912 = vmatpush.msra.mxu0 %v2911
    %v2913 = vand.u32 %v136, 4294901760
    %2914 = vmatpush.msra.mxu0 %v2913
    %v2915 = vand.u32 %v132, 4294901760
    %2916 = vmatpush.msra.mxu0 %v2915
    %v2917 = vand.u32 %v2460, 4294901760
    %v2918 = vsub.f32 %v2460, %v2917
    %v2919 = vand.u32 %v2918, 4294901760
    %v2920 = vsub.f32 %v2918, %v2919
    %v2921 = vand.u32 %v2920, 4294901760
    %2922 = vmatmul.f32.gmra.mxu0 %v2921
    %v2923 = vpop.f32.mrf.mxu0
    %v2924 = vadd.f32 0.0, %v2923
    %v2925 = vand.u32 %v2463, 4294901760
    %v2926 = vsub.f32 %v2463, %v2925
    %v2927 = vand.u32 %v2926, 4294901760
    %v2928 = vsub.f32 %v2926, %v2927
    %v2929 = vand.u32 %v2928, 4294901760
    %2930 = vmatmul.f32.gmra.mxu0 %v2929
    %v2931 = vpop.f32.mrf.mxu0
    %v2932 = vadd.f32 0.0, %v2931
    %2933 = vdwg.mxu0
    %2934 = vmatpush.msra.mxu0 0.0
    %2935 = vmatpush.msra.mxu0 0.0
    %2936 = vmatpush.msra.mxu0 0.0
    %2937 = vmatpush.msra.mxu0 0.0
    %2938 = vmatpush.msra.mxu0 0.0
    %2939 = vmatpush.msra.mxu0 0.0
    %2940 = vmatpush.msra.mxu0 0.0
    %2941 = vmatpush.msra.mxu0 0.0
    %2942 = vmatpush.msra.mxu0 0.0
    %2943 = vmatpush.msra.mxu0 0.0
    %2944 = vmatpush.msra.mxu0 0.0
    %2945 = vmatpush.msra.mxu0 0.0
    %v2946 = vand.u32 %v144, 4294901760
    %v2947 = vsub.f32 %v144, %v2946
    %v2948 = vand.u32 %v2947, 4294901760
    %v2949 = vsub.f32 %v2947, %v2948
    %v2950 = vand.u32 %v2949, 4294901760
    %2951 = vmatpush.msra.mxu0 %v2950
    %v2952 = vand.u32 %v140, 4294901760
    %v2953 = vsub.f32 %v140, %v2952
    %v2954 = vand.u32 %v2953, 4294901760
    %v2955 = vsub.f32 %v2953, %v2954
    %v2956 = vand.u32 %v2955, 4294901760
    %2957 = vmatpush.msra.mxu0 %v2956
    %v2958 = vand.u32 %v136, 4294901760
    %v2959 = vsub.f32 %v136, %v2958
    %v2960 = vand.u32 %v2959, 4294901760
    %v2961 = vsub.f32 %v2959, %v2960
    %v2962 = vand.u32 %v2961, 4294901760
    %2963 = vmatpush.msra.mxu0 %v2962
    %v2964 = vand.u32 %v132, 4294901760
    %v2965 = vsub.f32 %v132, %v2964
    %v2966 = vand.u32 %v2965, 4294901760
    %v2967 = vsub.f32 %v2965, %v2966
    %v2968 = vand.u32 %v2967, 4294901760
    %2969 = vmatpush.msra.mxu0 %v2968
    %v2970 = vand.u32 %v2460, 4294901760
    %2971 = vmatmul.f32.gmra.mxu0 %v2970
    %v2972 = vpop.f32.mrf.mxu0
    %v2973 = vadd.f32 %v2924, %v2972
    %v2974 = vand.u32 %v2463, 4294901760
    %2975 = vmatmul.f32.gmra.mxu0 %v2974
    %v2976 = vpop.f32.mrf.mxu0
    %v2977 = vadd.f32 %v2932, %v2976
    %2978 = vdwg.mxu0
    %2979 = vmatpush.msra.mxu0 0.0
    %2980 = vmatpush.msra.mxu0 0.0
    %2981 = vmatpush.msra.mxu0 0.0
    %2982 = vmatpush.msra.mxu0 0.0
    %2983 = vmatpush.msra.mxu0 0.0
    %2984 = vmatpush.msra.mxu0 0.0
    %2985 = vmatpush.msra.mxu0 0.0
    %2986 = vmatpush.msra.mxu0 0.0
    %2987 = vmatpush.msra.mxu0 0.0
    %2988 = vmatpush.msra.mxu0 0.0
    %2989 = vmatpush.msra.mxu0 0.0
    %2990 = vmatpush.msra.mxu0 0.0
    %v2991 = vand.u32 %v144, 4294901760
    %v2992 = vsub.f32 %v144, %v2991
    %2993 = vmatpush.msra.mxu0 %v2992
    %v2994 = vand.u32 %v140, 4294901760
    %v2995 = vsub.f32 %v140, %v2994
    %2996 = vmatpush.msra.mxu0 %v2995
    %v2997 = vand.u32 %v136, 4294901760
    %v2998 = vsub.f32 %v136, %v2997
    %2999 = vmatpush.msra.mxu0 %v2998
    %v3000 = vand.u32 %v132, 4294901760
    %v3001 = vsub.f32 %v132, %v3000
    %3002 = vmatpush.msra.mxu0 %v3001
    %v3003 = vand.u32 %v2460, 4294901760
    %v3004 = vsub.f32 %v2460, %v3003
    %3005 = vmatmul.f32.gmra.mxu0 %v3004
    %v3006 = vpop.f32.mrf.mxu0
    %v3007 = vadd.f32 %v2973, %v3006
    %v3008 = vand.u32 %v2463, 4294901760
    %v3009 = vsub.f32 %v2463, %v3008
    %3010 = vmatmul.f32.gmra.mxu0 %v3009
    %v3011 = vpop.f32.mrf.mxu0
    %v3012 = vadd.f32 %v2977, %v3011
    %3013 = vdwg.mxu0
    %3014 = vmatpush.msra.mxu0 0.0
    %3015 = vmatpush.msra.mxu0 0.0
    %3016 = vmatpush.msra.mxu0 0.0
    %3017 = vmatpush.msra.mxu0 0.0
    %3018 = vmatpush.msra.mxu0 0.0
    %3019 = vmatpush.msra.mxu0 0.0
    %3020 = vmatpush.msra.mxu0 0.0
    %3021 = vmatpush.msra.mxu0 0.0
    %3022 = vmatpush.msra.mxu0 0.0
    %3023 = vmatpush.msra.mxu0 0.0
    %3024 = vmatpush.msra.mxu0 0.0
    %3025 = vmatpush.msra.mxu0 0.0
    %v3026 = vand.u32 %v144, 4294901760
    %3027 = vmatpush.msra.mxu0 %v3026
    %v3028 = vand.u32 %v140, 4294901760
    %3029 = vmatpush.msra.mxu0 %v3028
    %v3030 = vand.u32 %v136, 4294901760
    %3031 = vmatpush.msra.mxu0 %v3030
    %v3032 = vand.u32 %v132, 4294901760
    %3033 = vmatpush.msra.mxu0 %v3032
    %v3034 = vand.u32 %v2460, 4294901760
    %v3035 = vsub.f32 %v2460, %v3034
    %v3036 = vand.u32 %v3035, 4294901760
    %3037 = vmatmul.f32.gmra.mxu0 %v3036
    %v3038 = vpop.f32.mrf.mxu0
    %v3039 = vadd.f32 %v3007, %v3038
    %v3040 = vand.u32 %v2463, 4294901760
    %v3041 = vsub.f32 %v2463, %v3040
    %v3042 = vand.u32 %v3041, 4294901760
    %3043 = vmatmul.f32.gmra.mxu0 %v3042
    %v3044 = vpop.f32.mrf.mxu0
    %v3045 = vadd.f32 %v3012, %v3044
    %3046 = vdwg.mxu0
    %3047 = vmatpush.msra.mxu0 0.0
    %3048 = vmatpush.msra.mxu0 0.0
    %3049 = vmatpush.msra.mxu0 0.0
    %3050 = vmatpush.msra.mxu0 0.0
    %3051 = vmatpush.msra.mxu0 0.0
    %3052 = vmatpush.msra.mxu0 0.0
    %3053 = vmatpush.msra.mxu0 0.0
    %3054 = vmatpush.msra.mxu0 0.0
    %3055 = vmatpush.msra.mxu0 0.0
    %3056 = vmatpush.msra.mxu0 0.0
    %3057 = vmatpush.msra.mxu0 0.0
    %3058 = vmatpush.msra.mxu0 0.0
    %v3059 = vand.u32 %v144, 4294901760
    %v3060 = vsub.f32 %v144, %v3059
    %v3061 = vand.u32 %v3060, 4294901760
    %3062 = vmatpush.msra.mxu0 %v3061
    %v3063 = vand.u32 %v140, 4294901760
    %v3064 = vsub.f32 %v140, %v3063
    %v3065 = vand.u32 %v3064, 4294901760
    %3066 = vmatpush.msra.mxu0 %v3065
    %v3067 = vand.u32 %v136, 4294901760
    %v3068 = vsub.f32 %v136, %v3067
    %v3069 = vand.u32 %v3068, 4294901760
    %3070 = vmatpush.msra.mxu0 %v3069
    %v3071 = vand.u32 %v132, 4294901760
    %v3072 = vsub.f32 %v132, %v3071
    %v3073 = vand.u32 %v3072, 4294901760
    %3074 = vmatpush.msra.mxu0 %v3073
    %v3075 = vand.u32 %v2460, 4294901760
    %3076 = vmatmul.f32.gmra.mxu0 %v3075
    %v3077 = vpop.f32.mrf.mxu0
    %v3078 = vadd.f32 %v3039, %v3077
    %v3079 = vand.u32 %v2463, 4294901760
    %3080 = vmatmul.f32.gmra.mxu0 %v3079
    %v3081 = vpop.f32.mrf.mxu0
    %v3082 = vadd.f32 %v3045, %v3081
    %3083 = vdwg.mxu0
    %3084 = vmatpush.msra.mxu0 0.0
    %3085 = vmatpush.msra.mxu0 0.0
    %3086 = vmatpush.msra.mxu0 0.0
    %3087 = vmatpush.msra.mxu0 0.0
    %3088 = vmatpush.msra.mxu0 0.0
    %3089 = vmatpush.msra.mxu0 0.0
    %3090 = vmatpush.msra.mxu0 0.0
    %3091 = vmatpush.msra.mxu0 0.0
    %3092 = vmatpush.msra.mxu0 0.0
    %3093 = vmatpush.msra.mxu0 0.0
    %3094 = vmatpush.msra.mxu0 0.0
    %3095 = vmatpush.msra.mxu0 0.0
    %v3096 = vand.u32 %v144, 4294901760
    %3097 = vmatpush.msra.mxu0 %v3096
    %v3098 = vand.u32 %v140, 4294901760
    %3099 = vmatpush.msra.mxu0 %v3098
    %v3100 = vand.u32 %v136, 4294901760
    %3101 = vmatpush.msra.mxu0 %v3100
    %v3102 = vand.u32 %v132, 4294901760
    %3103 = vmatpush.msra.mxu0 %v3102
    %v3104 = vand.u32 %v2460, 4294901760
    %3105 = vmatmul.f32.gmra.mxu0 %v3104
    %v3106 = vpop.f32.mrf.mxu0
    %v3107 = vadd.f32 %v3078, %v3106
    %v3108 = vand.u32 %v2463, 4294901760
    %3109 = vmatmul.f32.gmra.mxu0 %v3108
    %v3110 = vpop.f32.mrf.mxu0
    %v3111 = vadd.f32 %v3082, %v3110
    %3112 = vdwg.mxu0
    %3113 = vmatpush.msra.mxu0 0.0
    %3114 = vmatpush.msra.mxu0 0.0
    %3115 = vmatpush.msra.mxu0 0.0
    %3116 = vmatpush.msra.mxu0 0.0
    %3117 = vmatpush.msra.mxu0 0.0
    %3118 = vmatpush.msra.mxu0 0.0
    %3119 = vmatpush.msra.mxu0 0.0
    %3120 = vmatpush.msra.mxu0 0.0
    %3121 = vmatpush.msra.mxu0 0.0
    %3122 = vmatpush.msra.mxu0 0.0
    %3123 = vmatpush.msra.mxu0 0.0
    %3124 = vmatpush.msra.mxu0 0.0
    %v3125 = vand.u32 %v145, 4294901760
    %3126 = vmatpush.msra.mxu0 %v3125
    %v3127 = vand.u32 %v141, 4294901760
    %3128 = vmatpush.msra.mxu0 %v3127
    %v3129 = vand.u32 %v137, 4294901760
    %3130 = vmatpush.msra.mxu0 %v3129
    %v3131 = vand.u32 %v133, 4294901760
    %3132 = vmatpush.msra.mxu0 %v3131
    %v3133 = vand.u32 %v2460, 4294901760
    %v3134 = vsub.f32 %v2460, %v3133
    %v3135 = vand.u32 %v3134, 4294901760
    %v3136 = vsub.f32 %v3134, %v3135
    %v3137 = vand.u32 %v3136, 4294901760
    %3138 = vmatmul.f32.gmra.mxu0 %v3137
    %v3139 = vpop.f32.mrf.mxu0
    %v3140 = vadd.f32 0.0, %v3139
    %v3141 = vand.u32 %v2463, 4294901760
    %v3142 = vsub.f32 %v2463, %v3141
    %v3143 = vand.u32 %v3142, 4294901760
    %v3144 = vsub.f32 %v3142, %v3143
    %v3145 = vand.u32 %v3144, 4294901760
    %3146 = vmatmul.f32.gmra.mxu0 %v3145
    %v3147 = vpop.f32.mrf.mxu0
    %v3148 = vadd.f32 0.0, %v3147
    %3149 = vdwg.mxu0
    %3150 = vmatpush.msra.mxu0 0.0
    %3151 = vmatpush.msra.mxu0 0.0
    %3152 = vmatpush.msra.mxu0 0.0
    %3153 = vmatpush.msra.mxu0 0.0
    %3154 = vmatpush.msra.mxu0 0.0
    %3155 = vmatpush.msra.mxu0 0.0
    %3156 = vmatpush.msra.mxu0 0.0
    %3157 = vmatpush.msra.mxu0 0.0
    %3158 = vmatpush.msra.mxu0 0.0
    %3159 = vmatpush.msra.mxu0 0.0
    %3160 = vmatpush.msra.mxu0 0.0
    %3161 = vmatpush.msra.mxu0 0.0
    %v3162 = vand.u32 %v145, 4294901760
    %v3163 = vsub.f32 %v145, %v3162
    %v3164 = vand.u32 %v3163, 4294901760
    %v3165 = vsub.f32 %v3163, %v3164
    %v3166 = vand.u32 %v3165, 4294901760
    %3167 = vmatpush.msra.mxu0 %v3166
    %v3168 = vand.u32 %v141, 4294901760
    %v3169 = vsub.f32 %v141, %v3168
    %v3170 = vand.u32 %v3169, 4294901760
    %v3171 = vsub.f32 %v3169, %v3170
    %v3172 = vand.u32 %v3171, 4294901760
    %3173 = vmatpush.msra.mxu0 %v3172
    %v3174 = vand.u32 %v137, 4294901760
    %v3175 = vsub.f32 %v137, %v3174
    %v3176 = vand.u32 %v3175, 4294901760
    %v3177 = vsub.f32 %v3175, %v3176
    %v3178 = vand.u32 %v3177, 4294901760
    %3179 = vmatpush.msra.mxu0 %v3178
    %v3180 = vand.u32 %v133, 4294901760
    %v3181 = vsub.f32 %v133, %v3180
    %v3182 = vand.u32 %v3181, 4294901760
    %v3183 = vsub.f32 %v3181, %v3182
    %v3184 = vand.u32 %v3183, 4294901760
    %3185 = vmatpush.msra.mxu0 %v3184
    %v3186 = vand.u32 %v2460, 4294901760
    %3187 = vmatmul.f32.gmra.mxu0 %v3186
    %v3188 = vpop.f32.mrf.mxu0
    %v3189 = vadd.f32 %v3140, %v3188
    %v3190 = vand.u32 %v2463, 4294901760
    %3191 = vmatmul.f32.gmra.mxu0 %v3190
    %v3192 = vpop.f32.mrf.mxu0
    %v3193 = vadd.f32 %v3148, %v3192
    %3194 = vdwg.mxu0
    %3195 = vmatpush.msra.mxu0 0.0
    %3196 = vmatpush.msra.mxu0 0.0
    %3197 = vmatpush.msra.mxu0 0.0
    %3198 = vmatpush.msra.mxu0 0.0
    %3199 = vmatpush.msra.mxu0 0.0
    %3200 = vmatpush.msra.mxu0 0.0
    %3201 = vmatpush.msra.mxu0 0.0
    %3202 = vmatpush.msra.mxu0 0.0
    %3203 = vmatpush.msra.mxu0 0.0
    %3204 = vmatpush.msra.mxu0 0.0
    %3205 = vmatpush.msra.mxu0 0.0
    %3206 = vmatpush.msra.mxu0 0.0
    %v3207 = vand.u32 %v145, 4294901760
    %v3208 = vsub.f32 %v145, %v3207
    %3209 = vmatpush.msra.mxu0 %v3208
    %v3210 = vand.u32 %v141, 4294901760
    %v3211 = vsub.f32 %v141, %v3210
    %3212 = vmatpush.msra.mxu0 %v3211
    %v3213 = vand.u32 %v137, 4294901760
    %v3214 = vsub.f32 %v137, %v3213
    %3215 = vmatpush.msra.mxu0 %v3214
    %v3216 = vand.u32 %v133, 4294901760
    %v3217 = vsub.f32 %v133, %v3216
    %3218 = vmatpush.msra.mxu0 %v3217
    %v3219 = vand.u32 %v2460, 4294901760
    %v3220 = vsub.f32 %v2460, %v3219
    %3221 = vmatmul.f32.gmra.mxu0 %v3220
    %v3222 = vpop.f32.mrf.mxu0
    %v3223 = vadd.f32 %v3189, %v3222
    %v3224 = vand.u32 %v2463, 4294901760
    %v3225 = vsub.f32 %v2463, %v3224
    %3226 = vmatmul.f32.gmra.mxu0 %v3225
    %v3227 = vpop.f32.mrf.mxu0
    %v3228 = vadd.f32 %v3193, %v3227
    %3229 = vdwg.mxu0
    %3230 = vmatpush.msra.mxu0 0.0
    %3231 = vmatpush.msra.mxu0 0.0
    %3232 = vmatpush.msra.mxu0 0.0
    %3233 = vmatpush.msra.mxu0 0.0
    %3234 = vmatpush.msra.mxu0 0.0
    %3235 = vmatpush.msra.mxu0 0.0
    %3236 = vmatpush.msra.mxu0 0.0
    %3237 = vmatpush.msra.mxu0 0.0
    %3238 = vmatpush.msra.mxu0 0.0
    %3239 = vmatpush.msra.mxu0 0.0
    %3240 = vmatpush.msra.mxu0 0.0
    %3241 = vmatpush.msra.mxu0 0.0
    %v3242 = vand.u32 %v145, 4294901760
    %3243 = vmatpush.msra.mxu0 %v3242
    %v3244 = vand.u32 %v141, 4294901760
    %3245 = vmatpush.msra.mxu0 %v3244
    %v3246 = vand.u32 %v137, 4294901760
    %3247 = vmatpush.msra.mxu0 %v3246
    %v3248 = vand.u32 %v133, 4294901760
    %3249 = vmatpush.msra.mxu0 %v3248
    %v3250 = vand.u32 %v2460, 4294901760
    %v3251 = vsub.f32 %v2460, %v3250
    %v3252 = vand.u32 %v3251, 4294901760
    %3253 = vmatmul.f32.gmra.mxu0 %v3252
    %v3254 = vpop.f32.mrf.mxu0
    %v3255 = vadd.f32 %v3223, %v3254
    %v3256 = vand.u32 %v2463, 4294901760
    %v3257 = vsub.f32 %v2463, %v3256
    %v3258 = vand.u32 %v3257, 4294901760
    %3259 = vmatmul.f32.gmra.mxu0 %v3258
    %v3260 = vpop.f32.mrf.mxu0
    %v3261 = vadd.f32 %v3228, %v3260
    %3262 = vdwg.mxu0
    %3263 = vmatpush.msra.mxu0 0.0
    %3264 = vmatpush.msra.mxu0 0.0
    %3265 = vmatpush.msra.mxu0 0.0
    %3266 = vmatpush.msra.mxu0 0.0
    %3267 = vmatpush.msra.mxu0 0.0
    %3268 = vmatpush.msra.mxu0 0.0
    %3269 = vmatpush.msra.mxu0 0.0
    %3270 = vmatpush.msra.mxu0 0.0
    %3271 = vmatpush.msra.mxu0 0.0
    %3272 = vmatpush.msra.mxu0 0.0
    %3273 = vmatpush.msra.mxu0 0.0
    %3274 = vmatpush.msra.mxu0 0.0
    %v3275 = vand.u32 %v145, 4294901760
    %v3276 = vsub.f32 %v145, %v3275
    %v3277 = vand.u32 %v3276, 4294901760
    %3278 = vmatpush.msra.mxu0 %v3277
    %v3279 = vand.u32 %v141, 4294901760
    %v3280 = vsub.f32 %v141, %v3279
    %v3281 = vand.u32 %v3280, 4294901760
    %3282 = vmatpush.msra.mxu0 %v3281
    %v3283 = vand.u32 %v137, 4294901760
    %v3284 = vsub.f32 %v137, %v3283
    %v3285 = vand.u32 %v3284, 4294901760
    %3286 = vmatpush.msra.mxu0 %v3285
    %v3287 = vand.u32 %v133, 4294901760
    %v3288 = vsub.f32 %v133, %v3287
    %v3289 = vand.u32 %v3288, 4294901760
    %3290 = vmatpush.msra.mxu0 %v3289
    %v3291 = vand.u32 %v2460, 4294901760
    %3292 = vmatmul.f32.gmra.mxu0 %v3291
    %v3293 = vpop.f32.mrf.mxu0
    %v3294 = vadd.f32 %v3255, %v3293
    %v3295 = vand.u32 %v2463, 4294901760
    %3296 = vmatmul.f32.gmra.mxu0 %v3295
    %v3297 = vpop.f32.mrf.mxu0
    %v3298 = vadd.f32 %v3261, %v3297
    %3299 = vdwg.mxu0
    %3300 = vmatpush.msra.mxu0 0.0
    %3301 = vmatpush.msra.mxu0 0.0
    %3302 = vmatpush.msra.mxu0 0.0
    %3303 = vmatpush.msra.mxu0 0.0
    %3304 = vmatpush.msra.mxu0 0.0
    %3305 = vmatpush.msra.mxu0 0.0
    %3306 = vmatpush.msra.mxu0 0.0
    %3307 = vmatpush.msra.mxu0 0.0
    %3308 = vmatpush.msra.mxu0 0.0
    %3309 = vmatpush.msra.mxu0 0.0
    %3310 = vmatpush.msra.mxu0 0.0
    %3311 = vmatpush.msra.mxu0 0.0
    %v3312 = vand.u32 %v145, 4294901760
    %3313 = vmatpush.msra.mxu0 %v3312
    %v3314 = vand.u32 %v141, 4294901760
    %3315 = vmatpush.msra.mxu0 %v3314
    %v3316 = vand.u32 %v137, 4294901760
    %3317 = vmatpush.msra.mxu0 %v3316
    %v3318 = vand.u32 %v133, 4294901760
    %3319 = vmatpush.msra.mxu0 %v3318
    %v3320 = vand.u32 %v2460, 4294901760
    %3321 = vmatmul.f32.gmra.mxu0 %v3320
    %v3322 = vpop.f32.mrf.mxu0
    %v3323 = vadd.f32 %v3294, %v3322
    %v3324 = vand.u32 %v2463, 4294901760
    %3325 = vmatmul.f32.gmra.mxu0 %v3324
    %v3326 = vpop.f32.mrf.mxu0
    %v3327 = vadd.f32 %v3298, %v3326
    %3328 = vdwg.mxu0
    %v3329 = vmul.f32 %v1649, %v2675
    %v3330 = vmul.f32 %v1917, %v2891
    %v3331 = vmul.f32 %v2185, %v3107
    %v3332 = vmul.f32 %v2453, %v3323
    %v3333 = vmul.f32 %v1653, %v2679
    %v3334 = vmul.f32 %v1921, %v2895
    %v3335 = vmul.f32 %v2189, %v3111
    %v3336 = vmul.f32 %v2457, %v3327
    %3337 = vmatpush.msra.mxu0 0.0
    %3338 = vmatpush.msra.mxu0 0.0
    %3339 = vmatpush.msra.mxu0 0.0
    %3340 = vmatpush.msra.mxu0 0.0
    %3341 = vmatpush.msra.mxu0 0.0
    %3342 = vmatpush.msra.mxu0 0.0
    %3343 = vmatpush.msra.mxu0 0.0
    %3344 = vmatpush.msra.mxu0 0.0
    %3345 = vmatpush.msra.mxu0 0.0
    %3346 = vmatpush.msra.mxu0 0.0
    %3347 = vmatpush.msra.mxu0 0.0
    %3348 = vmatpush.msra.mxu0 0.0
    %3349 = vmatpush.msra.mxu0 0.0
    %3350 = vmatpush.msra.mxu0 0.0
    %v3351 = vand.u32 %v3333, 4294901760
    %3352 = vmatpush.msra.mxu0 %v3351
    %v3353 = vand.u32 %v3329, 4294901760
    %3354 = vmatpush.msra.mxu0 %v3353
    %v3355 = vand.u32 %v718, 4294901760
    %v3356 = vsub.f32 %v718, %v3355
    %v3357 = vand.u32 %v3356, 4294901760
    %v3358 = vsub.f32 %v3356, %v3357
    %v3359 = vand.u32 %v3358, 4294901760
    %3360 = vmatmul.f32.gmra.mxu0 %v3359
    %v3361 = vpop.f32.mrf.mxu0
    %v3362 = vadd.f32 0.0, %v3361
    %3363 = vdwg.mxu0
    %3364 = vmatpush.msra.mxu0 0.0
    %3365 = vmatpush.msra.mxu0 0.0
    %3366 = vmatpush.msra.mxu0 0.0
    %3367 = vmatpush.msra.mxu0 0.0
    %3368 = vmatpush.msra.mxu0 0.0
    %3369 = vmatpush.msra.mxu0 0.0
    %3370 = vmatpush.msra.mxu0 0.0
    %3371 = vmatpush.msra.mxu0 0.0
    %3372 = vmatpush.msra.mxu0 0.0
    %3373 = vmatpush.msra.mxu0 0.0
    %3374 = vmatpush.msra.mxu0 0.0
    %3375 = vmatpush.msra.mxu0 0.0
    %3376 = vmatpush.msra.mxu0 0.0
    %3377 = vmatpush.msra.mxu0 0.0
    %v3378 = vand.u32 %v3333, 4294901760
    %v3379 = vsub.f32 %v3333, %v3378
    %v3380 = vand.u32 %v3379, 4294901760
    %v3381 = vsub.f32 %v3379, %v3380
    %v3382 = vand.u32 %v3381, 4294901760
    %3383 = vmatpush.msra.mxu0 %v3382
    %v3384 = vand.u32 %v3329, 4294901760
    %v3385 = vsub.f32 %v3329, %v3384
    %v3386 = vand.u32 %v3385, 4294901760
    %v3387 = vsub.f32 %v3385, %v3386
    %v3388 = vand.u32 %v3387, 4294901760
    %3389 = vmatpush.msra.mxu0 %v3388
    %v3390 = vand.u32 %v718, 4294901760
    %3391 = vmatmul.f32.gmra.mxu0 %v3390
    %v3392 = vpop.f32.mrf.mxu0
    %v3393 = vadd.f32 %v3362, %v3392
    %3394 = vdwg.mxu0
    %3395 = vmatpush.msra.mxu0 0.0
    %3396 = vmatpush.msra.mxu0 0.0
    %3397 = vmatpush.msra.mxu0 0.0
    %3398 = vmatpush.msra.mxu0 0.0
    %3399 = vmatpush.msra.mxu0 0.0
    %3400 = vmatpush.msra.mxu0 0.0
    %3401 = vmatpush.msra.mxu0 0.0
    %3402 = vmatpush.msra.mxu0 0.0
    %3403 = vmatpush.msra.mxu0 0.0
    %3404 = vmatpush.msra.mxu0 0.0
    %3405 = vmatpush.msra.mxu0 0.0
    %3406 = vmatpush.msra.mxu0 0.0
    %3407 = vmatpush.msra.mxu0 0.0
    %3408 = vmatpush.msra.mxu0 0.0
    %v3409 = vand.u32 %v3333, 4294901760
    %v3410 = vsub.f32 %v3333, %v3409
    %3411 = vmatpush.msra.mxu0 %v3410
    %v3412 = vand.u32 %v3329, 4294901760
    %v3413 = vsub.f32 %v3329, %v3412
    %3414 = vmatpush.msra.mxu0 %v3413
    %v3415 = vand.u32 %v718, 4294901760
    %v3416 = vsub.f32 %v718, %v3415
    %3417 = vmatmul.f32.gmra.mxu0 %v3416
    %v3418 = vpop.f32.mrf.mxu0
    %v3419 = vadd.f32 %v3393, %v3418
    %3420 = vdwg.mxu0
    %3421 = vmatpush.msra.mxu0 0.0
    %3422 = vmatpush.msra.mxu0 0.0
    %3423 = vmatpush.msra.mxu0 0.0
    %3424 = vmatpush.msra.mxu0 0.0
    %3425 = vmatpush.msra.mxu0 0.0
    %3426 = vmatpush.msra.mxu0 0.0
    %3427 = vmatpush.msra.mxu0 0.0
    %3428 = vmatpush.msra.mxu0 0.0
    %3429 = vmatpush.msra.mxu0 0.0
    %3430 = vmatpush.msra.mxu0 0.0
    %3431 = vmatpush.msra.mxu0 0.0
    %3432 = vmatpush.msra.mxu0 0.0
    %3433 = vmatpush.msra.mxu0 0.0
    %3434 = vmatpush.msra.mxu0 0.0
    %v3435 = vand.u32 %v3333, 4294901760
    %3436 = vmatpush.msra.mxu0 %v3435
    %v3437 = vand.u32 %v3329, 4294901760
    %3438 = vmatpush.msra.mxu0 %v3437
    %v3439 = vand.u32 %v718, 4294901760
    %v3440 = vsub.f32 %v718, %v3439
    %v3441 = vand.u32 %v3440, 4294901760
    %3442 = vmatmul.f32.gmra.mxu0 %v3441
    %v3443 = vpop.f32.mrf.mxu0
    %v3444 = vadd.f32 %v3419, %v3443
    %3445 = vdwg.mxu0
    %3446 = vmatpush.msra.mxu0 0.0
    %3447 = vmatpush.msra.mxu0 0.0
    %3448 = vmatpush.msra.mxu0 0.0
    %3449 = vmatpush.msra.mxu0 0.0
    %3450 = vmatpush.msra.mxu0 0.0
    %3451 = vmatpush.msra.mxu0 0.0
    %3452 = vmatpush.msra.mxu0 0.0
    %3453 = vmatpush.msra.mxu0 0.0
    %3454 = vmatpush.msra.mxu0 0.0
    %3455 = vmatpush.msra.mxu0 0.0
    %3456 = vmatpush.msra.mxu0 0.0
    %3457 = vmatpush.msra.mxu0 0.0
    %3458 = vmatpush.msra.mxu0 0.0
    %3459 = vmatpush.msra.mxu0 0.0
    %v3460 = vand.u32 %v3333, 4294901760
    %v3461 = vsub.f32 %v3333, %v3460
    %v3462 = vand.u32 %v3461, 4294901760
    %3463 = vmatpush.msra.mxu0 %v3462
    %v3464 = vand.u32 %v3329, 4294901760
    %v3465 = vsub.f32 %v3329, %v3464
    %v3466 = vand.u32 %v3465, 4294901760
    %3467 = vmatpush.msra.mxu0 %v3466
    %v3468 = vand.u32 %v718, 4294901760
    %3469 = vmatmul.f32.gmra.mxu0 %v3468
    %v3470 = vpop.f32.mrf.mxu0
    %v3471 = vadd.f32 %v3444, %v3470
    %3472 = vdwg.mxu0
    %3473 = vmatpush.msra.mxu0 0.0
    %3474 = vmatpush.msra.mxu0 0.0
    %3475 = vmatpush.msra.mxu0 0.0
    %3476 = vmatpush.msra.mxu0 0.0
    %3477 = vmatpush.msra.mxu0 0.0
    %3478 = vmatpush.msra.mxu0 0.0
    %3479 = vmatpush.msra.mxu0 0.0
    %3480 = vmatpush.msra.mxu0 0.0
    %3481 = vmatpush.msra.mxu0 0.0
    %3482 = vmatpush.msra.mxu0 0.0
    %3483 = vmatpush.msra.mxu0 0.0
    %3484 = vmatpush.msra.mxu0 0.0
    %3485 = vmatpush.msra.mxu0 0.0
    %3486 = vmatpush.msra.mxu0 0.0
    %v3487 = vand.u32 %v3333, 4294901760
    %3488 = vmatpush.msra.mxu0 %v3487
    %v3489 = vand.u32 %v3329, 4294901760
    %3490 = vmatpush.msra.mxu0 %v3489
    %v3491 = vand.u32 %v718, 4294901760
    %3492 = vmatmul.f32.gmra.mxu0 %v3491
    %v3493 = vpop.f32.mrf.mxu0
    %v3494 = vadd.f32 %v3471, %v3493
    %3495 = vdwg.mxu0
    %3496 = vmatpush.msra.mxu0 0.0
    %3497 = vmatpush.msra.mxu0 0.0
    %3498 = vmatpush.msra.mxu0 0.0
    %3499 = vmatpush.msra.mxu0 0.0
    %3500 = vmatpush.msra.mxu0 0.0
    %3501 = vmatpush.msra.mxu0 0.0
    %3502 = vmatpush.msra.mxu0 0.0
    %3503 = vmatpush.msra.mxu0 0.0
    %3504 = vmatpush.msra.mxu0 0.0
    %3505 = vmatpush.msra.mxu0 0.0
    %3506 = vmatpush.msra.mxu0 0.0
    %3507 = vmatpush.msra.mxu0 0.0
    %3508 = vmatpush.msra.mxu0 0.0
    %3509 = vmatpush.msra.mxu0 0.0
    %v3510 = vand.u32 %v3334, 4294901760
    %3511 = vmatpush.msra.mxu0 %v3510
    %v3512 = vand.u32 %v3330, 4294901760
    %3513 = vmatpush.msra.mxu0 %v3512
    %v3514 = vand.u32 %v718, 4294901760
    %v3515 = vsub.f32 %v718, %v3514
    %v3516 = vand.u32 %v3515, 4294901760
    %v3517 = vsub.f32 %v3515, %v3516
    %v3518 = vand.u32 %v3517, 4294901760
    %3519 = vmatmul.f32.gmra.mxu0 %v3518
    %v3520 = vpop.f32.mrf.mxu0
    %v3521 = vadd.f32 0.0, %v3520
    %3522 = vdwg.mxu0
    %3523 = vmatpush.msra.mxu0 0.0
    %3524 = vmatpush.msra.mxu0 0.0
    %3525 = vmatpush.msra.mxu0 0.0
    %3526 = vmatpush.msra.mxu0 0.0
    %3527 = vmatpush.msra.mxu0 0.0
    %3528 = vmatpush.msra.mxu0 0.0
    %3529 = vmatpush.msra.mxu0 0.0
    %3530 = vmatpush.msra.mxu0 0.0
    %3531 = vmatpush.msra.mxu0 0.0
    %3532 = vmatpush.msra.mxu0 0.0
    %3533 = vmatpush.msra.mxu0 0.0
    %3534 = vmatpush.msra.mxu0 0.0
    %3535 = vmatpush.msra.mxu0 0.0
    %3536 = vmatpush.msra.mxu0 0.0
    %v3537 = vand.u32 %v3334, 4294901760
    %v3538 = vsub.f32 %v3334, %v3537
    %v3539 = vand.u32 %v3538, 4294901760
    %v3540 = vsub.f32 %v3538, %v3539
    %v3541 = vand.u32 %v3540, 4294901760
    %3542 = vmatpush.msra.mxu0 %v3541
    %v3543 = vand.u32 %v3330, 4294901760
    %v3544 = vsub.f32 %v3330, %v3543
    %v3545 = vand.u32 %v3544, 4294901760
    %v3546 = vsub.f32 %v3544, %v3545
    %v3547 = vand.u32 %v3546, 4294901760
    %3548 = vmatpush.msra.mxu0 %v3547
    %v3549 = vand.u32 %v718, 4294901760
    %3550 = vmatmul.f32.gmra.mxu0 %v3549
    %v3551 = vpop.f32.mrf.mxu0
    %v3552 = vadd.f32 %v3521, %v3551
    %3553 = vdwg.mxu0
    %3554 = vmatpush.msra.mxu0 0.0
    %3555 = vmatpush.msra.mxu0 0.0
    %3556 = vmatpush.msra.mxu0 0.0
    %3557 = vmatpush.msra.mxu0 0.0
    %3558 = vmatpush.msra.mxu0 0.0
    %3559 = vmatpush.msra.mxu0 0.0
    %3560 = vmatpush.msra.mxu0 0.0
    %3561 = vmatpush.msra.mxu0 0.0
    %3562 = vmatpush.msra.mxu0 0.0
    %3563 = vmatpush.msra.mxu0 0.0
    %3564 = vmatpush.msra.mxu0 0.0
    %3565 = vmatpush.msra.mxu0 0.0
    %3566 = vmatpush.msra.mxu0 0.0
    %3567 = vmatpush.msra.mxu0 0.0
    %v3568 = vand.u32 %v3334, 4294901760
    %v3569 = vsub.f32 %v3334, %v3568
    %3570 = vmatpush.msra.mxu0 %v3569
    %v3571 = vand.u32 %v3330, 4294901760
    %v3572 = vsub.f32 %v3330, %v3571
    %3573 = vmatpush.msra.mxu0 %v3572
    %v3574 = vand.u32 %v718, 4294901760
    %v3575 = vsub.f32 %v718, %v3574
    %3576 = vmatmul.f32.gmra.mxu0 %v3575
    %v3577 = vpop.f32.mrf.mxu0
    %v3578 = vadd.f32 %v3552, %v3577
    %3579 = vdwg.mxu0
    %3580 = vmatpush.msra.mxu0 0.0
    %3581 = vmatpush.msra.mxu0 0.0
    %3582 = vmatpush.msra.mxu0 0.0
    %3583 = vmatpush.msra.mxu0 0.0
    %3584 = vmatpush.msra.mxu0 0.0
    %3585 = vmatpush.msra.mxu0 0.0
    %3586 = vmatpush.msra.mxu0 0.0
    %3587 = vmatpush.msra.mxu0 0.0
    %3588 = vmatpush.msra.mxu0 0.0
    %3589 = vmatpush.msra.mxu0 0.0
    %3590 = vmatpush.msra.mxu0 0.0
    %3591 = vmatpush.msra.mxu0 0.0
    %3592 = vmatpush.msra.mxu0 0.0
    %3593 = vmatpush.msra.mxu0 0.0
    %v3594 = vand.u32 %v3334, 4294901760
    %3595 = vmatpush.msra.mxu0 %v3594
    %v3596 = vand.u32 %v3330, 4294901760
    %3597 = vmatpush.msra.mxu0 %v3596
    %v3598 = vand.u32 %v718, 4294901760
    %v3599 = vsub.f32 %v718, %v3598
    %v3600 = vand.u32 %v3599, 4294901760
    %3601 = vmatmul.f32.gmra.mxu0 %v3600
    %v3602 = vpop.f32.mrf.mxu0
    %v3603 = vadd.f32 %v3578, %v3602
    %3604 = vdwg.mxu0
    %3605 = vmatpush.msra.mxu0 0.0
    %3606 = vmatpush.msra.mxu0 0.0
    %3607 = vmatpush.msra.mxu0 0.0
    %3608 = vmatpush.msra.mxu0 0.0
    %3609 = vmatpush.msra.mxu0 0.0
    %3610 = vmatpush.msra.mxu0 0.0
    %3611 = vmatpush.msra.mxu0 0.0
    %3612 = vmatpush.msra.mxu0 0.0
    %3613 = vmatpush.msra.mxu0 0.0
    %3614 = vmatpush.msra.mxu0 0.0
    %3615 = vmatpush.msra.mxu0 0.0
    %3616 = vmatpush.msra.mxu0 0.0
    %3617 = vmatpush.msra.mxu0 0.0
    %3618 = vmatpush.msra.mxu0 0.0
    %v3619 = vand.u32 %v3334, 4294901760
    %v3620 = vsub.f32 %v3334, %v3619
    %v3621 = vand.u32 %v3620, 4294901760
    %3622 = vmatpush.msra.mxu0 %v3621
    %v3623 = vand.u32 %v3330, 4294901760
    %v3624 = vsub.f32 %v3330, %v3623
    %v3625 = vand.u32 %v3624, 4294901760
    %3626 = vmatpush.msra.mxu0 %v3625
    %v3627 = vand.u32 %v718, 4294901760
    %3628 = vmatmul.f32.gmra.mxu0 %v3627
    %v3629 = vpop.f32.mrf.mxu0
    %v3630 = vadd.f32 %v3603, %v3629
    %3631 = vdwg.mxu0
    %3632 = vmatpush.msra.mxu0 0.0
    %3633 = vmatpush.msra.mxu0 0.0
    %3634 = vmatpush.msra.mxu0 0.0
    %3635 = vmatpush.msra.mxu0 0.0
    %3636 = vmatpush.msra.mxu0 0.0
    %3637 = vmatpush.msra.mxu0 0.0
    %3638 = vmatpush.msra.mxu0 0.0
    %3639 = vmatpush.msra.mxu0 0.0
    %3640 = vmatpush.msra.mxu0 0.0
    %3641 = vmatpush.msra.mxu0 0.0
    %3642 = vmatpush.msra.mxu0 0.0
    %3643 = vmatpush.msra.mxu0 0.0
    %3644 = vmatpush.msra.mxu0 0.0
    %3645 = vmatpush.msra.mxu0 0.0
    %v3646 = vand.u32 %v3334, 4294901760
    %3647 = vmatpush.msra.mxu0 %v3646
    %v3648 = vand.u32 %v3330, 4294901760
    %3649 = vmatpush.msra.mxu0 %v3648
    %v3650 = vand.u32 %v718, 4294901760
    %3651 = vmatmul.f32.gmra.mxu0 %v3650
    %v3652 = vpop.f32.mrf.mxu0
    %v3653 = vadd.f32 %v3630, %v3652
    %3654 = vdwg.mxu0
    %3655 = vmatpush.msra.mxu0 0.0
    %3656 = vmatpush.msra.mxu0 0.0
    %3657 = vmatpush.msra.mxu0 0.0
    %3658 = vmatpush.msra.mxu0 0.0
    %3659 = vmatpush.msra.mxu0 0.0
    %3660 = vmatpush.msra.mxu0 0.0
    %3661 = vmatpush.msra.mxu0 0.0
    %3662 = vmatpush.msra.mxu0 0.0
    %3663 = vmatpush.msra.mxu0 0.0
    %3664 = vmatpush.msra.mxu0 0.0
    %3665 = vmatpush.msra.mxu0 0.0
    %3666 = vmatpush.msra.mxu0 0.0
    %3667 = vmatpush.msra.mxu0 0.0
    %3668 = vmatpush.msra.mxu0 0.0
    %v3669 = vand.u32 %v3335, 4294901760
    %3670 = vmatpush.msra.mxu0 %v3669
    %v3671 = vand.u32 %v3331, 4294901760
    %3672 = vmatpush.msra.mxu0 %v3671
    %v3673 = vand.u32 %v718, 4294901760
    %v3674 = vsub.f32 %v718, %v3673
    %v3675 = vand.u32 %v3674, 4294901760
    %v3676 = vsub.f32 %v3674, %v3675
    %v3677 = vand.u32 %v3676, 4294901760
    %3678 = vmatmul.f32.gmra.mxu0 %v3677
    %v3679 = vpop.f32.mrf.mxu0
    %v3680 = vadd.f32 0.0, %v3679
    %3681 = vdwg.mxu0
    %3682 = vmatpush.msra.mxu0 0.0
    %3683 = vmatpush.msra.mxu0 0.0
    %3684 = vmatpush.msra.mxu0 0.0
    %3685 = vmatpush.msra.mxu0 0.0
    %3686 = vmatpush.msra.mxu0 0.0
    %3687 = vmatpush.msra.mxu0 0.0
    %3688 = vmatpush.msra.mxu0 0.0
    %3689 = vmatpush.msra.mxu0 0.0
    %3690 = vmatpush.msra.mxu0 0.0
    %3691 = vmatpush.msra.mxu0 0.0
    %3692 = vmatpush.msra.mxu0 0.0
    %3693 = vmatpush.msra.mxu0 0.0
    %3694 = vmatpush.msra.mxu0 0.0
    %3695 = vmatpush.msra.mxu0 0.0
    %v3696 = vand.u32 %v3335, 4294901760
    %v3697 = vsub.f32 %v3335, %v3696
    %v3698 = vand.u32 %v3697, 4294901760
    %v3699 = vsub.f32 %v3697, %v3698
    %v3700 = vand.u32 %v3699, 4294901760
    %3701 = vmatpush.msra.mxu0 %v3700
    %v3702 = vand.u32 %v3331, 4294901760
    %v3703 = vsub.f32 %v3331, %v3702
    %v3704 = vand.u32 %v3703, 4294901760
    %v3705 = vsub.f32 %v3703, %v3704
    %v3706 = vand.u32 %v3705, 4294901760
    %3707 = vmatpush.msra.mxu0 %v3706
    %v3708 = vand.u32 %v718, 4294901760
    %3709 = vmatmul.f32.gmra.mxu0 %v3708
    %v3710 = vpop.f32.mrf.mxu0
    %v3711 = vadd.f32 %v3680, %v3710
    %3712 = vdwg.mxu0
    %3713 = vmatpush.msra.mxu0 0.0
    %3714 = vmatpush.msra.mxu0 0.0
    %3715 = vmatpush.msra.mxu0 0.0
    %3716 = vmatpush.msra.mxu0 0.0
    %3717 = vmatpush.msra.mxu0 0.0
    %3718 = vmatpush.msra.mxu0 0.0
    %3719 = vmatpush.msra.mxu0 0.0
    %3720 = vmatpush.msra.mxu0 0.0
    %3721 = vmatpush.msra.mxu0 0.0
    %3722 = vmatpush.msra.mxu0 0.0
    %3723 = vmatpush.msra.mxu0 0.0
    %3724 = vmatpush.msra.mxu0 0.0
    %3725 = vmatpush.msra.mxu0 0.0
    %3726 = vmatpush.msra.mxu0 0.0
    %v3727 = vand.u32 %v3335, 4294901760
    %v3728 = vsub.f32 %v3335, %v3727
    %3729 = vmatpush.msra.mxu0 %v3728
    %v3730 = vand.u32 %v3331, 4294901760
    %v3731 = vsub.f32 %v3331, %v3730
    %3732 = vmatpush.msra.mxu0 %v3731
    %v3733 = vand.u32 %v718, 4294901760
    %v3734 = vsub.f32 %v718, %v3733
    %3735 = vmatmul.f32.gmra.mxu0 %v3734
    %v3736 = vpop.f32.mrf.mxu0
    %v3737 = vadd.f32 %v3711, %v3736
    %3738 = vdwg.mxu0
    %3739 = vmatpush.msra.mxu0 0.0
    %3740 = vmatpush.msra.mxu0 0.0
    %3741 = vmatpush.msra.mxu0 0.0
    %3742 = vmatpush.msra.mxu0 0.0
    %3743 = vmatpush.msra.mxu0 0.0
    %3744 = vmatpush.msra.mxu0 0.0
    %3745 = vmatpush.msra.mxu0 0.0
    %3746 = vmatpush.msra.mxu0 0.0
    %3747 = vmatpush.msra.mxu0 0.0
    %3748 = vmatpush.msra.mxu0 0.0
    %3749 = vmatpush.msra.mxu0 0.0
    %3750 = vmatpush.msra.mxu0 0.0
    %3751 = vmatpush.msra.mxu0 0.0
    %3752 = vmatpush.msra.mxu0 0.0
    %v3753 = vand.u32 %v3335, 4294901760
    %3754 = vmatpush.msra.mxu0 %v3753
    %v3755 = vand.u32 %v3331, 4294901760
    %3756 = vmatpush.msra.mxu0 %v3755
    %v3757 = vand.u32 %v718, 4294901760
    %v3758 = vsub.f32 %v718, %v3757
    %v3759 = vand.u32 %v3758, 4294901760
    %3760 = vmatmul.f32.gmra.mxu0 %v3759
    %v3761 = vpop.f32.mrf.mxu0
    %v3762 = vadd.f32 %v3737, %v3761
    %3763 = vdwg.mxu0
    %3764 = vmatpush.msra.mxu0 0.0
    %3765 = vmatpush.msra.mxu0 0.0
    %3766 = vmatpush.msra.mxu0 0.0
    %3767 = vmatpush.msra.mxu0 0.0
    %3768 = vmatpush.msra.mxu0 0.0
    %3769 = vmatpush.msra.mxu0 0.0
    %3770 = vmatpush.msra.mxu0 0.0
    %3771 = vmatpush.msra.mxu0 0.0
    %3772 = vmatpush.msra.mxu0 0.0
    %3773 = vmatpush.msra.mxu0 0.0
    %3774 = vmatpush.msra.mxu0 0.0
    %3775 = vmatpush.msra.mxu0 0.0
    %3776 = vmatpush.msra.mxu0 0.0
    %3777 = vmatpush.msra.mxu0 0.0
    %v3778 = vand.u32 %v3335, 4294901760
    %v3779 = vsub.f32 %v3335, %v3778
    %v3780 = vand.u32 %v3779, 4294901760
    %3781 = vmatpush.msra.mxu0 %v3780
    %v3782 = vand.u32 %v3331, 4294901760
    %v3783 = vsub.f32 %v3331, %v3782
    %v3784 = vand.u32 %v3783, 4294901760
    %3785 = vmatpush.msra.mxu0 %v3784
    %v3786 = vand.u32 %v718, 4294901760
    %3787 = vmatmul.f32.gmra.mxu0 %v3786
    %v3788 = vpop.f32.mrf.mxu0
    %v3789 = vadd.f32 %v3762, %v3788
    %3790 = vdwg.mxu0
    %3791 = vmatpush.msra.mxu0 0.0
    %3792 = vmatpush.msra.mxu0 0.0
    %3793 = vmatpush.msra.mxu0 0.0
    %3794 = vmatpush.msra.mxu0 0.0
    %3795 = vmatpush.msra.mxu0 0.0
    %3796 = vmatpush.msra.mxu0 0.0
    %3797 = vmatpush.msra.mxu0 0.0
    %3798 = vmatpush.msra.mxu0 0.0
    %3799 = vmatpush.msra.mxu0 0.0
    %3800 = vmatpush.msra.mxu0 0.0
    %3801 = vmatpush.msra.mxu0 0.0
    %3802 = vmatpush.msra.mxu0 0.0
    %3803 = vmatpush.msra.mxu0 0.0
    %3804 = vmatpush.msra.mxu0 0.0
    %v3805 = vand.u32 %v3335, 4294901760
    %3806 = vmatpush.msra.mxu0 %v3805
    %v3807 = vand.u32 %v3331, 4294901760
    %3808 = vmatpush.msra.mxu0 %v3807
    %v3809 = vand.u32 %v718, 4294901760
    %3810 = vmatmul.f32.gmra.mxu0 %v3809
    %v3811 = vpop.f32.mrf.mxu0
    %v3812 = vadd.f32 %v3789, %v3811
    %3813 = vdwg.mxu0
    %3814 = vmatpush.msra.mxu0 0.0
    %3815 = vmatpush.msra.mxu0 0.0
    %3816 = vmatpush.msra.mxu0 0.0
    %3817 = vmatpush.msra.mxu0 0.0
    %3818 = vmatpush.msra.mxu0 0.0
    %3819 = vmatpush.msra.mxu0 0.0
    %3820 = vmatpush.msra.mxu0 0.0
    %3821 = vmatpush.msra.mxu0 0.0
    %3822 = vmatpush.msra.mxu0 0.0
    %3823 = vmatpush.msra.mxu0 0.0
    %3824 = vmatpush.msra.mxu0 0.0
    %3825 = vmatpush.msra.mxu0 0.0
    %3826 = vmatpush.msra.mxu0 0.0
    %3827 = vmatpush.msra.mxu0 0.0
    %v3828 = vand.u32 %v3336, 4294901760
    %3829 = vmatpush.msra.mxu0 %v3828
    %v3830 = vand.u32 %v3332, 4294901760
    %3831 = vmatpush.msra.mxu0 %v3830
    %v3832 = vand.u32 %v718, 4294901760
    %v3833 = vsub.f32 %v718, %v3832
    %v3834 = vand.u32 %v3833, 4294901760
    %v3835 = vsub.f32 %v3833, %v3834
    %v3836 = vand.u32 %v3835, 4294901760
    %3837 = vmatmul.f32.gmra.mxu0 %v3836
    %v3838 = vpop.f32.mrf.mxu0
    %v3839 = vadd.f32 0.0, %v3838
    %3840 = vdwg.mxu0
    %3841 = vmatpush.msra.mxu0 0.0
    %3842 = vmatpush.msra.mxu0 0.0
    %3843 = vmatpush.msra.mxu0 0.0
    %3844 = vmatpush.msra.mxu0 0.0
    %3845 = vmatpush.msra.mxu0 0.0
    %3846 = vmatpush.msra.mxu0 0.0
    %3847 = vmatpush.msra.mxu0 0.0
    %3848 = vmatpush.msra.mxu0 0.0
    %3849 = vmatpush.msra.mxu0 0.0
    %3850 = vmatpush.msra.mxu0 0.0
    %3851 = vmatpush.msra.mxu0 0.0
    %3852 = vmatpush.msra.mxu0 0.0
    %3853 = vmatpush.msra.mxu0 0.0
    %3854 = vmatpush.msra.mxu0 0.0
    %v3855 = vand.u32 %v3336, 4294901760
    %v3856 = vsub.f32 %v3336, %v3855
    %v3857 = vand.u32 %v3856, 4294901760
    %v3858 = vsub.f32 %v3856, %v3857
    %v3859 = vand.u32 %v3858, 4294901760
    %3860 = vmatpush.msra.mxu0 %v3859
    %v3861 = vand.u32 %v3332, 4294901760
    %v3862 = vsub.f32 %v3332, %v3861
    %v3863 = vand.u32 %v3862, 4294901760
    %v3864 = vsub.f32 %v3862, %v3863
    %v3865 = vand.u32 %v3864, 4294901760
    %3866 = vmatpush.msra.mxu0 %v3865
    %v3867 = vand.u32 %v718, 4294901760
    %3868 = vmatmul.f32.gmra.mxu0 %v3867
    %v3869 = vpop.f32.mrf.mxu0
    %v3870 = vadd.f32 %v3839, %v3869
    %3871 = vdwg.mxu0
    %3872 = vmatpush.msra.mxu0 0.0
    %3873 = vmatpush.msra.mxu0 0.0
    %3874 = vmatpush.msra.mxu0 0.0
    %3875 = vmatpush.msra.mxu0 0.0
    %3876 = vmatpush.msra.mxu0 0.0
    %3877 = vmatpush.msra.mxu0 0.0
    %3878 = vmatpush.msra.mxu0 0.0
    %3879 = vmatpush.msra.mxu0 0.0
    %3880 = vmatpush.msra.mxu0 0.0
    %3881 = vmatpush.msra.mxu0 0.0
    %3882 = vmatpush.msra.mxu0 0.0
    %3883 = vmatpush.msra.mxu0 0.0
    %3884 = vmatpush.msra.mxu0 0.0
    %3885 = vmatpush.msra.mxu0 0.0
    %v3886 = vand.u32 %v3336, 4294901760
    %v3887 = vsub.f32 %v3336, %v3886
    %3888 = vmatpush.msra.mxu0 %v3887
    %v3889 = vand.u32 %v3332, 4294901760
    %v3890 = vsub.f32 %v3332, %v3889
    %3891 = vmatpush.msra.mxu0 %v3890
    %v3892 = vand.u32 %v718, 4294901760
    %v3893 = vsub.f32 %v718, %v3892
    %3894 = vmatmul.f32.gmra.mxu0 %v3893
    %v3895 = vpop.f32.mrf.mxu0
    %v3896 = vadd.f32 %v3870, %v3895
    %3897 = vdwg.mxu0
    %3898 = vmatpush.msra.mxu0 0.0
    %3899 = vmatpush.msra.mxu0 0.0
    %3900 = vmatpush.msra.mxu0 0.0
    %3901 = vmatpush.msra.mxu0 0.0
    %3902 = vmatpush.msra.mxu0 0.0
    %3903 = vmatpush.msra.mxu0 0.0
    %3904 = vmatpush.msra.mxu0 0.0
    %3905 = vmatpush.msra.mxu0 0.0
    %3906 = vmatpush.msra.mxu0 0.0
    %3907 = vmatpush.msra.mxu0 0.0
    %3908 = vmatpush.msra.mxu0 0.0
    %3909 = vmatpush.msra.mxu0 0.0
    %3910 = vmatpush.msra.mxu0 0.0
    %3911 = vmatpush.msra.mxu0 0.0
    %v3912 = vand.u32 %v3336, 4294901760
    %3913 = vmatpush.msra.mxu0 %v3912
    %v3914 = vand.u32 %v3332, 4294901760
    %3915 = vmatpush.msra.mxu0 %v3914
    %v3916 = vand.u32 %v718, 4294901760
    %v3917 = vsub.f32 %v718, %v3916
    %v3918 = vand.u32 %v3917, 4294901760
    %3919 = vmatmul.f32.gmra.mxu0 %v3918
    %v3920 = vpop.f32.mrf.mxu0
    %v3921 = vadd.f32 %v3896, %v3920
    %3922 = vdwg.mxu0
    %3923 = vmatpush.msra.mxu0 0.0
    %3924 = vmatpush.msra.mxu0 0.0
    %3925 = vmatpush.msra.mxu0 0.0
    %3926 = vmatpush.msra.mxu0 0.0
    %3927 = vmatpush.msra.mxu0 0.0
    %3928 = vmatpush.msra.mxu0 0.0
    %3929 = vmatpush.msra.mxu0 0.0
    %3930 = vmatpush.msra.mxu0 0.0
    %3931 = vmatpush.msra.mxu0 0.0
    %3932 = vmatpush.msra.mxu0 0.0
    %3933 = vmatpush.msra.mxu0 0.0
    %3934 = vmatpush.msra.mxu0 0.0
    %3935 = vmatpush.msra.mxu0 0.0
    %3936 = vmatpush.msra.mxu0 0.0
    %v3937 = vand.u32 %v3336, 4294901760
    %v3938 = vsub.f32 %v3336, %v3937
    %v3939 = vand.u32 %v3938, 4294901760
    %3940 = vmatpush.msra.mxu0 %v3939
    %v3941 = vand.u32 %v3332, 4294901760
    %v3942 = vsub.f32 %v3332, %v3941
    %v3943 = vand.u32 %v3942, 4294901760
    %3944 = vmatpush.msra.mxu0 %v3943
    %v3945 = vand.u32 %v718, 4294901760
    %3946 = vmatmul.f32.gmra.mxu0 %v3945
    %v3947 = vpop.f32.mrf.mxu0
    %v3948 = vadd.f32 %v3921, %v3947
    %3949 = vdwg.mxu0
    %3950 = vmatpush.msra.mxu0 0.0
    %3951 = vmatpush.msra.mxu0 0.0
    %3952 = vmatpush.msra.mxu0 0.0
    %3953 = vmatpush.msra.mxu0 0.0
    %3954 = vmatpush.msra.mxu0 0.0
    %3955 = vmatpush.msra.mxu0 0.0
    %3956 = vmatpush.msra.mxu0 0.0
    %3957 = vmatpush.msra.mxu0 0.0
    %3958 = vmatpush.msra.mxu0 0.0
    %3959 = vmatpush.msra.mxu0 0.0
    %3960 = vmatpush.msra.mxu0 0.0
    %3961 = vmatpush.msra.mxu0 0.0
    %3962 = vmatpush.msra.mxu0 0.0
    %3963 = vmatpush.msra.mxu0 0.0
    %v3964 = vand.u32 %v3336, 4294901760
    %3965 = vmatpush.msra.mxu0 %v3964
    %v3966 = vand.u32 %v3332, 4294901760
    %3967 = vmatpush.msra.mxu0 %v3966
    %v3968 = vand.u32 %v718, 4294901760
    %3969 = vmatmul.f32.gmra.mxu0 %v3968
    %v3970 = vpop.f32.mrf.mxu0
    %v3971 = vadd.f32 %v3948, %v3970
    %3972 = vdwg.mxu0
    %3973 = vmatpush.msra.mxu0 0.0
    %3974 = vmatpush.msra.mxu0 0.0
    %3975 = vmatpush.msra.mxu0 0.0
    %3976 = vmatpush.msra.mxu0 0.0
    %3977 = vmatpush.msra.mxu0 0.0
    %3978 = vmatpush.msra.mxu0 0.0
    %3979 = vmatpush.msra.mxu0 0.0
    %3980 = vmatpush.msra.mxu0 0.0
    %3981 = vmatpush.msra.mxu0 0.0
    %3982 = vmatpush.msra.mxu0 0.0
    %3983 = vmatpush.msra.mxu0 0.0
    %3984 = vmatpush.msra.mxu0 0.0
    %3985 = vmatpush.msra.mxu0 0.0
    %3986 = vmatpush.msra.mxu0 0.0
    %v3987 = vand.u32 %v2679, 4294901760
    %3988 = vmatpush.msra.mxu0 %v3987
    %v3989 = vand.u32 %v2675, 4294901760
    %3990 = vmatpush.msra.mxu0 %v3989
    %v3991 = vand.u32 %v718, 4294901760
    %v3992 = vsub.f32 %v718, %v3991
    %v3993 = vand.u32 %v3992, 4294901760
    %v3994 = vsub.f32 %v3992, %v3993
    %v3995 = vand.u32 %v3994, 4294901760
    %3996 = vmatmul.f32.gmra.mxu0 %v3995
    %v3997 = vpop.f32.mrf.mxu0
    %v3998 = vadd.f32 0.0, %v3997
    %3999 = vdwg.mxu0
    %4000 = vmatpush.msra.mxu0 0.0
    %4001 = vmatpush.msra.mxu0 0.0
    %4002 = vmatpush.msra.mxu0 0.0
    %4003 = vmatpush.msra.mxu0 0.0
    %4004 = vmatpush.msra.mxu0 0.0
    %4005 = vmatpush.msra.mxu0 0.0
    %4006 = vmatpush.msra.mxu0 0.0
    %4007 = vmatpush.msra.mxu0 0.0
    %4008 = vmatpush.msra.mxu0 0.0
    %4009 = vmatpush.msra.mxu0 0.0
    %4010 = vmatpush.msra.mxu0 0.0
    %4011 = vmatpush.msra.mxu0 0.0
    %4012 = vmatpush.msra.mxu0 0.0
    %4013 = vmatpush.msra.mxu0 0.0
    %v4014 = vand.u32 %v2679, 4294901760
    %v4015 = vsub.f32 %v2679, %v4014
    %v4016 = vand.u32 %v4015, 4294901760
    %v4017 = vsub.f32 %v4015, %v4016
    %v4018 = vand.u32 %v4017, 4294901760
    %4019 = vmatpush.msra.mxu0 %v4018
    %v4020 = vand.u32 %v2675, 4294901760
    %v4021 = vsub.f32 %v2675, %v4020
    %v4022 = vand.u32 %v4021, 4294901760
    %v4023 = vsub.f32 %v4021, %v4022
    %v4024 = vand.u32 %v4023, 4294901760
    %4025 = vmatpush.msra.mxu0 %v4024
    %v4026 = vand.u32 %v718, 4294901760
    %4027 = vmatmul.f32.gmra.mxu0 %v4026
    %v4028 = vpop.f32.mrf.mxu0
    %v4029 = vadd.f32 %v3998, %v4028
    %4030 = vdwg.mxu0
    %4031 = vmatpush.msra.mxu0 0.0
    %4032 = vmatpush.msra.mxu0 0.0
    %4033 = vmatpush.msra.mxu0 0.0
    %4034 = vmatpush.msra.mxu0 0.0
    %4035 = vmatpush.msra.mxu0 0.0
    %4036 = vmatpush.msra.mxu0 0.0
    %4037 = vmatpush.msra.mxu0 0.0
    %4038 = vmatpush.msra.mxu0 0.0
    %4039 = vmatpush.msra.mxu0 0.0
    %4040 = vmatpush.msra.mxu0 0.0
    %4041 = vmatpush.msra.mxu0 0.0
    %4042 = vmatpush.msra.mxu0 0.0
    %4043 = vmatpush.msra.mxu0 0.0
    %4044 = vmatpush.msra.mxu0 0.0
    %v4045 = vand.u32 %v2679, 4294901760
    %v4046 = vsub.f32 %v2679, %v4045
    %4047 = vmatpush.msra.mxu0 %v4046
    %v4048 = vand.u32 %v2675, 4294901760
    %v4049 = vsub.f32 %v2675, %v4048
    %4050 = vmatpush.msra.mxu0 %v4049
    %v4051 = vand.u32 %v718, 4294901760
    %v4052 = vsub.f32 %v718, %v4051
    %4053 = vmatmul.f32.gmra.mxu0 %v4052
    %v4054 = vpop.f32.mrf.mxu0
    %v4055 = vadd.f32 %v4029, %v4054
    %4056 = vdwg.mxu0
    %4057 = vmatpush.msra.mxu0 0.0
    %4058 = vmatpush.msra.mxu0 0.0
    %4059 = vmatpush.msra.mxu0 0.0
    %4060 = vmatpush.msra.mxu0 0.0
    %4061 = vmatpush.msra.mxu0 0.0
    %4062 = vmatpush.msra.mxu0 0.0
    %4063 = vmatpush.msra.mxu0 0.0
    %4064 = vmatpush.msra.mxu0 0.0
    %4065 = vmatpush.msra.mxu0 0.0
    %4066 = vmatpush.msra.mxu0 0.0
    %4067 = vmatpush.msra.mxu0 0.0
    %4068 = vmatpush.msra.mxu0 0.0
    %4069 = vmatpush.msra.mxu0 0.0
    %4070 = vmatpush.msra.mxu0 0.0
    %v4071 = vand.u32 %v2679, 4294901760
    %4072 = vmatpush.msra.mxu0 %v4071
    %v4073 = vand.u32 %v2675, 4294901760
    %4074 = vmatpush.msra.mxu0 %v4073
    %v4075 = vand.u32 %v718, 4294901760
    %v4076 = vsub.f32 %v718, %v4075
    %v4077 = vand.u32 %v4076, 4294901760
    %4078 = vmatmul.f32.gmra.mxu0 %v4077
    %v4079 = vpop.f32.mrf.mxu0
    %v4080 = vadd.f32 %v4055, %v4079
    %4081 = vdwg.mxu0
    %4082 = vmatpush.msra.mxu0 0.0
    %4083 = vmatpush.msra.mxu0 0.0
    %4084 = vmatpush.msra.mxu0 0.0
    %4085 = vmatpush.msra.mxu0 0.0
    %4086 = vmatpush.msra.mxu0 0.0
    %4087 = vmatpush.msra.mxu0 0.0
    %4088 = vmatpush.msra.mxu0 0.0
    %4089 = vmatpush.msra.mxu0 0.0
    %4090 = vmatpush.msra.mxu0 0.0
    %4091 = vmatpush.msra.mxu0 0.0
    %4092 = vmatpush.msra.mxu0 0.0
    %4093 = vmatpush.msra.mxu0 0.0
    %4094 = vmatpush.msra.mxu0 0.0
    %4095 = vmatpush.msra.mxu0 0.0
    %v4096 = vand.u32 %v2679, 4294901760
    %v4097 = vsub.f32 %v2679, %v4096
    %v4098 = vand.u32 %v4097, 4294901760
    %4099 = vmatpush.msra.mxu0 %v4098
    %v4100 = vand.u32 %v2675, 4294901760
    %v4101 = vsub.f32 %v2675, %v4100
    %v4102 = vand.u32 %v4101, 4294901760
    %4103 = vmatpush.msra.mxu0 %v4102
    %v4104 = vand.u32 %v718, 4294901760
    %4105 = vmatmul.f32.gmra.mxu0 %v4104
    %v4106 = vpop.f32.mrf.mxu0
    %v4107 = vadd.f32 %v4080, %v4106
    %4108 = vdwg.mxu0
    %4109 = vmatpush.msra.mxu0 0.0
    %4110 = vmatpush.msra.mxu0 0.0
    %4111 = vmatpush.msra.mxu0 0.0
    %4112 = vmatpush.msra.mxu0 0.0
    %4113 = vmatpush.msra.mxu0 0.0
    %4114 = vmatpush.msra.mxu0 0.0
    %4115 = vmatpush.msra.mxu0 0.0
    %4116 = vmatpush.msra.mxu0 0.0
    %4117 = vmatpush.msra.mxu0 0.0
    %4118 = vmatpush.msra.mxu0 0.0
    %4119 = vmatpush.msra.mxu0 0.0
    %4120 = vmatpush.msra.mxu0 0.0
    %4121 = vmatpush.msra.mxu0 0.0
    %4122 = vmatpush.msra.mxu0 0.0
    %v4123 = vand.u32 %v2679, 4294901760
    %4124 = vmatpush.msra.mxu0 %v4123
    %v4125 = vand.u32 %v2675, 4294901760
    %4126 = vmatpush.msra.mxu0 %v4125
    %v4127 = vand.u32 %v718, 4294901760
    %4128 = vmatmul.f32.gmra.mxu0 %v4127
    %v4129 = vpop.f32.mrf.mxu0
    %v4130 = vadd.f32 %v4107, %v4129
    %4131 = vdwg.mxu0
    %4132 = vmatpush.msra.mxu0 0.0
    %4133 = vmatpush.msra.mxu0 0.0
    %4134 = vmatpush.msra.mxu0 0.0
    %4135 = vmatpush.msra.mxu0 0.0
    %4136 = vmatpush.msra.mxu0 0.0
    %4137 = vmatpush.msra.mxu0 0.0
    %4138 = vmatpush.msra.mxu0 0.0
    %4139 = vmatpush.msra.mxu0 0.0
    %4140 = vmatpush.msra.mxu0 0.0
    %4141 = vmatpush.msra.mxu0 0.0
    %4142 = vmatpush.msra.mxu0 0.0
    %4143 = vmatpush.msra.mxu0 0.0
    %4144 = vmatpush.msra.mxu0 0.0
    %4145 = vmatpush.msra.mxu0 0.0
    %v4146 = vand.u32 %v2895, 4294901760
    %4147 = vmatpush.msra.mxu0 %v4146
    %v4148 = vand.u32 %v2891, 4294901760
    %4149 = vmatpush.msra.mxu0 %v4148
    %v4150 = vand.u32 %v718, 4294901760
    %v4151 = vsub.f32 %v718, %v4150
    %v4152 = vand.u32 %v4151, 4294901760
    %v4153 = vsub.f32 %v4151, %v4152
    %v4154 = vand.u32 %v4153, 4294901760
    %4155 = vmatmul.f32.gmra.mxu0 %v4154
    %v4156 = vpop.f32.mrf.mxu0
    %v4157 = vadd.f32 0.0, %v4156
    %4158 = vdwg.mxu0
    %4159 = vmatpush.msra.mxu0 0.0
    %4160 = vmatpush.msra.mxu0 0.0
    %4161 = vmatpush.msra.mxu0 0.0
    %4162 = vmatpush.msra.mxu0 0.0
    %4163 = vmatpush.msra.mxu0 0.0
    %4164 = vmatpush.msra.mxu0 0.0
    %4165 = vmatpush.msra.mxu0 0.0
    %4166 = vmatpush.msra.mxu0 0.0
    %4167 = vmatpush.msra.mxu0 0.0
    %4168 = vmatpush.msra.mxu0 0.0
    %4169 = vmatpush.msra.mxu0 0.0
    %4170 = vmatpush.msra.mxu0 0.0
    %4171 = vmatpush.msra.mxu0 0.0
    %4172 = vmatpush.msra.mxu0 0.0
    %v4173 = vand.u32 %v2895, 4294901760
    %v4174 = vsub.f32 %v2895, %v4173
    %v4175 = vand.u32 %v4174, 4294901760
    %v4176 = vsub.f32 %v4174, %v4175
    %v4177 = vand.u32 %v4176, 4294901760
    %4178 = vmatpush.msra.mxu0 %v4177
    %v4179 = vand.u32 %v2891, 4294901760
    %v4180 = vsub.f32 %v2891, %v4179
    %v4181 = vand.u32 %v4180, 4294901760
    %v4182 = vsub.f32 %v4180, %v4181
    %v4183 = vand.u32 %v4182, 4294901760
    %4184 = vmatpush.msra.mxu0 %v4183
    %v4185 = vand.u32 %v718, 4294901760
    %4186 = vmatmul.f32.gmra.mxu0 %v4185
    %v4187 = vpop.f32.mrf.mxu0
    %v4188 = vadd.f32 %v4157, %v4187
    %4189 = vdwg.mxu0
    %4190 = vmatpush.msra.mxu0 0.0
    %4191 = vmatpush.msra.mxu0 0.0
    %4192 = vmatpush.msra.mxu0 0.0
    %4193 = vmatpush.msra.mxu0 0.0
    %4194 = vmatpush.msra.mxu0 0.0
    %4195 = vmatpush.msra.mxu0 0.0
    %4196 = vmatpush.msra.mxu0 0.0
    %4197 = vmatpush.msra.mxu0 0.0
    %4198 = vmatpush.msra.mxu0 0.0
    %4199 = vmatpush.msra.mxu0 0.0
    %4200 = vmatpush.msra.mxu0 0.0
    %4201 = vmatpush.msra.mxu0 0.0
    %4202 = vmatpush.msra.mxu0 0.0
    %4203 = vmatpush.msra.mxu0 0.0
    %v4204 = vand.u32 %v2895, 4294901760
    %v4205 = vsub.f32 %v2895, %v4204
    %4206 = vmatpush.msra.mxu0 %v4205
    %v4207 = vand.u32 %v2891, 4294901760
    %v4208 = vsub.f32 %v2891, %v4207
    %4209 = vmatpush.msra.mxu0 %v4208
    %v4210 = vand.u32 %v718, 4294901760
    %v4211 = vsub.f32 %v718, %v4210
    %4212 = vmatmul.f32.gmra.mxu0 %v4211
    %v4213 = vpop.f32.mrf.mxu0
    %v4214 = vadd.f32 %v4188, %v4213
    %4215 = vdwg.mxu0
    %4216 = vmatpush.msra.mxu0 0.0
    %4217 = vmatpush.msra.mxu0 0.0
    %4218 = vmatpush.msra.mxu0 0.0
    %4219 = vmatpush.msra.mxu0 0.0
    %4220 = vmatpush.msra.mxu0 0.0
    %4221 = vmatpush.msra.mxu0 0.0
    %4222 = vmatpush.msra.mxu0 0.0
    %4223 = vmatpush.msra.mxu0 0.0
    %4224 = vmatpush.msra.mxu0 0.0
    %4225 = vmatpush.msra.mxu0 0.0
    %4226 = vmatpush.msra.mxu0 0.0
    %4227 = vmatpush.msra.mxu0 0.0
    %4228 = vmatpush.msra.mxu0 0.0
    %4229 = vmatpush.msra.mxu0 0.0
    %v4230 = vand.u32 %v2895, 4294901760
    %4231 = vmatpush.msra.mxu0 %v4230
    %v4232 = vand.u32 %v2891, 4294901760
    %4233 = vmatpush.msra.mxu0 %v4232
    %v4234 = vand.u32 %v718, 4294901760
    %v4235 = vsub.f32 %v718, %v4234
    %v4236 = vand.u32 %v4235, 4294901760
    %4237 = vmatmul.f32.gmra.mxu0 %v4236
    %v4238 = vpop.f32.mrf.mxu0
    %v4239 = vadd.f32 %v4214, %v4238
    %4240 = vdwg.mxu0
    %4241 = vmatpush.msra.mxu0 0.0
    %4242 = vmatpush.msra.mxu0 0.0
    %4243 = vmatpush.msra.mxu0 0.0
    %4244 = vmatpush.msra.mxu0 0.0
    %4245 = vmatpush.msra.mxu0 0.0
    %4246 = vmatpush.msra.mxu0 0.0
    %4247 = vmatpush.msra.mxu0 0.0
    %4248 = vmatpush.msra.mxu0 0.0
    %4249 = vmatpush.msra.mxu0 0.0
    %4250 = vmatpush.msra.mxu0 0.0
    %4251 = vmatpush.msra.mxu0 0.0
    %4252 = vmatpush.msra.mxu0 0.0
    %4253 = vmatpush.msra.mxu0 0.0
    %4254 = vmatpush.msra.mxu0 0.0
    %v4255 = vand.u32 %v2895, 4294901760
    %v4256 = vsub.f32 %v2895, %v4255
    %v4257 = vand.u32 %v4256, 4294901760
    %4258 = vmatpush.msra.mxu0 %v4257
    %v4259 = vand.u32 %v2891, 4294901760
    %v4260 = vsub.f32 %v2891, %v4259
    %v4261 = vand.u32 %v4260, 4294901760
    %4262 = vmatpush.msra.mxu0 %v4261
    %v4263 = vand.u32 %v718, 4294901760
    %4264 = vmatmul.f32.gmra.mxu0 %v4263
    %v4265 = vpop.f32.mrf.mxu0
    %v4266 = vadd.f32 %v4239, %v4265
    %4267 = vdwg.mxu0
    %4268 = vmatpush.msra.mxu0 0.0
    %4269 = vmatpush.msra.mxu0 0.0
    %4270 = vmatpush.msra.mxu0 0.0
    %4271 = vmatpush.msra.mxu0 0.0
    %4272 = vmatpush.msra.mxu0 0.0
    %4273 = vmatpush.msra.mxu0 0.0
    %4274 = vmatpush.msra.mxu0 0.0
    %4275 = vmatpush.msra.mxu0 0.0
    %4276 = vmatpush.msra.mxu0 0.0
    %4277 = vmatpush.msra.mxu0 0.0
    %4278 = vmatpush.msra.mxu0 0.0
    %4279 = vmatpush.msra.mxu0 0.0
    %4280 = vmatpush.msra.mxu0 0.0
    %4281 = vmatpush.msra.mxu0 0.0
    %v4282 = vand.u32 %v2895, 4294901760
    %4283 = vmatpush.msra.mxu0 %v4282
    %v4284 = vand.u32 %v2891, 4294901760
    %4285 = vmatpush.msra.mxu0 %v4284
    %v4286 = vand.u32 %v718, 4294901760
    %4287 = vmatmul.f32.gmra.mxu0 %v4286
    %v4288 = vpop.f32.mrf.mxu0
    %v4289 = vadd.f32 %v4266, %v4288
    %4290 = vdwg.mxu0
    %4291 = vmatpush.msra.mxu0 0.0
    %4292 = vmatpush.msra.mxu0 0.0
    %4293 = vmatpush.msra.mxu0 0.0
    %4294 = vmatpush.msra.mxu0 0.0
    %4295 = vmatpush.msra.mxu0 0.0
    %4296 = vmatpush.msra.mxu0 0.0
    %4297 = vmatpush.msra.mxu0 0.0
    %4298 = vmatpush.msra.mxu0 0.0
    %4299 = vmatpush.msra.mxu0 0.0
    %4300 = vmatpush.msra.mxu0 0.0
    %4301 = vmatpush.msra.mxu0 0.0
    %4302 = vmatpush.msra.mxu0 0.0
    %4303 = vmatpush.msra.mxu0 0.0
    %4304 = vmatpush.msra.mxu0 0.0
    %v4305 = vand.u32 %v3111, 4294901760
    %4306 = vmatpush.msra.mxu0 %v4305
    %v4307 = vand.u32 %v3107, 4294901760
    %4308 = vmatpush.msra.mxu0 %v4307
    %v4309 = vand.u32 %v718, 4294901760
    %v4310 = vsub.f32 %v718, %v4309
    %v4311 = vand.u32 %v4310, 4294901760
    %v4312 = vsub.f32 %v4310, %v4311
    %v4313 = vand.u32 %v4312, 4294901760
    %4314 = vmatmul.f32.gmra.mxu0 %v4313
    %v4315 = vpop.f32.mrf.mxu0
    %v4316 = vadd.f32 0.0, %v4315
    %4317 = vdwg.mxu0
    %4318 = vmatpush.msra.mxu0 0.0
    %4319 = vmatpush.msra.mxu0 0.0
    %4320 = vmatpush.msra.mxu0 0.0
    %4321 = vmatpush.msra.mxu0 0.0
    %4322 = vmatpush.msra.mxu0 0.0
    %4323 = vmatpush.msra.mxu0 0.0
    %4324 = vmatpush.msra.mxu0 0.0
    %4325 = vmatpush.msra.mxu0 0.0
    %4326 = vmatpush.msra.mxu0 0.0
    %4327 = vmatpush.msra.mxu0 0.0
    %4328 = vmatpush.msra.mxu0 0.0
    %4329 = vmatpush.msra.mxu0 0.0
    %4330 = vmatpush.msra.mxu0 0.0
    %4331 = vmatpush.msra.mxu0 0.0
    %v4332 = vand.u32 %v3111, 4294901760
    %v4333 = vsub.f32 %v3111, %v4332
    %v4334 = vand.u32 %v4333, 4294901760
    %v4335 = vsub.f32 %v4333, %v4334
    %v4336 = vand.u32 %v4335, 4294901760
    %4337 = vmatpush.msra.mxu0 %v4336
    %v4338 = vand.u32 %v3107, 4294901760
    %v4339 = vsub.f32 %v3107, %v4338
    %v4340 = vand.u32 %v4339, 4294901760
    %v4341 = vsub.f32 %v4339, %v4340
    %v4342 = vand.u32 %v4341, 4294901760
    %4343 = vmatpush.msra.mxu0 %v4342
    %v4344 = vand.u32 %v718, 4294901760
    %4345 = vmatmul.f32.gmra.mxu0 %v4344
    %v4346 = vpop.f32.mrf.mxu0
    %v4347 = vadd.f32 %v4316, %v4346
    %4348 = vdwg.mxu0
    %4349 = vmatpush.msra.mxu0 0.0
    %4350 = vmatpush.msra.mxu0 0.0
    %4351 = vmatpush.msra.mxu0 0.0
    %4352 = vmatpush.msra.mxu0 0.0
    %4353 = vmatpush.msra.mxu0 0.0
    %4354 = vmatpush.msra.mxu0 0.0
    %4355 = vmatpush.msra.mxu0 0.0
    %4356 = vmatpush.msra.mxu0 0.0
    %4357 = vmatpush.msra.mxu0 0.0
    %4358 = vmatpush.msra.mxu0 0.0
    %4359 = vmatpush.msra.mxu0 0.0
    %4360 = vmatpush.msra.mxu0 0.0
    %4361 = vmatpush.msra.mxu0 0.0
    %4362 = vmatpush.msra.mxu0 0.0
    %v4363 = vand.u32 %v3111, 4294901760
    %v4364 = vsub.f32 %v3111, %v4363
    %4365 = vmatpush.msra.mxu0 %v4364
    %v4366 = vand.u32 %v3107, 4294901760
    %v4367 = vsub.f32 %v3107, %v4366
    %4368 = vmatpush.msra.mxu0 %v4367
    %v4369 = vand.u32 %v718, 4294901760
    %v4370 = vsub.f32 %v718, %v4369
    %4371 = vmatmul.f32.gmra.mxu0 %v4370
    %v4372 = vpop.f32.mrf.mxu0
    %v4373 = vadd.f32 %v4347, %v4372
    %4374 = vdwg.mxu0
    %4375 = vmatpush.msra.mxu0 0.0
    %4376 = vmatpush.msra.mxu0 0.0
    %4377 = vmatpush.msra.mxu0 0.0
    %4378 = vmatpush.msra.mxu0 0.0
    %4379 = vmatpush.msra.mxu0 0.0
    %4380 = vmatpush.msra.mxu0 0.0
    %4381 = vmatpush.msra.mxu0 0.0
    %4382 = vmatpush.msra.mxu0 0.0
    %4383 = vmatpush.msra.mxu0 0.0
    %4384 = vmatpush.msra.mxu0 0.0
    %4385 = vmatpush.msra.mxu0 0.0
    %4386 = vmatpush.msra.mxu0 0.0
    %4387 = vmatpush.msra.mxu0 0.0
    %4388 = vmatpush.msra.mxu0 0.0
    %v4389 = vand.u32 %v3111, 4294901760
    %4390 = vmatpush.msra.mxu0 %v4389
    %v4391 = vand.u32 %v3107, 4294901760
    %4392 = vmatpush.msra.mxu0 %v4391
    %v4393 = vand.u32 %v718, 4294901760
    %v4394 = vsub.f32 %v718, %v4393
    %v4395 = vand.u32 %v4394, 4294901760
    %4396 = vmatmul.f32.gmra.mxu0 %v4395
    %v4397 = vpop.f32.mrf.mxu0
    %v4398 = vadd.f32 %v4373, %v4397
    %4399 = vdwg.mxu0
    %4400 = vmatpush.msra.mxu0 0.0
    %4401 = vmatpush.msra.mxu0 0.0
    %4402 = vmatpush.msra.mxu0 0.0
    %4403 = vmatpush.msra.mxu0 0.0
    %4404 = vmatpush.msra.mxu0 0.0
    %4405 = vmatpush.msra.mxu0 0.0
    %4406 = vmatpush.msra.mxu0 0.0
    %4407 = vmatpush.msra.mxu0 0.0
    %4408 = vmatpush.msra.mxu0 0.0
    %4409 = vmatpush.msra.mxu0 0.0
    %4410 = vmatpush.msra.mxu0 0.0
    %4411 = vmatpush.msra.mxu0 0.0
    %4412 = vmatpush.msra.mxu0 0.0
    %4413 = vmatpush.msra.mxu0 0.0
    %v4414 = vand.u32 %v3111, 4294901760
    %v4415 = vsub.f32 %v3111, %v4414
    %v4416 = vand.u32 %v4415, 4294901760
    %4417 = vmatpush.msra.mxu0 %v4416
    %v4418 = vand.u32 %v3107, 4294901760
    %v4419 = vsub.f32 %v3107, %v4418
    %v4420 = vand.u32 %v4419, 4294901760
    %4421 = vmatpush.msra.mxu0 %v4420
    %v4422 = vand.u32 %v718, 4294901760
    %4423 = vmatmul.f32.gmra.mxu0 %v4422
    %v4424 = vpop.f32.mrf.mxu0
    %v4425 = vadd.f32 %v4398, %v4424
    %4426 = vdwg.mxu0
    %4427 = vmatpush.msra.mxu0 0.0
    %4428 = vmatpush.msra.mxu0 0.0
    %4429 = vmatpush.msra.mxu0 0.0
    %4430 = vmatpush.msra.mxu0 0.0
    %4431 = vmatpush.msra.mxu0 0.0
    %4432 = vmatpush.msra.mxu0 0.0
    %4433 = vmatpush.msra.mxu0 0.0
    %4434 = vmatpush.msra.mxu0 0.0
    %4435 = vmatpush.msra.mxu0 0.0
    %4436 = vmatpush.msra.mxu0 0.0
    %4437 = vmatpush.msra.mxu0 0.0
    %4438 = vmatpush.msra.mxu0 0.0
    %4439 = vmatpush.msra.mxu0 0.0
    %4440 = vmatpush.msra.mxu0 0.0
    %v4441 = vand.u32 %v3111, 4294901760
    %4442 = vmatpush.msra.mxu0 %v4441
    %v4443 = vand.u32 %v3107, 4294901760
    %4444 = vmatpush.msra.mxu0 %v4443
    %v4445 = vand.u32 %v718, 4294901760
    %4446 = vmatmul.f32.gmra.mxu0 %v4445
    %v4447 = vpop.f32.mrf.mxu0
    %v4448 = vadd.f32 %v4425, %v4447
    %4449 = vdwg.mxu0
    %4450 = vmatpush.msra.mxu0 0.0
    %4451 = vmatpush.msra.mxu0 0.0
    %4452 = vmatpush.msra.mxu0 0.0
    %4453 = vmatpush.msra.mxu0 0.0
    %4454 = vmatpush.msra.mxu0 0.0
    %4455 = vmatpush.msra.mxu0 0.0
    %4456 = vmatpush.msra.mxu0 0.0
    %4457 = vmatpush.msra.mxu0 0.0
    %4458 = vmatpush.msra.mxu0 0.0
    %4459 = vmatpush.msra.mxu0 0.0
    %4460 = vmatpush.msra.mxu0 0.0
    %4461 = vmatpush.msra.mxu0 0.0
    %4462 = vmatpush.msra.mxu0 0.0
    %4463 = vmatpush.msra.mxu0 0.0
    %v4464 = vand.u32 %v3327, 4294901760
    %4465 = vmatpush.msra.mxu0 %v4464
    %v4466 = vand.u32 %v3323, 4294901760
    %4467 = vmatpush.msra.mxu0 %v4466
    %v4468 = vand.u32 %v718, 4294901760
    %v4469 = vsub.f32 %v718, %v4468
    %v4470 = vand.u32 %v4469, 4294901760
    %v4471 = vsub.f32 %v4469, %v4470
    %v4472 = vand.u32 %v4471, 4294901760
    %4473 = vmatmul.f32.gmra.mxu0 %v4472
    %v4474 = vpop.f32.mrf.mxu0
    %v4475 = vadd.f32 0.0, %v4474
    %4476 = vdwg.mxu0
    %4477 = vmatpush.msra.mxu0 0.0
    %4478 = vmatpush.msra.mxu0 0.0
    %4479 = vmatpush.msra.mxu0 0.0
    %4480 = vmatpush.msra.mxu0 0.0
    %4481 = vmatpush.msra.mxu0 0.0
    %4482 = vmatpush.msra.mxu0 0.0
    %4483 = vmatpush.msra.mxu0 0.0
    %4484 = vmatpush.msra.mxu0 0.0
    %4485 = vmatpush.msra.mxu0 0.0
    %4486 = vmatpush.msra.mxu0 0.0
    %4487 = vmatpush.msra.mxu0 0.0
    %4488 = vmatpush.msra.mxu0 0.0
    %4489 = vmatpush.msra.mxu0 0.0
    %4490 = vmatpush.msra.mxu0 0.0
    %v4491 = vand.u32 %v3327, 4294901760
    %v4492 = vsub.f32 %v3327, %v4491
    %v4493 = vand.u32 %v4492, 4294901760
    %v4494 = vsub.f32 %v4492, %v4493
    %v4495 = vand.u32 %v4494, 4294901760
    %4496 = vmatpush.msra.mxu0 %v4495
    %v4497 = vand.u32 %v3323, 4294901760
    %v4498 = vsub.f32 %v3323, %v4497
    %v4499 = vand.u32 %v4498, 4294901760
    %v4500 = vsub.f32 %v4498, %v4499
    %v4501 = vand.u32 %v4500, 4294901760
    %4502 = vmatpush.msra.mxu0 %v4501
    %v4503 = vand.u32 %v718, 4294901760
    %4504 = vmatmul.f32.gmra.mxu0 %v4503
    %v4505 = vpop.f32.mrf.mxu0
    %v4506 = vadd.f32 %v4475, %v4505
    %4507 = vdwg.mxu0
    %4508 = vmatpush.msra.mxu0 0.0
    %4509 = vmatpush.msra.mxu0 0.0
    %4510 = vmatpush.msra.mxu0 0.0
    %4511 = vmatpush.msra.mxu0 0.0
    %4512 = vmatpush.msra.mxu0 0.0
    %4513 = vmatpush.msra.mxu0 0.0
    %4514 = vmatpush.msra.mxu0 0.0
    %4515 = vmatpush.msra.mxu0 0.0
    %4516 = vmatpush.msra.mxu0 0.0
    %4517 = vmatpush.msra.mxu0 0.0
    %4518 = vmatpush.msra.mxu0 0.0
    %4519 = vmatpush.msra.mxu0 0.0
    %4520 = vmatpush.msra.mxu0 0.0
    %4521 = vmatpush.msra.mxu0 0.0
    %v4522 = vand.u32 %v3327, 4294901760
    %v4523 = vsub.f32 %v3327, %v4522
    %4524 = vmatpush.msra.mxu0 %v4523
    %v4525 = vand.u32 %v3323, 4294901760
    %v4526 = vsub.f32 %v3323, %v4525
    %4527 = vmatpush.msra.mxu0 %v4526
    %v4528 = vand.u32 %v718, 4294901760
    %v4529 = vsub.f32 %v718, %v4528
    %4530 = vmatmul.f32.gmra.mxu0 %v4529
    %v4531 = vpop.f32.mrf.mxu0
    %v4532 = vadd.f32 %v4506, %v4531
    %4533 = vdwg.mxu0
    %4534 = vmatpush.msra.mxu0 0.0
    %4535 = vmatpush.msra.mxu0 0.0
    %4536 = vmatpush.msra.mxu0 0.0
    %4537 = vmatpush.msra.mxu0 0.0
    %4538 = vmatpush.msra.mxu0 0.0
    %4539 = vmatpush.msra.mxu0 0.0
    %4540 = vmatpush.msra.mxu0 0.0
    %4541 = vmatpush.msra.mxu0 0.0
    %4542 = vmatpush.msra.mxu0 0.0
    %4543 = vmatpush.msra.mxu0 0.0
    %4544 = vmatpush.msra.mxu0 0.0
    %4545 = vmatpush.msra.mxu0 0.0
    %4546 = vmatpush.msra.mxu0 0.0
    %4547 = vmatpush.msra.mxu0 0.0
    %v4548 = vand.u32 %v3327, 4294901760
    %4549 = vmatpush.msra.mxu0 %v4548
    %v4550 = vand.u32 %v3323, 4294901760
    %4551 = vmatpush.msra.mxu0 %v4550
    %v4552 = vand.u32 %v718, 4294901760
    %v4553 = vsub.f32 %v718, %v4552
    %v4554 = vand.u32 %v4553, 4294901760
    %4555 = vmatmul.f32.gmra.mxu0 %v4554
    %v4556 = vpop.f32.mrf.mxu0
    %v4557 = vadd.f32 %v4532, %v4556
    %4558 = vdwg.mxu0
    %4559 = vmatpush.msra.mxu0 0.0
    %4560 = vmatpush.msra.mxu0 0.0
    %4561 = vmatpush.msra.mxu0 0.0
    %4562 = vmatpush.msra.mxu0 0.0
    %4563 = vmatpush.msra.mxu0 0.0
    %4564 = vmatpush.msra.mxu0 0.0
    %4565 = vmatpush.msra.mxu0 0.0
    %4566 = vmatpush.msra.mxu0 0.0
    %4567 = vmatpush.msra.mxu0 0.0
    %4568 = vmatpush.msra.mxu0 0.0
    %4569 = vmatpush.msra.mxu0 0.0
    %4570 = vmatpush.msra.mxu0 0.0
    %4571 = vmatpush.msra.mxu0 0.0
    %4572 = vmatpush.msra.mxu0 0.0
    %v4573 = vand.u32 %v3327, 4294901760
    %v4574 = vsub.f32 %v3327, %v4573
    %v4575 = vand.u32 %v4574, 4294901760
    %4576 = vmatpush.msra.mxu0 %v4575
    %v4577 = vand.u32 %v3323, 4294901760
    %v4578 = vsub.f32 %v3323, %v4577
    %v4579 = vand.u32 %v4578, 4294901760
    %4580 = vmatpush.msra.mxu0 %v4579
    %v4581 = vand.u32 %v718, 4294901760
    %4582 = vmatmul.f32.gmra.mxu0 %v4581
    %v4583 = vpop.f32.mrf.mxu0
    %v4584 = vadd.f32 %v4557, %v4583
    %4585 = vdwg.mxu0
    %4586 = vmatpush.msra.mxu0 0.0
    %4587 = vmatpush.msra.mxu0 0.0
    %4588 = vmatpush.msra.mxu0 0.0
    %4589 = vmatpush.msra.mxu0 0.0
    %4590 = vmatpush.msra.mxu0 0.0
    %4591 = vmatpush.msra.mxu0 0.0
    %4592 = vmatpush.msra.mxu0 0.0
    %4593 = vmatpush.msra.mxu0 0.0
    %4594 = vmatpush.msra.mxu0 0.0
    %4595 = vmatpush.msra.mxu0 0.0
    %4596 = vmatpush.msra.mxu0 0.0
    %4597 = vmatpush.msra.mxu0 0.0
    %4598 = vmatpush.msra.mxu0 0.0
    %4599 = vmatpush.msra.mxu0 0.0
    %v4600 = vand.u32 %v3327, 4294901760
    %4601 = vmatpush.msra.mxu0 %v4600
    %v4602 = vand.u32 %v3323, 4294901760
    %4603 = vmatpush.msra.mxu0 %v4602
    %v4604 = vand.u32 %v718, 4294901760
    %4605 = vmatmul.f32.gmra.mxu0 %v4604
    %v4606 = vpop.f32.mrf.mxu0
    %v4607 = vadd.f32 %v4584, %v4606
    %4608 = vdwg.mxu0
    %v4609 = vadd.f32 %v3494, 0.0
    %v4610 = vadd.f32 %v4609, %v3653
    %v4611 = vadd.f32 %v4610, %v3812
    %v4612 = vadd.f32 %v4611, %v3971
    %v4613 = vadd.f32 %v4130, 0.0
    %v4614 = vadd.f32 %v4613, %v4289
    %v4615 = vadd.f32 %v4614, %v4448
    %v4616 = vadd.f32 %v4615, %v4607
    %v4617 = vperm.slane %v97, 4
    %v4618 = vmul.f32 %v4616, %v4617
    %v4619 = vsub.f32 %v4612, %v4618
    %v4620 = vmul.f32 %v4619, %v4619
    %v4621 = vand.u32 %v89, 4294901760
    %4622 = vmatpush.msra.mxu0 %v4621
    %v4623 = vand.u32 %v88, 4294901760
    %4624 = vmatpush.msra.mxu0 %v4623
    %v4625 = vand.u32 %v87, 4294901760
    %4626 = vmatpush.msra.mxu0 %v4625
    %v4627 = vand.u32 %v86, 4294901760
    %4628 = vmatpush.msra.mxu0 %v4627
    %v4629 = vand.u32 %v85, 4294901760
    %4630 = vmatpush.msra.mxu0 %v4629
    %v4631 = vand.u32 %v84, 4294901760
    %4632 = vmatpush.msra.mxu0 %v4631
    %v4633 = vand.u32 %v83, 4294901760
    %4634 = vmatpush.msra.mxu0 %v4633
    %v4635 = vand.u32 %v82, 4294901760
    %4636 = vmatpush.msra.mxu0 %v4635
    %v4637 = vand.u32 %v81, 4294901760
    %4638 = vmatpush.msra.mxu0 %v4637
    %v4639 = vand.u32 %v80, 4294901760
    %4640 = vmatpush.msra.mxu0 %v4639
    %v4641 = vand.u32 %v79, 4294901760
    %4642 = vmatpush.msra.mxu0 %v4641
    %v4643 = vand.u32 %v78, 4294901760
    %4644 = vmatpush.msra.mxu0 %v4643
    %v4645 = vand.u32 %v77, 4294901760
    %4646 = vmatpush.msra.mxu0 %v4645
    %v4647 = vand.u32 %v76, 4294901760
    %4648 = vmatpush.msra.mxu0 %v4647
    %v4649 = vand.u32 %v75, 4294901760
    %4650 = vmatpush.msra.mxu0 %v4649
    %v4651 = vand.u32 %v74, 4294901760
    %4652 = vmatpush.msra.mxu0 %v4651
    %v4653 = vand.u32 %v4620, 4294901760
    %v4654 = vsub.f32 %v4620, %v4653
    %v4655 = vand.u32 %v4654, 4294901760
    %v4656 = vsub.f32 %v4654, %v4655
    %v4657 = vand.u32 %v4656, 4294901760
    %4658 = vmatmul.f32.gmra.mxu0 %v4657
    %v4659 = vpop.f32.mrf.mxu0
    %v4660 = vadd.f32 0.0, %v4659
    %4661 = vdwg.mxu0
    %v4662 = vand.u32 %v89, 4294901760
    %v4663 = vsub.f32 %v89, %v4662
    %v4664 = vand.u32 %v4663, 4294901760
    %v4665 = vsub.f32 %v4663, %v4664
    %v4666 = vand.u32 %v4665, 4294901760
    %4667 = vmatpush.msra.mxu0 %v4666
    %v4668 = vand.u32 %v88, 4294901760
    %v4669 = vsub.f32 %v88, %v4668
    %v4670 = vand.u32 %v4669, 4294901760
    %v4671 = vsub.f32 %v4669, %v4670
    %v4672 = vand.u32 %v4671, 4294901760
    %4673 = vmatpush.msra.mxu0 %v4672
    %v4674 = vand.u32 %v87, 4294901760
    %v4675 = vsub.f32 %v87, %v4674
    %v4676 = vand.u32 %v4675, 4294901760
    %v4677 = vsub.f32 %v4675, %v4676
    %v4678 = vand.u32 %v4677, 4294901760
    %4679 = vmatpush.msra.mxu0 %v4678
    %v4680 = vand.u32 %v86, 4294901760
    %v4681 = vsub.f32 %v86, %v4680
    %v4682 = vand.u32 %v4681, 4294901760
    %v4683 = vsub.f32 %v4681, %v4682
    %v4684 = vand.u32 %v4683, 4294901760
    %4685 = vmatpush.msra.mxu0 %v4684
    %v4686 = vand.u32 %v85, 4294901760
    %v4687 = vsub.f32 %v85, %v4686
    %v4688 = vand.u32 %v4687, 4294901760
    %v4689 = vsub.f32 %v4687, %v4688
    %v4690 = vand.u32 %v4689, 4294901760
    %4691 = vmatpush.msra.mxu0 %v4690
    %v4692 = vand.u32 %v84, 4294901760
    %v4693 = vsub.f32 %v84, %v4692
    %v4694 = vand.u32 %v4693, 4294901760
    %v4695 = vsub.f32 %v4693, %v4694
    %v4696 = vand.u32 %v4695, 4294901760
    %4697 = vmatpush.msra.mxu0 %v4696
    %v4698 = vand.u32 %v83, 4294901760
    %v4699 = vsub.f32 %v83, %v4698
    %v4700 = vand.u32 %v4699, 4294901760
    %v4701 = vsub.f32 %v4699, %v4700
    %v4702 = vand.u32 %v4701, 4294901760
    %4703 = vmatpush.msra.mxu0 %v4702
    %v4704 = vand.u32 %v82, 4294901760
    %v4705 = vsub.f32 %v82, %v4704
    %v4706 = vand.u32 %v4705, 4294901760
    %v4707 = vsub.f32 %v4705, %v4706
    %v4708 = vand.u32 %v4707, 4294901760
    %4709 = vmatpush.msra.mxu0 %v4708
    %v4710 = vand.u32 %v81, 4294901760
    %v4711 = vsub.f32 %v81, %v4710
    %v4712 = vand.u32 %v4711, 4294901760
    %v4713 = vsub.f32 %v4711, %v4712
    %v4714 = vand.u32 %v4713, 4294901760
    %4715 = vmatpush.msra.mxu0 %v4714
    %v4716 = vand.u32 %v80, 4294901760
    %v4717 = vsub.f32 %v80, %v4716
    %v4718 = vand.u32 %v4717, 4294901760
    %v4719 = vsub.f32 %v4717, %v4718
    %v4720 = vand.u32 %v4719, 4294901760
    %4721 = vmatpush.msra.mxu0 %v4720
    %v4722 = vand.u32 %v79, 4294901760
    %v4723 = vsub.f32 %v79, %v4722
    %v4724 = vand.u32 %v4723, 4294901760
    %v4725 = vsub.f32 %v4723, %v4724
    %v4726 = vand.u32 %v4725, 4294901760
    %4727 = vmatpush.msra.mxu0 %v4726
    %v4728 = vand.u32 %v78, 4294901760
    %v4729 = vsub.f32 %v78, %v4728
    %v4730 = vand.u32 %v4729, 4294901760
    %v4731 = vsub.f32 %v4729, %v4730
    %v4732 = vand.u32 %v4731, 4294901760
    %4733 = vmatpush.msra.mxu0 %v4732
    %v4734 = vand.u32 %v77, 4294901760
    %v4735 = vsub.f32 %v77, %v4734
    %v4736 = vand.u32 %v4735, 4294901760
    %v4737 = vsub.f32 %v4735, %v4736
    %v4738 = vand.u32 %v4737, 4294901760
    %4739 = vmatpush.msra.mxu0 %v4738
    %v4740 = vand.u32 %v76, 4294901760
    %v4741 = vsub.f32 %v76, %v4740
    %v4742 = vand.u32 %v4741, 4294901760
    %v4743 = vsub.f32 %v4741, %v4742
    %v4744 = vand.u32 %v4743, 4294901760
    %4745 = vmatpush.msra.mxu0 %v4744
    %v4746 = vand.u32 %v75, 4294901760
    %v4747 = vsub.f32 %v75, %v4746
    %v4748 = vand.u32 %v4747, 4294901760
    %v4749 = vsub.f32 %v4747, %v4748
    %v4750 = vand.u32 %v4749, 4294901760
    %4751 = vmatpush.msra.mxu0 %v4750
    %v4752 = vand.u32 %v74, 4294901760
    %v4753 = vsub.f32 %v74, %v4752
    %v4754 = vand.u32 %v4753, 4294901760
    %v4755 = vsub.f32 %v4753, %v4754
    %v4756 = vand.u32 %v4755, 4294901760
    %4757 = vmatpush.msra.mxu0 %v4756
    %v4758 = vand.u32 %v4620, 4294901760
    %4759 = vmatmul.f32.gmra.mxu0 %v4758
    %v4760 = vpop.f32.mrf.mxu0
    %v4761 = vadd.f32 %v4660, %v4760
    %4762 = vdwg.mxu0
    %v4763 = vand.u32 %v89, 4294901760
    %v4764 = vsub.f32 %v89, %v4763
    %4765 = vmatpush.msra.mxu0 %v4764
    %v4766 = vand.u32 %v88, 4294901760
    %v4767 = vsub.f32 %v88, %v4766
    %4768 = vmatpush.msra.mxu0 %v4767
    %v4769 = vand.u32 %v87, 4294901760
    %v4770 = vsub.f32 %v87, %v4769
    %4771 = vmatpush.msra.mxu0 %v4770
    %v4772 = vand.u32 %v86, 4294901760
    %v4773 = vsub.f32 %v86, %v4772
    %4774 = vmatpush.msra.mxu0 %v4773
    %v4775 = vand.u32 %v85, 4294901760
    %v4776 = vsub.f32 %v85, %v4775
    %4777 = vmatpush.msra.mxu0 %v4776
    %v4778 = vand.u32 %v84, 4294901760
    %v4779 = vsub.f32 %v84, %v4778
    %4780 = vmatpush.msra.mxu0 %v4779
    %v4781 = vand.u32 %v83, 4294901760
    %v4782 = vsub.f32 %v83, %v4781
    %4783 = vmatpush.msra.mxu0 %v4782
    %v4784 = vand.u32 %v82, 4294901760
    %v4785 = vsub.f32 %v82, %v4784
    %4786 = vmatpush.msra.mxu0 %v4785
    %v4787 = vand.u32 %v81, 4294901760
    %v4788 = vsub.f32 %v81, %v4787
    %4789 = vmatpush.msra.mxu0 %v4788
    %v4790 = vand.u32 %v80, 4294901760
    %v4791 = vsub.f32 %v80, %v4790
    %4792 = vmatpush.msra.mxu0 %v4791
    %v4793 = vand.u32 %v79, 4294901760
    %v4794 = vsub.f32 %v79, %v4793
    %4795 = vmatpush.msra.mxu0 %v4794
    %v4796 = vand.u32 %v78, 4294901760
    %v4797 = vsub.f32 %v78, %v4796
    %4798 = vmatpush.msra.mxu0 %v4797
    %v4799 = vand.u32 %v77, 4294901760
    %v4800 = vsub.f32 %v77, %v4799
    %4801 = vmatpush.msra.mxu0 %v4800
    %v4802 = vand.u32 %v76, 4294901760
    %v4803 = vsub.f32 %v76, %v4802
    %4804 = vmatpush.msra.mxu0 %v4803
    %v4805 = vand.u32 %v75, 4294901760
    %v4806 = vsub.f32 %v75, %v4805
    %4807 = vmatpush.msra.mxu0 %v4806
    %v4808 = vand.u32 %v74, 4294901760
    %v4809 = vsub.f32 %v74, %v4808
    %4810 = vmatpush.msra.mxu0 %v4809
    %v4811 = vand.u32 %v4620, 4294901760
    %v4812 = vsub.f32 %v4620, %v4811
    %4813 = vmatmul.f32.gmra.mxu0 %v4812
    %v4814 = vpop.f32.mrf.mxu0
    %v4815 = vadd.f32 %v4761, %v4814
    %4816 = vdwg.mxu0
    %v4817 = vand.u32 %v89, 4294901760
    %4818 = vmatpush.msra.mxu0 %v4817
    %v4819 = vand.u32 %v88, 4294901760
    %4820 = vmatpush.msra.mxu0 %v4819
    %v4821 = vand.u32 %v87, 4294901760
    %4822 = vmatpush.msra.mxu0 %v4821
    %v4823 = vand.u32 %v86, 4294901760
    %4824 = vmatpush.msra.mxu0 %v4823
    %v4825 = vand.u32 %v85, 4294901760
    %4826 = vmatpush.msra.mxu0 %v4825
    %v4827 = vand.u32 %v84, 4294901760
    %4828 = vmatpush.msra.mxu0 %v4827
    %v4829 = vand.u32 %v83, 4294901760
    %4830 = vmatpush.msra.mxu0 %v4829
    %v4831 = vand.u32 %v82, 4294901760
    %4832 = vmatpush.msra.mxu0 %v4831
    %v4833 = vand.u32 %v81, 4294901760
    %4834 = vmatpush.msra.mxu0 %v4833
    %v4835 = vand.u32 %v80, 4294901760
    %4836 = vmatpush.msra.mxu0 %v4835
    %v4837 = vand.u32 %v79, 4294901760
    %4838 = vmatpush.msra.mxu0 %v4837
    %v4839 = vand.u32 %v78, 4294901760
    %4840 = vmatpush.msra.mxu0 %v4839
    %v4841 = vand.u32 %v77, 4294901760
    %4842 = vmatpush.msra.mxu0 %v4841
    %v4843 = vand.u32 %v76, 4294901760
    %4844 = vmatpush.msra.mxu0 %v4843
    %v4845 = vand.u32 %v75, 4294901760
    %4846 = vmatpush.msra.mxu0 %v4845
    %v4847 = vand.u32 %v74, 4294901760
    %4848 = vmatpush.msra.mxu0 %v4847
    %v4849 = vand.u32 %v4620, 4294901760
    %v4850 = vsub.f32 %v4620, %v4849
    %v4851 = vand.u32 %v4850, 4294901760
    %4852 = vmatmul.f32.gmra.mxu0 %v4851
    %v4853 = vpop.f32.mrf.mxu0
    %v4854 = vadd.f32 %v4815, %v4853
    %4855 = vdwg.mxu0
    %v4856 = vand.u32 %v89, 4294901760
    %v4857 = vsub.f32 %v89, %v4856
    %v4858 = vand.u32 %v4857, 4294901760
    %4859 = vmatpush.msra.mxu0 %v4858
    %v4860 = vand.u32 %v88, 4294901760
    %v4861 = vsub.f32 %v88, %v4860
    %v4862 = vand.u32 %v4861, 4294901760
    %4863 = vmatpush.msra.mxu0 %v4862
    %v4864 = vand.u32 %v87, 4294901760
    %v4865 = vsub.f32 %v87, %v4864
    %v4866 = vand.u32 %v4865, 4294901760
    %4867 = vmatpush.msra.mxu0 %v4866
    %v4868 = vand.u32 %v86, 4294901760
    %v4869 = vsub.f32 %v86, %v4868
    %v4870 = vand.u32 %v4869, 4294901760
    %4871 = vmatpush.msra.mxu0 %v4870
    %v4872 = vand.u32 %v85, 4294901760
    %v4873 = vsub.f32 %v85, %v4872
    %v4874 = vand.u32 %v4873, 4294901760
    %4875 = vmatpush.msra.mxu0 %v4874
    %v4876 = vand.u32 %v84, 4294901760
    %v4877 = vsub.f32 %v84, %v4876
    %v4878 = vand.u32 %v4877, 4294901760
    %4879 = vmatpush.msra.mxu0 %v4878
    %v4880 = vand.u32 %v83, 4294901760
    %v4881 = vsub.f32 %v83, %v4880
    %v4882 = vand.u32 %v4881, 4294901760
    %4883 = vmatpush.msra.mxu0 %v4882
    %v4884 = vand.u32 %v82, 4294901760
    %v4885 = vsub.f32 %v82, %v4884
    %v4886 = vand.u32 %v4885, 4294901760
    %4887 = vmatpush.msra.mxu0 %v4886
    %v4888 = vand.u32 %v81, 4294901760
    %v4889 = vsub.f32 %v81, %v4888
    %v4890 = vand.u32 %v4889, 4294901760
    %4891 = vmatpush.msra.mxu0 %v4890
    %v4892 = vand.u32 %v80, 4294901760
    %v4893 = vsub.f32 %v80, %v4892
    %v4894 = vand.u32 %v4893, 4294901760
    %4895 = vmatpush.msra.mxu0 %v4894
    %v4896 = vand.u32 %v79, 4294901760
    %v4897 = vsub.f32 %v79, %v4896
    %v4898 = vand.u32 %v4897, 4294901760
    %4899 = vmatpush.msra.mxu0 %v4898
    %v4900 = vand.u32 %v78, 4294901760
    %v4901 = vsub.f32 %v78, %v4900
    %v4902 = vand.u32 %v4901, 4294901760
    %4903 = vmatpush.msra.mxu0 %v4902
    %v4904 = vand.u32 %v77, 4294901760
    %v4905 = vsub.f32 %v77, %v4904
    %v4906 = vand.u32 %v4905, 4294901760
    %4907 = vmatpush.msra.mxu0 %v4906
    %v4908 = vand.u32 %v76, 4294901760
    %v4909 = vsub.f32 %v76, %v4908
    %v4910 = vand.u32 %v4909, 4294901760
    %4911 = vmatpush.msra.mxu0 %v4910
    %v4912 = vand.u32 %v75, 4294901760
    %v4913 = vsub.f32 %v75, %v4912
    %v4914 = vand.u32 %v4913, 4294901760
    %4915 = vmatpush.msra.mxu0 %v4914
    %v4916 = vand.u32 %v74, 4294901760
    %v4917 = vsub.f32 %v74, %v4916
    %v4918 = vand.u32 %v4917, 4294901760
    %4919 = vmatpush.msra.mxu0 %v4918
    %v4920 = vand.u32 %v4620, 4294901760
    %4921 = vmatmul.f32.gmra.mxu0 %v4920
    %v4922 = vpop.f32.mrf.mxu0
    %v4923 = vadd.f32 %v4854, %v4922
    %4924 = vdwg.mxu0
    %v4925 = vand.u32 %v89, 4294901760
    %4926 = vmatpush.msra.mxu0 %v4925
    %v4927 = vand.u32 %v88, 4294901760
    %4928 = vmatpush.msra.mxu0 %v4927
    %v4929 = vand.u32 %v87, 4294901760
    %4930 = vmatpush.msra.mxu0 %v4929
    %v4931 = vand.u32 %v86, 4294901760
    %4932 = vmatpush.msra.mxu0 %v4931
    %v4933 = vand.u32 %v85, 4294901760
    %4934 = vmatpush.msra.mxu0 %v4933
    %v4935 = vand.u32 %v84, 4294901760
    %4936 = vmatpush.msra.mxu0 %v4935
    %v4937 = vand.u32 %v83, 4294901760
    %4938 = vmatpush.msra.mxu0 %v4937
    %v4939 = vand.u32 %v82, 4294901760
    %4940 = vmatpush.msra.mxu0 %v4939
    %v4941 = vand.u32 %v81, 4294901760
    %4942 = vmatpush.msra.mxu0 %v4941
    %v4943 = vand.u32 %v80, 4294901760
    %4944 = vmatpush.msra.mxu0 %v4943
    %v4945 = vand.u32 %v79, 4294901760
    %4946 = vmatpush.msra.mxu0 %v4945
    %v4947 = vand.u32 %v78, 4294901760
    %4948 = vmatpush.msra.mxu0 %v4947
    %v4949 = vand.u32 %v77, 4294901760
    %4950 = vmatpush.msra.mxu0 %v4949
    %v4951 = vand.u32 %v76, 4294901760
    %4952 = vmatpush.msra.mxu0 %v4951
    %v4953 = vand.u32 %v75, 4294901760
    %4954 = vmatpush.msra.mxu0 %v4953
    %v4955 = vand.u32 %v74, 4294901760
    %4956 = vmatpush.msra.mxu0 %v4955
    %v4957 = vand.u32 %v4620, 4294901760
    %4958 = vmatmul.f32.gmra.mxu0 %v4957
    %v4959 = vpop.f32.mrf.mxu0
    %v4960 = vadd.f32 %v4923, %v4959
    %4961 = vdwg.mxu0
    %v4962 = vmax.f32 %v4960, 1e-24
    %v4963 = vrsqrt.pop %v4962
    %v4964 = vmul.f32 %v4963, %v4962
    %v4965 = vmul.f32 %v4964, %v4963
    %v4966 = vmul.f32 0.5, %v4965
    %v4967 = vsub.f32 1.5, %v4966
    %v4968 = vmul.f32 %v4963, %v4967
    %vm4969 = vweird.f32 %v4962
    %vm4970 = vweird.f32 %v4963
    %vm4971 = vmor %vm4969, %vm4970
    %v4972 = vsel %vm4971, %v4963, %v4968
    %vm4973 = vcmask 64512
    %v4975 = vsel %vm4973, %v4972, 0
    %4977 = vmatpush.msra.mxu0 0.0
    %4978 = vmatpush.msra.mxu0 0.0
    %4979 = vmatpush.msra.mxu0 0.0
    %4980 = vmatpush.msra.mxu0 0.0
    %4981 = vmatpush.msra.mxu0 0.0
    %4982 = vmatpush.msra.mxu0 0.0
    %4983 = vmatpush.msra.mxu0 0.0
    %4984 = vmatpush.msra.mxu0 0.0
    %4985 = vmatpush.msra.mxu0 0.0
    %4986 = vmatpush.msra.mxu0 0.0
    %4987 = vmatpush.msra.mxu0 0.0
    %4988 = vmatpush.msra.mxu0 0.0
    %4989 = vmatpush.msra.mxu0 0.0
    %4990 = vmatpush.msra.mxu0 0.0
    %4991 = vmatpush.msra.mxu0 0.0
    %v4992 = vand.u32 %v94, 4294901760
    %4993 = vmatpush.msra.mxu0 %v4992
    %v4994 = vand.u32 %v4975, 4294901760
    %v4995 = vsub.f32 %v4975, %v4994
    %v4996 = vand.u32 %v4995, 4294901760
    %v4997 = vsub.f32 %v4995, %v4996
    %v4998 = vand.u32 %v4997, 4294901760
    %4999 = vmatmul.f32.gmra.mxu0 %v4998
    %v5000 = vpop.f32.mrf.mxu0
    %v5001 = vadd.f32 0.0, %v5000
    %5002 = vdwg.mxu0
    %5003 = vmatpush.msra.mxu0 0.0
    %5004 = vmatpush.msra.mxu0 0.0
    %5005 = vmatpush.msra.mxu0 0.0
    %5006 = vmatpush.msra.mxu0 0.0
    %5007 = vmatpush.msra.mxu0 0.0
    %5008 = vmatpush.msra.mxu0 0.0
    %5009 = vmatpush.msra.mxu0 0.0
    %5010 = vmatpush.msra.mxu0 0.0
    %5011 = vmatpush.msra.mxu0 0.0
    %5012 = vmatpush.msra.mxu0 0.0
    %5013 = vmatpush.msra.mxu0 0.0
    %5014 = vmatpush.msra.mxu0 0.0
    %5015 = vmatpush.msra.mxu0 0.0
    %5016 = vmatpush.msra.mxu0 0.0
    %5017 = vmatpush.msra.mxu0 0.0
    %v5018 = vand.u32 %v94, 4294901760
    %v5019 = vsub.f32 %v94, %v5018
    %v5020 = vand.u32 %v5019, 4294901760
    %v5021 = vsub.f32 %v5019, %v5020
    %v5022 = vand.u32 %v5021, 4294901760
    %5023 = vmatpush.msra.mxu0 %v5022
    %v5024 = vand.u32 %v4975, 4294901760
    %5025 = vmatmul.f32.gmra.mxu0 %v5024
    %v5026 = vpop.f32.mrf.mxu0
    %v5027 = vadd.f32 %v5001, %v5026
    %5028 = vdwg.mxu0
    %5029 = vmatpush.msra.mxu0 0.0
    %5030 = vmatpush.msra.mxu0 0.0
    %5031 = vmatpush.msra.mxu0 0.0
    %5032 = vmatpush.msra.mxu0 0.0
    %5033 = vmatpush.msra.mxu0 0.0
    %5034 = vmatpush.msra.mxu0 0.0
    %5035 = vmatpush.msra.mxu0 0.0
    %5036 = vmatpush.msra.mxu0 0.0
    %5037 = vmatpush.msra.mxu0 0.0
    %5038 = vmatpush.msra.mxu0 0.0
    %5039 = vmatpush.msra.mxu0 0.0
    %5040 = vmatpush.msra.mxu0 0.0
    %5041 = vmatpush.msra.mxu0 0.0
    %5042 = vmatpush.msra.mxu0 0.0
    %5043 = vmatpush.msra.mxu0 0.0
    %v5044 = vand.u32 %v94, 4294901760
    %v5045 = vsub.f32 %v94, %v5044
    %5046 = vmatpush.msra.mxu0 %v5045
    %v5047 = vand.u32 %v4975, 4294901760
    %v5048 = vsub.f32 %v4975, %v5047
    %5049 = vmatmul.f32.gmra.mxu0 %v5048
    %v5050 = vpop.f32.mrf.mxu0
    %v5051 = vadd.f32 %v5027, %v5050
    %5052 = vdwg.mxu0
    %5053 = vmatpush.msra.mxu0 0.0
    %5054 = vmatpush.msra.mxu0 0.0
    %5055 = vmatpush.msra.mxu0 0.0
    %5056 = vmatpush.msra.mxu0 0.0
    %5057 = vmatpush.msra.mxu0 0.0
    %5058 = vmatpush.msra.mxu0 0.0
    %5059 = vmatpush.msra.mxu0 0.0
    %5060 = vmatpush.msra.mxu0 0.0
    %5061 = vmatpush.msra.mxu0 0.0
    %5062 = vmatpush.msra.mxu0 0.0
    %5063 = vmatpush.msra.mxu0 0.0
    %5064 = vmatpush.msra.mxu0 0.0
    %5065 = vmatpush.msra.mxu0 0.0
    %5066 = vmatpush.msra.mxu0 0.0
    %5067 = vmatpush.msra.mxu0 0.0
    %v5068 = vand.u32 %v94, 4294901760
    %5069 = vmatpush.msra.mxu0 %v5068
    %v5070 = vand.u32 %v4975, 4294901760
    %v5071 = vsub.f32 %v4975, %v5070
    %v5072 = vand.u32 %v5071, 4294901760
    %5073 = vmatmul.f32.gmra.mxu0 %v5072
    %v5074 = vpop.f32.mrf.mxu0
    %v5075 = vadd.f32 %v5051, %v5074
    %5076 = vdwg.mxu0
    %5077 = vmatpush.msra.mxu0 0.0
    %5078 = vmatpush.msra.mxu0 0.0
    %5079 = vmatpush.msra.mxu0 0.0
    %5080 = vmatpush.msra.mxu0 0.0
    %5081 = vmatpush.msra.mxu0 0.0
    %5082 = vmatpush.msra.mxu0 0.0
    %5083 = vmatpush.msra.mxu0 0.0
    %5084 = vmatpush.msra.mxu0 0.0
    %5085 = vmatpush.msra.mxu0 0.0
    %5086 = vmatpush.msra.mxu0 0.0
    %5087 = vmatpush.msra.mxu0 0.0
    %5088 = vmatpush.msra.mxu0 0.0
    %5089 = vmatpush.msra.mxu0 0.0
    %5090 = vmatpush.msra.mxu0 0.0
    %5091 = vmatpush.msra.mxu0 0.0
    %v5092 = vand.u32 %v94, 4294901760
    %v5093 = vsub.f32 %v94, %v5092
    %v5094 = vand.u32 %v5093, 4294901760
    %5095 = vmatpush.msra.mxu0 %v5094
    %v5096 = vand.u32 %v4975, 4294901760
    %5097 = vmatmul.f32.gmra.mxu0 %v5096
    %v5098 = vpop.f32.mrf.mxu0
    %v5099 = vadd.f32 %v5075, %v5098
    %5100 = vdwg.mxu0
    %5101 = vmatpush.msra.mxu0 0.0
    %5102 = vmatpush.msra.mxu0 0.0
    %5103 = vmatpush.msra.mxu0 0.0
    %5104 = vmatpush.msra.mxu0 0.0
    %5105 = vmatpush.msra.mxu0 0.0
    %5106 = vmatpush.msra.mxu0 0.0
    %5107 = vmatpush.msra.mxu0 0.0
    %5108 = vmatpush.msra.mxu0 0.0
    %5109 = vmatpush.msra.mxu0 0.0
    %5110 = vmatpush.msra.mxu0 0.0
    %5111 = vmatpush.msra.mxu0 0.0
    %5112 = vmatpush.msra.mxu0 0.0
    %5113 = vmatpush.msra.mxu0 0.0
    %5114 = vmatpush.msra.mxu0 0.0
    %5115 = vmatpush.msra.mxu0 0.0
    %v5116 = vand.u32 %v94, 4294901760
    %5117 = vmatpush.msra.mxu0 %v5116
    %v5118 = vand.u32 %v4975, 4294901760
    %5119 = vmatmul.f32.gmra.mxu0 %v5118
    %v5120 = vpop.f32.mrf.mxu0
    %v5121 = vadd.f32 %v5099, %v5120
    %5122 = vdwg.mxu0
    %v5123 = vmul.f32 %v4619, %v5121
    %v5124 = vadd.f32 %v5123, 0.0
    %v5126 = vrot.slane %v5123, 1
    %v5128 = vadd.f32 %v5124, %v5126
    %v5129 = vmul.f32 %v5128, 0.5
    %v5130 = vperm.slane %v5129, 0
    %v5131 = vsub.f32 %v5123, %v5130
    %v5132 = vmul.f32 %v5131, %v5131
    %v5133 = vadd.f32 %v5132, 0.0
    %v5135 = vrot.slane %v5132, 1
    %v5137 = vadd.f32 %v5133, %v5135
    %v5138 = vmul.f32 %v5137, 0.5
    %v5139 = vadd.f32 %v5138, 1e-05
    %v5140 = vrsqrt.pop %v5139
    %v5141 = vmul.f32 %v5140, %v5139
    %v5142 = vmul.f32 %v5141, %v5140
    %v5143 = vmul.f32 0.5, %v5142
    %v5144 = vsub.f32 1.5, %v5143
    %v5145 = vmul.f32 %v5140, %v5144
    %vm5146 = vweird.f32 %v5139
    %vm5147 = vweird.f32 %v5140
    %vm5148 = vmor %vm5146, %vm5147
    %v5149 = vsel %vm5148, %v5140, %v5145
    %v5150 = vrot.slane %v97, 5
    %v5152 = vmul.f32 %v5149, %v5150
    %v5153 = vperm.slane %v5152, 0
    %v5154 = vmul.f32 %v5131, %v5153
    %v5155 = vperm.slane %v97, 6
    %v5156 = vadd.f32 %v5154, %v5155
    %5157 = vst [vmem:[#allocation8] sm:$0x3] %v5156
    // Predicated region
    $region26: #{nextvlad_pallas.1} parent=1 // pred_check
      _
    $region27: #{nextvlad_pallas.1} parent=1 // pred_check_branch
      %5159 = sbr.rel (0) target = $region29
    $region28: #{nextvlad_pallas.1} parent=1 // pred_region
      %5161 = vsyncadd [#allocation4], 0
      %s5163 = sshll.u32 [#allocation8], 4
      %s5164 = int_to_ptr.vmem [resolvable:$true] %s5163
      %s5165 = sshll.u32 %s3, 4
      %s5166 = int_to_ptr.hbm [resolvable:$true] %s5165
      %5168 = dma.vmem_to_hbm [thread:$0]  %s5164, 32, %s5166, [#allocation4]
    $region29: #{nextvlad_pallas.1} parent=1 // pred_fallthru
      _
    // Predicated region
    $region30: #{nextvlad_pallas.1} parent=1 // pred_check
      _
    $region31: #{nextvlad_pallas.1} parent=1 // pred_check_branch
      %5170 = sbr.rel (0) target = $region33
    $region32: #{nextvlad_pallas.1} parent=1 // pred_region
      %5172 = dma.done [#allocation4], 32
    $region33: #{nextvlad_pallas.1} parent=1 // pred_fallthru
      _
    %5173 = vsyncpa [#allocation3], 1
    %5174 = vsyncpa [#allocation6], 1
    %5175 = vsyncpa [#allocation4], 1

</llo_original>
